<compile_context>
chip_gen: v7x
topology: tpu7x:2x2x1
jax: 0.10.0
libtpu: 0.0.40
codegen_flags: <defaults>
</compile_context>

<pallas_src>
import math
import functools

import jax
import jax.numpy as jnp
from jax import lax
from jax.experimental import pallas as pl
from jax.experimental.pallas import tpu as pltpu

# ---------------------------- configuration ----------------------------
NUM_GROUPS = 32          # nn.GroupNorm(32, in_channel)
GN_EPS = 1e-5            # PyTorch GroupNorm default eps
N_HEAD = 1               # SelfAttention(in_channel, n_head=1)
LANE = 128


def _round_up(x, m):
    return (x + m - 1) // m * m


def _pick_tile(s, target):
    """Largest divisor of s that is <= target and a multiple of 16 (sublane friendly)."""
    if s <= target:
        return s
    for t in range(target, 15, -1):
        if s % t == 0 and t % 16 == 0:
            return t
    return s


# ---------------------------- kernel 1: GroupNorm statistics ----------------------------
def gn_stats_kernel(x_ref, gamma_ref, beta_ref, gmat_ref, ab_ref, sum_ref, sq_ref,
                    *, n_elem, eps):
    s = pl.program_id(1)

    @pl.when(s == 0)
    def _():
        sum_ref[...] = jnp.zeros_like(sum_ref)
        sq_ref[...] = jnp.zeros_like(sq_ref)

    x = x_ref[...]                                            # (ts, Cp) f32
    sum_ref[...] += jnp.sum(x, axis=0, keepdims=True)         # (1, Cp)
    sq_ref[...] += jnp.sum(x * x, axis=0, keepdims=True)      # (1, Cp)

    @pl.when(s == pl.num_programs(1) - 1)
    def _():
        gmat = gmat_ref[...]                                  # (Cp, G) one-hot (0 rows for pad)
        g_sum = jnp.dot(sum_ref[...], gmat, preferred_element_type=jnp.float32)  # (1, G)
        g_sq = jnp.dot(sq_ref[...], gmat, preferred_element_type=jnp.float32)    # (1, G)
        mean = g_sum / n_elem
        var = g_sq / n_elem - mean * mean                     # biased variance (PyTorch GN)
        inv = lax.rsqrt(var + eps)                            # (1, G)
        # broadcast group stats back to channels, NT form (no gmat.T materialized)
        nt = (((1,), (1,)), ((), ()))
        mean_c = lax.dot_general(mean, gmat, nt, preferred_element_type=jnp.float32)  # (1, Cp)
        inv_c = lax.dot_general(inv, gmat, nt, preferred_element_type=jnp.float32)    # (1, Cp)
        a = inv_c * gamma_ref[...]                            # per-channel scale
        b = beta_ref[...] - mean_c * a                        # per-channel shift
        ab_ref[0:1, :] = a
        ab_ref[1:2, :] = b


# ---------------------------- kernel 2: normalize + qkv projection ----------------------------
def qkv_proj_kernel(x_ref, ab_ref, wq_ref, wk_ref, wv_ref, bq_ref, bk_ref, bv_ref,
                    q_ref, k_ref, v_ref):
    x = x_ref[...]                                            # (tp, Cp) f32
    a = ab_ref[0:1, :]
    b = ab_ref[1:2, :]
    xn = (x * a + b).astype(jnp.bfloat16)                     # GN affine in f32, bf16 to MXU
    q = jnp.dot(xn, wq_ref[...], preferred_element_type=jnp.float32) + bq_ref[...]
    k = jnp.dot(xn, wk_ref[...], preferred_element_type=jnp.float32) + bk_ref[...]
    v = jnp.dot(xn, wv_ref[...], preferred_element_type=jnp.float32) + bv_ref[...]
    q_ref[...] = q.astype(jnp.bfloat16)
    k_ref[...] = k.astype(jnp.bfloat16)
    v_ref[...] = v.astype(jnp.bfloat16)


# ---------------------------- kernel 3: flash attention + out conv + residual ----------------
def flash_attn_kernel(q_ref, k_ref, v_ref, x_ref, wout_ref, bout_ref, o_ref,
                      m_sc, l_sc, acc_sc, *, n_head, hdp):
    j = pl.program_id(2)

    @pl.when(j == 0)
    def _():
        m_sc[...] = jnp.full(m_sc.shape, -jnp.inf, m_sc.dtype)
        l_sc[...] = jnp.zeros_like(l_sc)
        acc_sc[...] = jnp.zeros_like(acc_sc)

    nt = (((1,), (1,)), ((), ()))  # contract head dims of q and k directly (no k.T relayout)
    for h in range(n_head):
        lo = h * hdp
        qh = q_ref[:, lo:lo + hdp]                            # (tq, hdp) bf16, 1/sqrt(C) folded
        kh = k_ref[:, lo:lo + hdp]                            # (tk, hdp) bf16
        vh = v_ref[:, lo:lo + hdp]                            # (tk, hdp) bf16
        s = lax.dot_general(qh, kh, nt, preferred_element_type=jnp.float32)  # (tq, tk) f32
        m_prev = m_sc[h]                                      # (tq, 1)
        m_new = jnp.maximum(m_prev, jnp.max(s, axis=-1, keepdims=True))
        alpha = jnp.exp(m_prev - m_new)                       # f32 on VPU/EUP
        p = jnp.exp(s - m_new)                                # (tq, tk) f32
        l_sc[h] = alpha * l_sc[h] + jnp.sum(p, axis=-1, keepdims=True)
        acc_sc[h] = alpha * acc_sc[h] + jnp.dot(
            p.astype(jnp.bfloat16), vh, preferred_element_type=jnp.float32)  # (tq, hdp)
        m_sc[h] = m_new

    @pl.when(j == pl.num_programs(2) - 1)
    def _():
        heads = []
        for h in range(n_head):
            inv_l = pl.reciprocal(l_sc[h], approx=True)       # EUP reciprocal, not a VPU divide
            heads.append((acc_sc[h] * inv_l).astype(jnp.bfloat16))
        o = heads[0] if n_head == 1 else jnp.concatenate(heads, axis=-1)      # (tq, Hp)
        y = jnp.dot(o, wout_ref[...], preferred_element_type=jnp.float32) + bout_ref[...]
        o_ref[...] = (y + x_ref[...]).astype(o_ref.dtype)     # residual in f32


# ---------------------------- wrapper ----------------------------
@functools.partial(jax.jit, static_argnames=("n_head", "groups", "eps"))
def self_attention_pallas(x_nchw, params, *, n_head=N_HEAD, groups=NUM_GROUPS, eps=GN_EPS):
    """x_nchw: (B, C, H, W) float32.  Returns (B, C, H, W) float32."""
    B, C, H, W = x_nchw.shape
    assert C % groups == 0 and C % n_head == 0
    S = H * W
    G = groups
    gs = C // G
    hd = C // n_head
    Cp = _round_up(C, LANE)
    hdp = _round_up(hd, LANE)
    Hp = n_head * hdp
    scale = 1.0 / math.sqrt(C)      # PyTorch divides by sqrt(channel)

    # ---- layout: NCHW -> (B, S, Cp), zero-padded channels ----
    x = jnp.transpose(x_nchw, (0, 2, 3, 1)).reshape(B, S, C).astype(jnp.float32)
    x = jnp.pad(x, ((0, 0), (0, 0), (0, Cp - C)))

    # ---- parameter packing: lane-aligned per-head [q|k|v] split, scale folded into Wq/bq ----
    w_qkv = params["w_qkv"].astype(jnp.float32)               # (3C, C) conv weight (out, in)
    b_qkv = params["b_qkv"].astype(jnp.float32)               # (3C,)
    wq = jnp.zeros((Cp, Hp), jnp.float32)
    wk = jnp.zeros((Cp, Hp), jnp.float32)
    wv = jnp.zeros((Cp, Hp), jnp.float32)
    bq = jnp.zeros((1, Hp), jnp.float32)
    bk = jnp.zeros((1, Hp), jnp.float32)
    bv = jnp.zeros((1, Hp), jnp.float32)
    for h in range(n_head):                                   # qkv rows per head: [q | k | v]
        src = h * 3 * hd
        dst = h * hdp
        wq = wq.at[:C, dst:dst + hd].set(w_qkv[src:src + hd, :].T * scale)
        wk = wk.at[:C, dst:dst + hd].set(w_qkv[src + hd:src + 2 * hd, :].T)
        wv = wv.at[:C, dst:dst + hd].set(w_qkv[src + 2 * hd:src + 3 * hd, :].T)
        bq = bq.at[0, dst:dst + hd].set(b_qkv[src:src + hd] * scale)
        bk = bk.at[0, dst:dst + hd].set(b_qkv[src + hd:src + 2 * hd])
        bv = bv.at[0, dst:dst + hd].set(b_qkv[src + 2 * hd:src + 3 * hd])

    w_out = params["w_out"].astype(jnp.float32)               # (C, C) (out_ch, in_ch)
    wout = jnp.zeros((Hp, Cp), jnp.float32)
    for h in range(n_head):                                   # attn output channel h*hd+d
        wout = wout.at[h * hdp:h * hdp + hd, :C].set(w_out[:, h * hd:(h + 1) * hd].T)
    bout = jnp.pad(params["b_out"].astype(jnp.float32).reshape(1, C), ((0, 0), (0, Cp - C)))

    gamma = jnp.pad(params["gn_gamma"].astype(jnp.float32).reshape(1, C), ((0, 0), (0, Cp - C)))
    beta = jnp.pad(params["gn_beta"].astype(jnp.float32).reshape(1, C), ((0, 0), (0, Cp - C)))

    ch = jnp.arange(Cp)
    gmat = (((ch[:, None] // gs) == jnp.arange(G)[None, :]) &
            (ch[:, None] < C)).astype(jnp.float32)            # (Cp, G), zero rows for padding

    # bf16 MXU operands (f32 accumulation happens in-kernel); biases stay f32
    wq_bf = wq.astype(jnp.bfloat16)
    wk_bf = wk.astype(jnp.bfloat16)
    wv_bf = wv.astype(jnp.bfloat16)
    wout_bf = wout.astype(jnp.bfloat16)

    # ---- tile sizes (divisors of S, sublane friendly) ----
    ts = _pick_tile(S, 512)    # stats pass (only x resident)
    tp = _pick_tile(S, 256)    # projection pass
    tq = _pick_tile(S, 256)    # query tile
    tk = _pick_tile(S, 256)    # kv tile

    # ---------------- pass 1: GroupNorm stats -> per-channel (a, b) ----------------
    ab = pl.pallas_call(
        functools.partial(gn_stats_kernel, n_elem=float(S * gs), eps=eps),
        out_shape=jax.ShapeDtypeStruct((B, 2, Cp), jnp.float32),
        grid_spec=pltpu.PrefetchScalarGridSpec(
            num_scalar_prefetch=0,
            grid=(B, S // ts),
            in_specs=[
                pl.BlockSpec((None, ts, Cp), lambda b, s: (b, s, 0)),   # x tile
                pl.BlockSpec((1, Cp), lambda b, s: (0, 0)),             # gamma
                pl.BlockSpec((1, Cp), lambda b, s: (0, 0)),             # beta
                pl.BlockSpec((Cp, G), lambda b, s: (0, 0)),             # group membership
            ],
            out_specs=pl.BlockSpec((None, 2, Cp), lambda b, s: (b, 0, 0)),
            scratch_shapes=[pltpu.VMEM((1, Cp), jnp.float32),
                            pltpu.VMEM((1, Cp), jnp.float32)],
        ),
        compiler_params=pltpu.CompilerParams(
            dimension_semantics=("parallel", "arbitrary")),
    )(x, gamma, beta, gmat)

    # ---------------- pass 2: normalize + qkv projection ----------------
    q, k, v = pl.pallas_call(
        qkv_proj_kernel,
        out_shape=(jax.ShapeDtypeStruct((B, S, Hp), jnp.bfloat16),
                   jax.ShapeDtypeStruct((B, S, Hp), jnp.bfloat16),
                   jax.ShapeDtypeStruct((B, S, Hp), jnp.bfloat16)),
        grid_spec=pltpu.PrefetchScalarGridSpec(
            num_scalar_prefetch=0,
            grid=(B, S // tp),
            in_specs=[
                pl.BlockSpec((None, tp, Cp), lambda b, s: (b, s, 0)),   # x tile
                pl.BlockSpec((None, 2, Cp), lambda b, s: (b, 0, 0)),    # (a, b)
                pl.BlockSpec((Cp, Hp), lambda b, s: (0, 0)),            # Wq (scaled)
                pl.BlockSpec((Cp, Hp), lambda b, s: (0, 0)),            # Wk
                pl.BlockSpec((Cp, Hp), lambda b, s: (0, 0)),            # Wv
                pl.BlockSpec((1, Hp), lambda b, s: (0, 0)),             # bq (scaled)
                pl.BlockSpec((1, Hp), lambda b, s: (0, 0)),             # bk
                pl.BlockSpec((1, Hp), lambda b, s: (0, 0)),             # bv
            ],
            out_specs=[
                pl.BlockSpec((None, tp, Hp), lambda b, s: (b, s, 0)),
                pl.BlockSpec((None, tp, Hp), lambda b, s: (b, s, 0)),
                pl.BlockSpec((None, tp, Hp), lambda b, s: (b, s, 0)),
            ],
        ),
        compiler_params=pltpu.CompilerParams(
            dimension_semantics=("parallel", "parallel")),
    )(x, ab, wq_bf, wk_bf, wv_bf, bq, bk, bv)

    # ---------------- pass 3: flash attention + out conv + residual ----------------
    out = pl.pallas_call(
        functools.partial(flash_attn_kernel, n_head=n_head, hdp=hdp),
        out_shape=jax.ShapeDtypeStruct((B, S, Cp), jnp.float32),
        grid_spec=pltpu.PrefetchScalarGridSpec(
            num_scalar_prefetch=0,
            grid=(B, S // tq, S // tk),
            in_specs=[
                pl.BlockSpec((None, tq, Hp), lambda b, i, j: (b, i, 0)),   # q tile
                pl.BlockSpec((None, tk, Hp), lambda b, i, j: (b, j, 0)),   # k tile
                pl.BlockSpec((None, tk, Hp), lambda b, i, j: (b, j, 0)),   # v tile
                pl.BlockSpec((None, tq, Cp), lambda b, i, j: (b, i, 0)),   # x tile (residual)
                pl.BlockSpec((Hp, Cp), lambda b, i, j: (0, 0)),            # Wout
                pl.BlockSpec((1, Cp), lambda b, i, j: (0, 0)),             # bout
            ],
            out_specs=pl.BlockSpec((None, tq, Cp), lambda b, i, j: (b, i, 0)),
            scratch_shapes=[
                pltpu.VMEM((n_head, tq, 1), jnp.float32),     # running max m
                pltpu.VMEM((n_head, tq, 1), jnp.float32),     # running denom l
                pltpu.VMEM((n_head, tq, hdp), jnp.float32),   # running accumulator
            ],
        ),
        compiler_params=pltpu.CompilerParams(
            dimension_semantics=("parallel", "parallel", "arbitrary"),
            vmem_limit_bytes=32 * 1024 * 1024),
    )(q, k, v, x, wout_bf, bout)

    # back to NCHW, strip channel padding
    out = out[:, :, :C].reshape(B, H, W, C)
    return jnp.transpose(out, (0, 3, 1, 2))


# ---------------------------- parameter init (matches PyTorch module init) ----------------------------
def variance_scaling_uniform(key, shape, fan_in, fan_out, scale=1.0, mode="fan_avg"):
    if mode == "fan_in":
        scale = scale / fan_in
    elif mode == "fan_out":
        scale = scale / fan_out
    else:
        scale = scale / ((fan_in + fan_out) / 2.0)
    bound = math.sqrt(3.0 * scale)
    return jax.random.uniform(key, shape, jnp.float32, -bound, bound)


def init_params(key, in_channel):
    C = in_channel
    k1, k2 = jax.random.split(key)
    # qkv conv2d(C, 3C, 1): weight (3C, C, 1, 1) stored as (3C, C); fan_in=C, fan_out=3C
    w_qkv = variance_scaling_uniform(k1, (3 * C, C), fan_in=C, fan_out=3 * C, scale=1.0)
    b_qkv = jnp.zeros((3 * C,), jnp.float32)
    # out conv2d(C, C, 1, scale=1e-10)
    w_out = variance_scaling_uniform(k2, (C, C), fan_in=C, fan_out=C, scale=1e-10)
    b_out = jnp.zeros((C,), jnp.float32)
    gn_gamma = jnp.ones((C,), jnp.float32)
    gn_beta = jnp.zeros((C,), jnp.float32)
    return dict(w_qkv=w_qkv, b_qkv=b_qkv, w_out=w_out, b_out=b_out,
                gn_gamma=gn_gamma, gn_beta=gn_beta)


# ---------------------------- pure-JAX reference (f32) ----------------------------
def self_attention_ref(x, params, *, n_head=N_HEAD, groups=NUM_GROUPS, eps=GN_EPS):
    B, C, H, W = x.shape
    xg = x.reshape(B, groups, C // groups, H, W)
    mean = xg.mean(axis=(2, 3, 4), keepdims=True)
    var = xg.var(axis=(2, 3, 4), keepdims=True)
    xn = ((xg - mean) / jnp.sqrt(var + eps)).reshape(B, C, H, W)
    xn = xn * params["gn_gamma"][None, :, None, None] + params["gn_beta"][None, :, None, None]
    qkv = jnp.einsum('bchw,oc->bohw', xn, params["w_qkv"]) + params["b_qkv"][None, :, None, None]
    hd = C // n_head
    qkv = qkv.reshape(B, n_head, 3 * hd, H, W)
    q, k, v = jnp.split(qkv, 3, axis=2)
    attn = jnp.einsum('bnchw,bncyx->bnhwyx', q, k) / math.sqrt(C)
    attn = attn.reshape(B, n_head, H, W, H * W)
    attn = jax.nn.softmax(attn, axis=-1).reshape(B, n_head, H, W, H, W)
    o = jnp.einsum('bnhwyx,bncyx->bnchw', attn, v).reshape(B, C, H, W)
    out = jnp.einsum('bchw,oc->bohw', o, params["w_out"]) + params["b_out"][None, :, None, None]
    return out + x


# ---------------------------- main ----------------------------
if __name__ == "__main__":
    B, C, H, W = 2, 32, 8, 8      # in_channel must be divisible by 32 (GroupNorm(32, C))
    key = jax.random.PRNGKey(0)
    kx, kp, kw = jax.random.split(key, 3)
    x = jax.random.normal(kx, (B, C, H, W), jnp.float32)
    params = init_params(kp, C)

    # module-faithful init (out conv scale=1e-10 -> output dominated by the exact residual)
    out = jax.block_until_ready(self_attention_pallas(x, params))
    ref = self_attention_ref(x, params)
    assert out.shape == (B, C, H, W)
    assert jnp.allclose(out, ref, atol=1e-3, rtol=1e-3), "mismatch vs reference (module init)"

    # stress the attention path numerics (unit-scale out conv); bf16 MXU operands -> loose tol
    params_s = dict(params)
    params_s["w_out"] = variance_scaling_uniform(kw, (C, C), fan_in=C, fan_out=C, scale=1.0)
    out_s = jax.block_until_ready(self_attention_pallas(x, params_s))
    ref_s = self_attention_ref(x, params_s)
    rel = jnp.max(jnp.abs(out_s - ref_s)) / jnp.max(jnp.abs(ref_s))
    assert rel < 5e-2, f"relative error too large: {rel}"

    print("KERNEL_OK")
</pallas_src>

<mosaic_0001>
module attributes {stable_mosaic.version = 11 : i64} {
  func.func @gn_stats_kernel(%arg0: i32, %arg1: i32, %arg2: memref<1x64x128xf32, #tpu.memory_space<vmem>>, %arg3: memref<1x128xf32, #tpu.memory_space<vmem>>, %arg4: memref<1x128xf32, #tpu.memory_space<vmem>>, %arg5: memref<128x32xf32, #tpu.memory_space<vmem>>, %arg6: memref<1x2x128xf32, #tpu.memory_space<vmem>>, %arg7: memref<1x128xf32, #tpu.memory_space<vmem>>, %arg8: memref<1x128xf32, #tpu.memory_space<vmem>>) attributes {dimension_semantics = [#tpu.dimension_semantics<parallel>, #tpu.dimension_semantics<arbitrary>], iteration_bounds = array<i64: 2, 1>, scalar_prefetch = 0 : i64, scratch_operands = 2 : i64, tpu.core_type = #tpu.core_type<tc>, window_params = [{transform_indices = @transform_0, window_bounds = array<i64: 1, 64, 128>}, {pipeline_mode = #tpu.pipeline_mode<synchronous>, transform_indices = @transform_1, window_bounds = array<i64: 1, 128>}, {pipeline_mode = #tpu.pipeline_mode<synchronous>, transform_indices = @transform_2, window_bounds = array<i64: 1, 128>}, {pipeline_mode = #tpu.pipeline_mode<synchronous>, transform_indices = @transform_3, window_bounds = array<i64: 128, 32>}, {transform_indices = @transform_4, window_bounds = array<i64: 1, 2, 128>}]} {
    %c0_i32 = arith.constant 0 : i32
    %0 = arith.cmpi eq, %arg1, %c0_i32 : i32
    %1 = arith.extui %0 : i1 to i32
    %c0_i32_0 = arith.constant 0 : i32
    %2 = arith.cmpi ne, %1, %c0_i32_0 : i32
    scf.if %2 {
      %cst_14 = arith.constant 0.000000e+00 : f32
      %19 = vector.broadcast %cst_14 : f32 to vector<1x128xf32>
      %c0_15 = arith.constant 0 : index
      %c0_16 = arith.constant 0 : index
      %20 = vector.load %arg7[%c0_15, %c0_16] : memref<1x128xf32, #tpu.memory_space<vmem>>, vector<1x128xf32>
      tpu.vector_store %arg7[%c0_15, %c0_16], %19 {strides = array<i32>} : memref<1x128xf32, #tpu.memory_space<vmem>>, vector<1x128xf32>,
      %cst_17 = arith.constant 0.000000e+00 : f32
      %21 = vector.broadcast %cst_17 : f32 to vector<1x128xf32>
      %c0_18 = arith.constant 0 : index
      %c0_19 = arith.constant 0 : index
      %22 = vector.load %arg8[%c0_18, %c0_19] : memref<1x128xf32, #tpu.memory_space<vmem>>, vector<1x128xf32>
      tpu.vector_store %arg8[%c0_18, %c0_19], %21 {strides = array<i32>} : memref<1x128xf32, #tpu.memory_space<vmem>>, vector<1x128xf32>,
    } else {
    }
    %c0 = arith.constant 0 : index
    %c0_1 = arith.constant 0 : index
    %c0_2 = arith.constant 0 : index
    %3 = vector.load %arg2[%c0, %c0_1, %c0_2] : memref<1x64x128xf32, #tpu.memory_space<vmem>>, vector<1x64x128xf32>
    %4 = vector.shape_cast %3 : vector<1x64x128xf32> to vector<64x128xf32>
    %c0_3 = arith.constant 0 : index
    %c0_4 = arith.constant 0 : index
    %5 = vector.load %arg7[%c0_3, %c0_4] : memref<1x128xf32, #tpu.memory_space<vmem>>, vector<1x128xf32>
    %cst = arith.constant dense<0.000000e+00> : vector<128xf32>
    %6 = vector.multi_reduction <add>, %4, %cst [0] : vector<64x128xf32> to vector<128xf32>
    %7 = vector.shape_cast %6 : vector<128xf32> to vector<1x128xf32>
    %8 = arith.addf %5, %7 : vector<1x128xf32>
    %c0_5 = arith.constant 0 : index
    %c0_6 = arith.constant 0 : index
    %9 = vector.load %arg7[%c0_5, %c0_6] : memref<1x128xf32, #tpu.memory_space<vmem>>, vector<1x128xf32>
    tpu.vector_store %arg7[%c0_5, %c0_6], %8 {strides = array<i32>} : memref<1x128xf32, #tpu.memory_space<vmem>>, vector<1x128xf32>,
    %c0_7 = arith.constant 0 : index
    %c0_8 = arith.constant 0 : index
    %10 = vector.load %arg8[%c0_7, %c0_8] : memref<1x128xf32, #tpu.memory_space<vmem>>, vector<1x128xf32>
    %11 = arith.mulf %4, %4 : vector<64x128xf32>
    %cst_9 = arith.constant dense<0.000000e+00> : vector<128xf32>
    %12 = vector.multi_reduction <add>, %11, %cst_9 [0] : vector<64x128xf32> to vector<128xf32>
    %13 = vector.shape_cast %12 : vector<128xf32> to vector<1x128xf32>
    %14 = arith.addf %10, %13 : vector<1x128xf32>
    %c0_10 = arith.constant 0 : index
    %c0_11 = arith.constant 0 : index
    %15 = vector.load %arg8[%c0_10, %c0_11] : memref<1x128xf32, #tpu.memory_space<vmem>>, vector<1x128xf32>
    tpu.vector_store %arg8[%c0_10, %c0_11], %14 {strides = array<i32>} : memref<1x128xf32, #tpu.memory_space<vmem>>, vector<1x128xf32>,
    %c0_i32_12 = arith.constant 0 : i32
    %16 = arith.cmpi eq, %arg1, %c0_i32_12 : i32
    %17 = arith.extui %16 : i1 to i32
    %c0_i32_13 = arith.constant 0 : i32
    %18 = arith.cmpi ne, %17, %c0_i32_13 : i32
    scf.if %18 {
      %c0_14 = arith.constant 0 : index
      %c0_15 = arith.constant 0 : index
      %19 = vector.load %arg5[%c0_14, %c0_15] : memref<128x32xf32, #tpu.memory_space<vmem>>, vector<128x32xf32>
      %c0_16 = arith.constant 0 : index
      %c0_17 = arith.constant 0 : index
      %20 = vector.load %arg7[%c0_16, %c0_17] : memref<1x128xf32, #tpu.memory_space<vmem>>, vector<1x128xf32>
      %cst_18 = arith.constant dense<0.000000e+00> : vector<1x32xf32>
      %21 = tpu.matmul %20, %19, %cst_18 {dimension_numbers = #tpu.dot_dimension_numbers<[1], [0], [0], [1], [0, 0, 1, 1], [], []>} : vector<1x128xf32>, vector<128x32xf32>, vector<1x32xf32> -> vector<1x32xf32>
      %c0_19 = arith.constant 0 : index
      %c0_20 = arith.constant 0 : index
      %22 = vector.load %arg8[%c0_19, %c0_20] : memref<1x128xf32, #tpu.memory_space<vmem>>, vector<1x128xf32>
      %cst_21 = arith.constant dense<0.000000e+00> : vector<1x32xf32>
      %23 = tpu.matmul %22, %19, %cst_21 {dimension_numbers = #tpu.dot_dimension_numbers<[1], [0], [0], [1], [0, 0, 1, 1], [], []>} : vector<1x128xf32>, vector<128x32xf32>, vector<1x32xf32> -> vector<1x32xf32>
      %cst_22 = arith.constant 6.400000e+01 : f32
      %24 = vector.broadcast %cst_22 : f32 to vector<1x32xf32>
      %25 = arith.divf %21, %24 : vector<1x32xf32>
      %cst_23 = arith.constant 6.400000e+01 : f32
      %26 = vector.broadcast %cst_23 : f32 to vector<1x32xf32>
      %27 = arith.divf %23, %26 : vector<1x32xf32>
      %28 = arith.mulf %25, %25 : vector<1x32xf32>
      %29 = arith.subf %27, %28 : vector<1x32xf32>
      %cst_24 = arith.constant 9.99999974E-6 : f32
      %30 = vector.broadcast %cst_24 : f32 to vector<1x32xf32>
      %31 = arith.addf %29, %30 : vector<1x32xf32>
      %32 = math.rsqrt %31 : vector<1x32xf32>
      %cst_25 = arith.constant dense<0.000000e+00> : vector<1x128xf32>
      %33 = tpu.matmul %25, %19, %cst_25 {dimension_numbers = #tpu.dot_dimension_numbers<[1], [1], [0], [0], [0, 0, 1, 0], [], []>} : vector<1x32xf32>, vector<128x32xf32>, vector<1x128xf32> -> vector<1x128xf32>
      %cst_26 = arith.constant dense<0.000000e+00> : vector<1x128xf32>
      %34 = tpu.matmul %32, %19, %cst_26 {dimension_numbers = #tpu.dot_dimension_numbers<[1], [1], [0], [0], [0, 0, 1, 0], [], []>} : vector<1x32xf32>, vector<128x32xf32>, vector<1x128xf32> -> vector<1x128xf32>
      %c0_27 = arith.constant 0 : index
      %c0_28 = arith.constant 0 : index
      %35 = vector.load %arg3[%c0_27, %c0_28] : memref<1x128xf32, #tpu.memory_space<vmem>>, vector<1x128xf32>
      %36 = arith.mulf %34, %35 : vector<1x128xf32>
      %c0_29 = arith.constant 0 : index
      %c0_30 = arith.constant 0 : index
      %37 = vector.load %arg4[%c0_29, %c0_30] : memref<1x128xf32, #tpu.memory_space<vmem>>, vector<1x128xf32>
      %38 = arith.mulf %33, %36 : vector<1x128xf32>
      %39 = arith.subf %37, %38 : vector<1x128xf32>
      %c0_31 = arith.constant 0 : index
      %c0_32 = arith.constant 0 : index
      %c0_33 = arith.constant 0 : index
      %40 = vector.load %arg6[%c0_31, %c0_32, %c0_33] : memref<1x2x128xf32, #tpu.memory_space<vmem>>, vector<1x1x128xf32>
      %41 = vector.shape_cast %40 : vector<1x1x128xf32> to vector<1x128xf32>
      %42 = vector.shape_cast %36 : vector<1x128xf32> to vector<1x1x128xf32>
      tpu.vector_store %arg6[%c0_31, %c0_32, %c0_33], %42 {strides = array<i32>} : memref<1x2x128xf32, #tpu.memory_space<vmem>>, vector<1x1x128xf32>,
      %c0_34 = arith.constant 0 : index
      %c1 = arith.constant 1 : index
      %c0_35 = arith.constant 0 : index
      %43 = vector.load %arg6[%c0_34, %c1, %c0_35] : memref<1x2x128xf32, #tpu.memory_space<vmem>>, vector<1x1x128xf32>
      %44 = vector.shape_cast %43 : vector<1x1x128xf32> to vector<1x128xf32>
      %45 = vector.shape_cast %39 : vector<1x128xf32> to vector<1x1x128xf32>
      tpu.vector_store %arg6[%c0_34, %c1, %c0_35], %45 {strides = array<i32>} : memref<1x2x128xf32, #tpu.memory_space<vmem>>, vector<1x1x128xf32>,
    } else {
    }
    return
  }
  func.func @transform_0(%arg0: i32, %arg1: i32) -> (i32, i32, i32) {
    %c0_i32 = arith.constant 0 : i32
    %c0_i32_0 = arith.constant 0 : i32
    return %arg0, %arg1, %c0_i32 : i32, i32, i32
  }
  func.func @transform_1(%arg0: i32, %arg1: i32) -> (i32, i32) {
    %c0_i32 = arith.constant 0 : i32
    %c0_i32_0 = arith.constant 0 : i32
    %c0_i32_1 = arith.constant 0 : i32
    return %c0_i32, %c0_i32_0 : i32, i32
  }
  func.func @transform_2(%arg0: i32, %arg1: i32) -> (i32, i32) {
    %c0_i32 = arith.constant 0 : i32
    %c0_i32_0 = arith.constant 0 : i32
    %c0_i32_1 = arith.constant 0 : i32
    return %c0_i32, %c0_i32_0 : i32, i32
  }
  func.func @transform_3(%arg0: i32, %arg1: i32) -> (i32, i32) {
    %c0_i32 = arith.constant 0 : i32
    %c0_i32_0 = arith.constant 0 : i32
    %c0_i32_1 = arith.constant 0 : i32
    return %c0_i32, %c0_i32_0 : i32, i32
  }
  func.func @transform_4(%arg0: i32, %arg1: i32) -> (i32, i32, i32) {
    %c0_i32 = arith.constant 0 : i32
    %c0_i32_0 = arith.constant 0 : i32
    %c0_i32_1 = arith.constant 0 : i32
    return %arg0, %c0_i32, %c0_i32_0 : i32, i32, i32
  }
}

module attributes {stable_mosaic.version = 11 : i64} {
  func.func @flash_attn_kernel(%arg0: i32, %arg1: i32, %arg2: i32, %arg3: memref<1x64x128xbf16, #tpu.memory_space<vmem>>, %arg4: memref<1x64x128xbf16, #tpu.memory_space<vmem>>, %arg5: memref<1x64x128xbf16, #tpu.memory_space<vmem>>, %arg6: memref<1x64x128xf32, #tpu.memory_space<vmem>>, %arg7: memref<128x128xbf16, #tpu.memory_space<vmem>>, %arg8: memref<1x128xf32, #tpu.memory_space<vmem>>, %arg9: memref<1x64x128xf32, #tpu.memory_space<vmem>>, %arg10: memref<1x64x1xf32, #tpu.memory_space<vmem>>, %arg11: memref<1x64x1xf32, #tpu.memory_space<vmem>>, %arg12: memref<1x64x128xf32, #tpu.memory_space<vmem>>) attributes {dimension_semantics = [#tpu.dimension_semantics<parallel>, #tpu.dimension_semantics<parallel>, #tpu.dimension_semantics<arbitrary>], iteration_bounds = array<i64: 2, 1, 1>, scalar_prefetch = 0 : i64, scratch_operands = 3 : i64, tpu.core_type = #tpu.core_type<tc>, window_params = [{transform_indices = @transform_0, window_bounds = array<i64: 1, 64, 128>}, {transform_indices = @transform_1, window_bounds = array<i64: 1, 64, 128>}, {transform_indices = @transform_2, window_bounds = array<i64: 1, 64, 128>}, {transform_indices = @transform_3, window_bounds = array<i64: 1, 64, 128>}, {pipeline_mode = #tpu.pipeline_mode<synchronous>, transform_indices = @transform_4, window_bounds = array<i64: 128, 128>}, {pipeline_mode = #tpu.pipeline_mode<synchronous>, transform_indices = @transform_5, window_bounds = array<i64: 1, 128>}, {transform_indices = @transform_6, window_bounds = array<i64: 1, 64, 128>}]} {
    %c0_i32 = arith.constant 0 : i32
    %0 = arith.cmpi eq, %arg2, %c0_i32 : i32
    %1 = arith.extui %0 : i1 to i32
    %c0_i32_0 = arith.constant 0 : i32
    %2 = arith.cmpi ne, %1, %c0_i32_0 : i32
    scf.if %2 {
      %cst_32 = arith.constant 0xFF800000 : f32
      %45 = vector.broadcast %cst_32 : f32 to vector<1x64x1xf32>
      %c0_33 = arith.constant 0 : index
      %c0_34 = arith.constant 0 : index
      %c0_35 = arith.constant 0 : index
      %46 = vector.load %arg10[%c0_33, %c0_34, %c0_35] : memref<1x64x1xf32, #tpu.memory_space<vmem>>, vector<1x64x1xf32>
      tpu.vector_store %arg10[%c0_33, %c0_34, %c0_35], %45 {strides = array<i32>} : memref<1x64x1xf32, #tpu.memory_space<vmem>>, vector<1x64x1xf32>,
      %cst_36 = arith.constant 0.000000e+00 : f32
      %47 = vector.broadcast %cst_36 : f32 to vector<1x64x1xf32>
      %c0_37 = arith.constant 0 : index
      %c0_38 = arith.constant 0 : index
      %c0_39 = arith.constant 0 : index
      %48 = vector.load %arg11[%c0_37, %c0_38, %c0_39] : memref<1x64x1xf32, #tpu.memory_space<vmem>>, vector<1x64x1xf32>
      tpu.vector_store %arg11[%c0_37, %c0_38, %c0_39], %47 {strides = array<i32>} : memref<1x64x1xf32, #tpu.memory_space<vmem>>, vector<1x64x1xf32>,
      %cst_40 = arith.constant 0.000000e+00 : f32
      %49 = vector.broadcast %cst_40 : f32 to vector<1x64x128xf32>
      %c0_41 = arith.constant 0 : index
      %c0_42 = arith.constant 0 : index
      %c0_43 = arith.constant 0 : index
      %50 = vector.load %arg12[%c0_41, %c0_42, %c0_43] : memref<1x64x128xf32, #tpu.memory_space<vmem>>, vector<1x64x128xf32>
      tpu.vector_store %arg12[%c0_41, %c0_42, %c0_43], %49 {strides = array<i32>} : memref<1x64x128xf32, #tpu.memory_space<vmem>>, vector<1x64x128xf32>,
    } else {
    }
    %c0 = arith.constant 0 : index
    %c0_1 = arith.constant 0 : index
    %c0_2 = arith.constant 0 : index
    %3 = vector.load %arg3[%c0, %c0_1, %c0_2] : memref<1x64x128xbf16, #tpu.memory_space<vmem>>, vector<1x64x128xbf16>
    %4 = vector.shape_cast %3 : vector<1x64x128xbf16> to vector<64x128xbf16>
    %c0_3 = arith.constant 0 : index
    %c0_4 = arith.constant 0 : index
    %c0_5 = arith.constant 0 : index
    %5 = vector.load %arg4[%c0_3, %c0_4, %c0_5] : memref<1x64x128xbf16, #tpu.memory_space<vmem>>, vector<1x64x128xbf16>
    %6 = vector.shape_cast %5 : vector<1x64x128xbf16> to vector<64x128xbf16>
    %c0_6 = arith.constant 0 : index
    %c0_7 = arith.constant 0 : index
    %c0_8 = arith.constant 0 : index
    %7 = vector.load %arg5[%c0_6, %c0_7, %c0_8] : memref<1x64x128xbf16, #tpu.memory_space<vmem>>, vector<1x64x128xbf16>
    %8 = vector.shape_cast %7 : vector<1x64x128xbf16> to vector<64x128xbf16>
    %cst = arith.constant dense<0.000000e+00> : vector<64x64xf32>
    %9 = tpu.matmul %4, %6, %cst {dimension_numbers = #tpu.dot_dimension_numbers<[1], [1], [0], [0], [0, 0, 1, 0], [], []>} : vector<64x128xbf16>, vector<64x128xbf16>, vector<64x64xf32> -> vector<64x64xf32>
    %c0_9 = arith.constant 0 : index
    %c0_10 = arith.constant 0 : index
    %c0_11 = arith.constant 0 : index
    %10 = vector.load %arg10[%c0_9, %c0_10, %c0_11] : memref<1x64x1xf32, #tpu.memory_space<vmem>>, vector<1x64x1xf32>
    %11 = vector.shape_cast %10 : vector<1x64x1xf32> to vector<64x1xf32>
    %cst_12 = arith.constant dense<0xFF800000> : vector<64xf32>
    %12 = vector.multi_reduction <maximumf>, %9, %cst_12 [1] : vector<64x64xf32> to vector<64xf32>
    %13 = vector.shape_cast %12 : vector<64xf32> to vector<64x1xf32>
    %14 = arith.maximumf %11, %13 : vector<64x1xf32>
    %15 = arith.subf %11, %14 : vector<64x1xf32>
    %16 = math.exp %15 : vector<64x1xf32>
    %17 = vector.broadcast %14 : vector<64x1xf32> to vector<64x64xf32>
    %18 = arith.subf %9, %17 : vector<64x64xf32>
    %19 = math.exp %18 : vector<64x64xf32>
    %c0_13 = arith.constant 0 : index
    %c0_14 = arith.constant 0 : index
    %c0_15 = arith.constant 0 : index
    %20 = vector.load %arg11[%c0_13, %c0_14, %c0_15] : memref<1x64x1xf32, #tpu.memory_space<vmem>>, vector<1x64x1xf32>
    %21 = vector.shape_cast %20 : vector<1x64x1xf32> to vector<64x1xf32>
    %22 = arith.mulf %16, %21 : vector<64x1xf32>
    %cst_16 = arith.constant dense<0.000000e+00> : vector<64xf32>
    %23 = vector.multi_reduction <add>, %19, %cst_16 [1] : vector<64x64xf32> to vector<64xf32>
    %24 = vector.shape_cast %23 : vector<64xf32> to vector<64x1xf32>
    %25 = arith.addf %22, %24 : vector<64x1xf32>
    %c0_17 = arith.constant 0 : index
    %c0_18 = arith.constant 0 : index
    %c0_19 = arith.constant 0 : index
    %26 = vector.load %arg11[%c0_17, %c0_18, %c0_19] : memref<1x64x1xf32, #tpu.memory_space<vmem>>, vector<1x64x1xf32>
    %27 = vector.shape_cast %26 : vector<1x64x1xf32> to vector<64x1xf32>
    %28 = vector.shape_cast %25 : vector<64x1xf32> to vector<1x64x1xf32>
    tpu.vector_store %arg11[%c0_17, %c0_18, %c0_19], %28 {strides = array<i32>} : memref<1x64x1xf32, #tpu.memory_space<vmem>>, vector<1x64x1xf32>,
    %c0_20 = arith.constant 0 : index
    %c0_21 = arith.constant 0 : index
    %c0_22 = arith.constant 0 : index
    %29 = vector.load %arg12[%c0_20, %c0_21, %c0_22] : memref<1x64x128xf32, #tpu.memory_space<vmem>>, vector<1x64x128xf32>
    %30 = vector.shape_cast %29 : vector<1x64x128xf32> to vector<64x128xf32>
    %31 = vector.broadcast %16 : vector<64x1xf32> to vector<64x128xf32>
    %32 = arith.mulf %31, %30 : vector<64x128xf32>
    %33 = arith.truncf %19 : vector<64x64xf32> to vector<64x64xbf16>
    %cst_23 = arith.constant dense<0.000000e+00> : vector<64x128xf32>
    %34 = tpu.matmul %33, %8, %cst_23 {dimension_numbers = #tpu.dot_dimension_numbers<[1], [0], [0], [1], [0, 0, 1, 1], [], []>} : vector<64x64xbf16>, vector<64x128xbf16>, vector<64x128xf32> -> vector<64x128xf32>
    %35 = arith.addf %32, %34 : vector<64x128xf32>
    %c0_24 = arith.constant 0 : index
    %c0_25 = arith.constant 0 : index
    %c0_26 = arith.constant 0 : index
    %36 = vector.load %arg12[%c0_24, %c0_25, %c0_26] : memref<1x64x128xf32, #tpu.memory_space<vmem>>, vector<1x64x128xf32>
    %37 = vector.shape_cast %36 : vector<1x64x128xf32> to vector<64x128xf32>
    %38 = vector.shape_cast %35 : vector<64x128xf32> to vector<1x64x128xf32>
    tpu.vector_store %arg12[%c0_24, %c0_25, %c0_26], %38 {strides = array<i32>} : memref<1x64x128xf32, #tpu.memory_space<vmem>>, vector<1x64x128xf32>,
    %c0_27 = arith.constant 0 : index
    %c0_28 = arith.constant 0 : index
    %c0_29 = arith.constant 0 : index
    %39 = vector.load %arg10[%c0_27, %c0_28, %c0_29] : memref<1x64x1xf32, #tpu.memory_space<vmem>>, vector<1x64x1xf32>
    %40 = vector.shape_cast %39 : vector<1x64x1xf32> to vector<64x1xf32>
    %41 = vector.shape_cast %14 : vector<64x1xf32> to vector<1x64x1xf32>
    tpu.vector_store %arg10[%c0_27, %c0_28, %c0_29], %41 {strides = array<i32>} : memref<1x64x1xf32, #tpu.memory_space<vmem>>, vector<1x64x1xf32>,
    %c0_i32_30 = arith.constant 0 : i32
    %42 = arith.cmpi eq, %arg2, %c0_i32_30 : i32
    %43 = arith.extui %42 : i1 to i32
    %c0_i32_31 = arith.constant 0 : i32
    %44 = arith.cmpi ne, %43, %c0_i32_31 : i32
    scf.if %44 {
      %c0_32 = arith.constant 0 : index
      %c0_33 = arith.constant 0 : index
      %c0_34 = arith.constant 0 : index
      %45 = vector.load %arg11[%c0_32, %c0_33, %c0_34] : memref<1x64x1xf32, #tpu.memory_space<vmem>>, vector<1x64x1xf32>
      %46 = vector.shape_cast %45 : vector<1x64x1xf32> to vector<64x1xf32>
      %47 = tpu.reciprocal %46 {approx = true} : vector<64x1xf32> -> vector<64x1xf32>
      %c0_35 = arith.constant 0 : index
      %c0_36 = arith.constant 0 : index
      %c0_37 = arith.constant 0 : index
      %48 = vector.load %arg12[%c0_35, %c0_36, %c0_37] : memref<1x64x128xf32, #tpu.memory_space<vmem>>, vector<1x64x128xf32>
      %49 = vector.shape_cast %48 : vector<1x64x128xf32> to vector<64x128xf32>
      %50 = vector.broadcast %47 : vector<64x1xf32> to vector<64x128xf32>
      %51 = arith.mulf %49, %50 : vector<64x128xf32>
      %52 = arith.truncf %51 : vector<64x128xf32> to vector<64x128xbf16>
      %c0_38 = arith.constant 0 : index
      %c0_39 = arith.constant 0 : index
      %53 = vector.load %arg7[%c0_38, %c0_39] : memref<128x128xbf16, #tpu.memory_space<vmem>>, vector<128x128xbf16>
      %cst_40 = arith.constant dense<0.000000e+00> : vector<64x128xf32>
      %54 = tpu.matmul %52, %53, %cst_40 {dimension_numbers = #tpu.dot_dimension_numbers<[1], [0], [0], [1], [0, 0, 1, 1], [], []>} : vector<64x128xbf16>, vector<128x128xbf16>, vector<64x128xf32> -> vector<64x128xf32>
      %c0_41 = arith.constant 0 : index
      %c0_42 = arith.constant 0 : index
      %55 = vector.load %arg8[%c0_41, %c0_42] : memref<1x128xf32, #tpu.memory_space<vmem>>, vector<1x128xf32>
      %56 = vector.broadcast %55 : vector<1x128xf32> to vector<64x128xf32>
      %57 = arith.addf %54, %56 : vector<64x128xf32>
      %c0_43 = arith.constant 0 : index
      %c0_44 = arith.constant 0 : index
      %c0_45 = arith.constant 0 : index
      %58 = vector.load %arg6[%c0_43, %c0_44, %c0_45] : memref<1x64x128xf32, #tpu.memory_space<vmem>>, vector<1x64x128xf32>
      %59 = vector.shape_cast %58 : vector<1x64x128xf32> to vector<64x128xf32>
      %60 = arith.addf %57, %59 : vector<64x128xf32>
      %c0_46 = arith.constant 0 : index
      %c0_47 = arith.constant 0 : index
      %c0_48 = arith.constant 0 : index
      %61 = vector.load %arg9[%c0_46, %c0_47, %c0_48] : memref<1x64x128xf32, #tpu.memory_space<vmem>>, vector<1x64x128xf32>
      %62 = vector.shape_cast %61 : vector<1x64x128xf32> to vector<64x128xf32>
      %63 = vector.shape_cast %60 : vector<64x128xf32> to vector<1x64x128xf32>
      tpu.vector_store %arg9[%c0_46, %c0_47, %c0_48], %63 {strides = array<i32>} : memref<1x64x128xf32, #tpu.memory_space<vmem>>, vector<1x64x128xf32>,
    } else {
    }
    return
  }
  func.func @transform_0(%arg0: i32, %arg1: i32, %arg2: i32) -> (i32, i32, i32) {
    %c0_i32 = arith.constant 0 : i32
    %c0_i32_0 = arith.constant 0 : i32
    return %arg0, %arg1, %c0_i32 : i32, i32, i32
  }
  func.func @transform_1(%arg0: i32, %arg1: i32, %arg2: i32) -> (i32, i32, i32) {
    %c0_i32 = arith.constant 0 : i32
    %c0_i32_0 = arith.constant 0 : i32
    return %arg0, %arg2, %c0_i32 : i32, i32, i32
  }
  func.func @transform_2(%arg0: i32, %arg1: i32, %arg2: i32) -> (i32, i32, i32) {
    %c0_i32 = arith.constant 0 : i32
    %c0_i32_0 = arith.constant 0 : i32
    return %arg0, %arg2, %c0_i32 : i32, i32, i32
  }
  func.func @transform_3(%arg0: i32, %arg1: i32, %arg2: i32) -> (i32, i32, i32) {
    %c0_i32 = arith.constant 0 : i32
    %c0_i32_0 = arith.constant 0 : i32
    return %arg0, %arg1, %c0_i32 : i32, i32, i32
  }
  func.func @transform_4(%arg0: i32, %arg1: i32, %arg2: i32) -> (i32, i32) {
    %c0_i32 = arith.constant 0 : i32
    %c0_i32_0 = arith.constant 0 : i32
    %c0_i32_1 = arith.constant 0 : i32
    return %c0_i32, %c0_i32_0 : i32, i32
  }
  func.func @transform_5(%arg0: i32, %arg1: i32, %arg2: i32) -> (i32, i32) {
    %c0_i32 = arith.constant 0 : i32
    %c0_i32_0 = arith.constant 0 : i32
    %c0_i32_1 = arith.constant 0 : i32
    return %c0_i32, %c0_i32_0 : i32, i32
  }
  func.func @transform_6(%arg0: i32, %arg1: i32, %arg2: i32) -> (i32, i32, i32) {
    %c0_i32 = arith.constant 0 : i32
    %c0_i32_0 = arith.constant 0 : i32
    return %arg0, %arg1, %c0_i32 : i32, i32, i32
  }
}

module attributes {stable_mosaic.version = 11 : i64} {
  func.func @qkv_proj_kernel(%arg0: i32, %arg1: i32, %arg2: memref<1x64x128xf32, #tpu.memory_space<vmem>>, %arg3: memref<1x2x128xf32, #tpu.memory_space<vmem>>, %arg4: memref<128x128xbf16, #tpu.memory_space<vmem>>, %arg5: memref<128x128xbf16, #tpu.memory_space<vmem>>, %arg6: memref<128x128xbf16, #tpu.memory_space<vmem>>, %arg7: memref<1x128xf32, #tpu.memory_space<vmem>>, %arg8: memref<1x128xf32, #tpu.memory_space<vmem>>, %arg9: memref<1x128xf32, #tpu.memory_space<vmem>>, %arg10: memref<1x64x128xbf16, #tpu.memory_space<vmem>>, %arg11: memref<1x64x128xbf16, #tpu.memory_space<vmem>>, %arg12: memref<1x64x128xbf16, #tpu.memory_space<vmem>>) attributes {dimension_semantics = [#tpu.dimension_semantics<parallel>, #tpu.dimension_semantics<parallel>], iteration_bounds = array<i64: 2, 1>, scalar_prefetch = 0 : i64, scratch_operands = 0 : i64, tpu.core_type = #tpu.core_type<tc>, window_params = [{transform_indices = @transform_0, window_bounds = array<i64: 1, 64, 128>}, {transform_indices = @transform_1, window_bounds = array<i64: 1, 2, 128>}, {pipeline_mode = #tpu.pipeline_mode<synchronous>, transform_indices = @transform_2, window_bounds = array<i64: 128, 128>}, {pipeline_mode = #tpu.pipeline_mode<synchronous>, transform_indices = @transform_3, window_bounds = array<i64: 128, 128>}, {pipeline_mode = #tpu.pipeline_mode<synchronous>, transform_indices = @transform_4, window_bounds = array<i64: 128, 128>}, {pipeline_mode = #tpu.pipeline_mode<synchronous>, transform_indices = @transform_5, window_bounds = array<i64: 1, 128>}, {pipeline_mode = #tpu.pipeline_mode<synchronous>, transform_indices = @transform_6, window_bounds = array<i64: 1, 128>}, {pipeline_mode = #tpu.pipeline_mode<synchronous>, transform_indices = @transform_7, window_bounds = array<i64: 1, 128>}, {transform_indices = @transform_8, window_bounds = array<i64: 1, 64, 128>}, {transform_indices = @transform_9, window_bounds = array<i64: 1, 64, 128>}, {transform_indices = @transform_10, window_bounds = array<i64: 1, 64, 128>}]} {
    %c0 = arith.constant 0 : index
    %c0_0 = arith.constant 0 : index
    %c0_1 = arith.constant 0 : index
    %0 = vector.load %arg2[%c0, %c0_0, %c0_1] : memref<1x64x128xf32, #tpu.memory_space<vmem>>, vector<1x64x128xf32>
    %1 = vector.shape_cast %0 : vector<1x64x128xf32> to vector<64x128xf32>
    %c0_2 = arith.constant 0 : index
    %c0_3 = arith.constant 0 : index
    %c0_4 = arith.constant 0 : index
    %2 = vector.load %arg3[%c0_2, %c0_3, %c0_4] : memref<1x2x128xf32, #tpu.memory_space<vmem>>, vector<1x1x128xf32>
    %3 = vector.shape_cast %2 : vector<1x1x128xf32> to vector<1x128xf32>
    %c0_5 = arith.constant 0 : index
    %c1 = arith.constant 1 : index
    %c0_6 = arith.constant 0 : index
    %4 = vector.load %arg3[%c0_5, %c1, %c0_6] : memref<1x2x128xf32, #tpu.memory_space<vmem>>, vector<1x1x128xf32>
    %5 = vector.shape_cast %4 : vector<1x1x128xf32> to vector<1x128xf32>
    %6 = vector.broadcast %3 : vector<1x128xf32> to vector<64x128xf32>
    %7 = arith.mulf %1, %6 : vector<64x128xf32>
    %8 = vector.broadcast %5 : vector<1x128xf32> to vector<64x128xf32>
    %9 = arith.addf %7, %8 : vector<64x128xf32>
    %10 = arith.truncf %9 : vector<64x128xf32> to vector<64x128xbf16>
    %c0_7 = arith.constant 0 : index
    %c0_8 = arith.constant 0 : index
    %11 = vector.load %arg4[%c0_7, %c0_8] : memref<128x128xbf16, #tpu.memory_space<vmem>>, vector<128x128xbf16>
    %cst = arith.constant dense<0.000000e+00> : vector<64x128xf32>
    %12 = tpu.matmul %10, %11, %cst {dimension_numbers = #tpu.dot_dimension_numbers<[1], [0], [0], [1], [0, 0, 1, 1], [], []>} : vector<64x128xbf16>, vector<128x128xbf16>, vector<64x128xf32> -> vector<64x128xf32>
    %c0_9 = arith.constant 0 : index
    %c0_10 = arith.constant 0 : index
    %13 = vector.load %arg7[%c0_9, %c0_10] : memref<1x128xf32, #tpu.memory_space<vmem>>, vector<1x128xf32>
    %14 = vector.broadcast %13 : vector<1x128xf32> to vector<64x128xf32>
    %15 = arith.addf %12, %14 : vector<64x128xf32>
    %c0_11 = arith.constant 0 : index
    %c0_12 = arith.constant 0 : index
    %16 = vector.load %arg5[%c0_11, %c0_12] : memref<128x128xbf16, #tpu.memory_space<vmem>>, vector<128x128xbf16>
    %cst_13 = arith.constant dense<0.000000e+00> : vector<64x128xf32>
    %17 = tpu.matmul %10, %16, %cst_13 {dimension_numbers = #tpu.dot_dimension_numbers<[1], [0], [0], [1], [0, 0, 1, 1], [], []>} : vector<64x128xbf16>, vector<128x128xbf16>, vector<64x128xf32> -> vector<64x128xf32>
    %c0_14 = arith.constant 0 : index
    %c0_15 = arith.constant 0 : index
    %18 = vector.load %arg8[%c0_14, %c0_15] : memref<1x128xf32, #tpu.memory_space<vmem>>, vector<1x128xf32>
    %19 = vector.broadcast %18 : vector<1x128xf32> to vector<64x128xf32>
    %20 = arith.addf %17, %19 : vector<64x128xf32>
    %c0_16 = arith.constant 0 : index
    %c0_17 = arith.constant 0 : index
    %21 = vector.load %arg6[%c0_16, %c0_17] : memref<128x128xbf16, #tpu.memory_space<vmem>>, vector<128x128xbf16>
    %cst_18 = arith.constant dense<0.000000e+00> : vector<64x128xf32>
    %22 = tpu.matmul %10, %21, %cst_18 {dimension_numbers = #tpu.dot_dimension_numbers<[1], [0], [0], [1], [0, 0, 1, 1], [], []>} : vector<64x128xbf16>, vector<128x128xbf16>, vector<64x128xf32> -> vector<64x128xf32>
    %c0_19 = arith.constant 0 : index
    %c0_20 = arith.constant 0 : index
    %23 = vector.load %arg9[%c0_19, %c0_20] : memref<1x128xf32, #tpu.memory_space<vmem>>, vector<1x128xf32>
    %24 = vector.broadcast %23 : vector<1x128xf32> to vector<64x128xf32>
    %25 = arith.addf %22, %24 : vector<64x128xf32>
    %26 = arith.truncf %15 : vector<64x128xf32> to vector<64x128xbf16>
    %c0_21 = arith.constant 0 : index
    %c0_22 = arith.constant 0 : index
    %c0_23 = arith.constant 0 : index
    %27 = vector.load %arg10[%c0_21, %c0_22, %c0_23] : memref<1x64x128xbf16, #tpu.memory_space<vmem>>, vector<1x64x128xbf16>
    %28 = vector.shape_cast %27 : vector<1x64x128xbf16> to vector<64x128xbf16>
    %29 = vector.shape_cast %26 : vector<64x128xbf16> to vector<1x64x128xbf16>
    tpu.vector_store %arg10[%c0_21, %c0_22, %c0_23], %29 {strides = array<i32>} : memref<1x64x128xbf16, #tpu.memory_space<vmem>>, vector<1x64x128xbf16>,
    %30 = arith.truncf %20 : vector<64x128xf32> to vector<64x128xbf16>
    %c0_24 = arith.constant 0 : index
    %c0_25 = arith.constant 0 : index
    %c0_26 = arith.constant 0 : index
    %31 = vector.load %arg11[%c0_24, %c0_25, %c0_26] : memref<1x64x128xbf16, #tpu.memory_space<vmem>>, vector<1x64x128xbf16>
    %32 = vector.shape_cast %31 : vector<1x64x128xbf16> to vector<64x128xbf16>
    %33 = vector.shape_cast %30 : vector<64x128xbf16> to vector<1x64x128xbf16>
    tpu.vector_store %arg11[%c0_24, %c0_25, %c0_26], %33 {strides = array<i32>} : memref<1x64x128xbf16, #tpu.memory_space<vmem>>, vector<1x64x128xbf16>,
    %34 = arith.truncf %25 : vector<64x128xf32> to vector<64x128xbf16>
    %c0_27 = arith.constant 0 : index
    %c0_28 = arith.constant 0 : index
    %c0_29 = arith.constant 0 : index
    %35 = vector.load %arg12[%c0_27, %c0_28, %c0_29] : memref<1x64x128xbf16, #tpu.memory_space<vmem>>, vector<1x64x128xbf16>
    %36 = vector.shape_cast %35 : vector<1x64x128xbf16> to vector<64x128xbf16>
    %37 = vector.shape_cast %34 : vector<64x128xbf16> to vector<1x64x128xbf16>
    tpu.vector_store %arg12[%c0_27, %c0_28, %c0_29], %37 {strides = array<i32>} : memref<1x64x128xbf16, #tpu.memory_space<vmem>>, vector<1x64x128xbf16>,
    return
  }
  func.func @transform_0(%arg0: i32, %arg1: i32) -> (i32, i32, i32) {
    %c0_i32 = arith.constant 0 : i32
    %c0_i32_0 = arith.constant 0 : i32
    return %arg0, %arg1, %c0_i32 : i32, i32, i32
  }
  func.func @transform_1(%arg0: i32, %arg1: i32) -> (i32, i32, i32) {
    %c0_i32 = arith.constant 0 : i32
    %c0_i32_0 = arith.constant 0 : i32
    %c0_i32_1 = arith.constant 0 : i32
    return %arg0, %c0_i32, %c0_i32_0 : i32, i32, i32
  }
  func.func @transform_2(%arg0: i32, %arg1: i32) -> (i32, i32) {
    %c0_i32 = arith.constant 0 : i32
    %c0_i32_0 = arith.constant 0 : i32
    %c0_i32_1 = arith.constant 0 : i32
    return %c0_i32, %c0_i32_0 : i32, i32
  }
  func.func @transform_3(%arg0: i32, %arg1: i32) -> (i32, i32) {
    %c0_i32 = arith.constant 0 : i32
    %c0_i32_0 = arith.constant 0 : i32
    %c0_i32_1 = arith.constant 0 : i32
    return %c0_i32, %c0_i32_0 : i32, i32
  }
  func.func @transform_4(%arg0: i32, %arg1: i32) -> (i32, i32) {
    %c0_i32 = arith.constant 0 : i32
    %c0_i32_0 = arith.constant 0 : i32
    %c0_i32_1 = arith.constant 0 : i32
    return %c0_i32, %c0_i32_0 : i32, i32
  }
  func.func @transform_5(%arg0: i32, %arg1: i32) -> (i32, i32) {
    %c0_i32 = arith.constant 0 : i32
    %c0_i32_0 = arith.constant 0 : i32
    %c0_i32_1 = arith.constant 0 : i32
    return %c0_i32, %c0_i32_0 : i32, i32
  }
  func.func @transform_6(%arg0: i32, %arg1: i32) -> (i32, i32) {
    %c0_i32 = arith.constant 0 : i32
    %c0_i32_0 = arith.constant 0 : i32
    %c0_i32_1 = arith.constant 0 : i32
    return %c0_i32, %c0_i32_0 : i32, i32
  }
  func.func @transform_7(%arg0: i32, %arg1: i32) -> (i32, i32) {
    %c0_i32 = arith.constant 0 : i32
    %c0_i32_0 = arith.constant 0 : i32
    %c0_i32_1 = arith.constant 0 : i32
    return %c0_i32, %c0_i32_0 : i32, i32
  }
  func.func @transform_8(%arg0: i32, %arg1: i32) -> (i32, i32, i32) {
    %c0_i32 = arith.constant 0 : i32
    %c0_i32_0 = arith.constant 0 : i32
    return %arg0, %arg1, %c0_i32 : i32, i32, i32
  }
  func.func @transform_9(%arg0: i32, %arg1: i32) -> (i32, i32, i32) {
    %c0_i32 = arith.constant 0 : i32
    %c0_i32_0 = arith.constant 0 : i32
    return %arg0, %arg1, %c0_i32 : i32, i32, i32
  }
  func.func @transform_10(%arg0: i32, %arg1: i32) -> (i32, i32, i32) {
    %c0_i32 = arith.constant 0 : i32
    %c0_i32_0 = arith.constant 0 : i32
    return %arg0, %arg1, %c0_i32 : i32, i32, i32
  }
}

</mosaic_0001>

<llo_original>
// kernel: self_attention_pallas.3
$region0: #{self_attention_pallas.3}
  #allocation0 [shape = 'u32[]', space=smem, size = 0x4, offset = 0x4, fixed_abs, tag = 'smem constant byte address 0x4 - core index']
  #allocation1 [shape = 'u32[144,128]{1,0:T(1,128)}', space=vmem, size = 0x12000, scoped, tag = 'internal scratch']
  #allocation2 [shape = 'f32[1,128]{1,0:T(1,128)}', space=vmem, size = 0x200, scoped, tag = 'scratch operand']
  #allocation3 [shape = 'f32[1,128]{1,0:T(1,128)}', space=vmem, size = 0x200, scoped, tag = 'scratch operand']
  %s0 = inlined_call_operand.vmem [shape: f32[2,64,128], index: 0, kind: input, shape index: {}]
  %s1 = inlined_call_operand.vmem [shape: f32[1,128], index: 1, kind: input, shape index: {}]
  %s2 = inlined_call_operand.vmem [shape: f32[1,128], index: 2, kind: input, shape index: {}]
  %s3 = inlined_call_operand.vmem [shape: f32[128,32], index: 3, kind: input, shape index: {}]
  %s4 = inlined_call_operand.vmem [shape: f32[2,2,128], index: 4, kind: output, shape index: {}]
  %s5 = sld [smem:[#allocation0]]
  $region57: #{self_attention_pallas.3} parent=0
    _
  %s7 = ssub.s32 1, %s5
  %s8 = scalar_select 0, %s7, %s5
  loop: start=0, step=1, limit=4
  $region2: #{self_attention_pallas.3} parent=0 // loop_pre_header
    _
  $region3: #{self_attention_pallas.3} parent=0 // loop_header
    %s10 = sphi 0, %s14
    %p11 = scmp.ge.s32.totalorder %s10, 4
    %s17 = sphi 0, %s29
    %s18 = sphi 0, %s25
    %s19 = sphi 0, %s17
    %s20 = sphi 0, %s18
    %s21 = sphi 0, %s19
    %s22 = sphi 0, %s20
    %s34 = sphi 0, %s36
    %s37 = sphi 0, %s34
    %s38 = sphi 0, %s37
    %s54 = sphi 0, %s38
    %s58 = sphi 0, %s58
    %s60 = sphi 0, %s58
    %s61 = sphi 0, %s60
    %s75 = sphi 0, %s61
    %s79 = sphi 0, %s79
    %s81 = sphi 0, %s79
    %s82 = sphi 0, %s81
    %s96 = sphi 0, %s82
    %s100 = sphi 0, %s100
    %s102 = sphi 0, %s100
    %s103 = sphi 0, %s102
    %s117 = sphi 0, %s103
    %s123 = sphi 0, %s125
    %s126 = sphi 0, %s123
    %s127 = sphi 0, %s126
    %s143 = sphi 0, %s127
  $region4: #{self_attention_pallas.3} parent=0 // loop_header_branch
    %13 = sbr.rel (%p11) target = $region8
  $region5: #{self_attention_pallas.3} parent=0 // loop_body
    %s15 = ssub.s32 %s10, 1
    %s16 = ssub.s32 %s10, 2
    %s23 = sadd.s32 1, %s18
    %p24 = scmp.ge.s32.totalorder %s23, 1
    %s25 = scalar_select %p24, 0, %s23
    %s26 = sadd.s32 1, %s17
    %s27 = scalar_select %p24, %s26, %s17
    %p28 = scmp.ge.s32.totalorder %s27, 2
    %s29 = scalar_select %p28, 0, %s27
    %s30 = ssub.s32 %s17, %s29
    %s31 = ssub.s32 %s18, %s25
    %s32 = sor.u32 %s30, %s31
    %p33 = scmp.eq.s32.totalorder %s32, 0
    %s35 = sadd.s32 %s34, 1
    %s36 = scalar_select %p33, %s34, %s35
    %p39 = pneg %p33
    %p40 = scmp.eq.s32.totalorder %s10, 1
    %p41 = por %p39, %p40
    %p42 = scmp.ne.s32.totalorder %s34, %s37
    %p43 = scmp.eq.s32.totalorder %s10, 0
    %p44 = por %p42, %p43
    %p45 = scmp.ne.s32.totalorder %s34, %s37
    %p46 = scmp.eq.s32.totalorder %s15, 1
    %p47 = por %p45, %p46
    %p48 = scmp.ne.s32.totalorder %s37, %s38
    %p49 = scmp.eq.s32.totalorder %s15, 0
    %p50 = por %p48, %p49
    %p51 = scmp.ne.s32.totalorder %s37, %s38
    %p52 = scmp.eq.s32.totalorder %s16, 1
    %p53 = por %p51, %p52
    %p55 = scmp.ne.s32.totalorder %s38, %s54
    %p56 = scmp.eq.s32.totalorder %s16, 0
    %p57 = por %p55, %p56
    %s59 = sadd.s32 %s58, 1
    %p62 = scmp.eq.s32.totalorder %s10, 1
    %p63 = scmp.ne.s32.totalorder %s58, %s60
    %p64 = scmp.eq.s32.totalorder %s10, 0
    %p65 = por %p63, %p64
    %p66 = scmp.ne.s32.totalorder %s58, %s60
    %p67 = scmp.eq.s32.totalorder %s15, 1
    %p68 = por %p66, %p67
    %p69 = scmp.ne.s32.totalorder %s60, %s61
    %p70 = scmp.eq.s32.totalorder %s15, 0
    %p71 = por %p69, %p70
    %p72 = scmp.ne.s32.totalorder %s60, %s61
    %p73 = scmp.eq.s32.totalorder %s16, 1
    %p74 = por %p72, %p73
    %p76 = scmp.ne.s32.totalorder %s61, %s75
    %p77 = scmp.eq.s32.totalorder %s16, 0
    %p78 = por %p76, %p77
    %s80 = sadd.s32 %s79, 1
    %p83 = scmp.eq.s32.totalorder %s10, 1
    %p84 = scmp.ne.s32.totalorder %s79, %s81
    %p85 = scmp.eq.s32.totalorder %s10, 0
    %p86 = por %p84, %p85
    %p87 = scmp.ne.s32.totalorder %s79, %s81
    %p88 = scmp.eq.s32.totalorder %s15, 1
    %p89 = por %p87, %p88
    %p90 = scmp.ne.s32.totalorder %s81, %s82
    %p91 = scmp.eq.s32.totalorder %s15, 0
    %p92 = por %p90, %p91
    %p93 = scmp.ne.s32.totalorder %s81, %s82
    %p94 = scmp.eq.s32.totalorder %s16, 1
    %p95 = por %p93, %p94
    %p97 = scmp.ne.s32.totalorder %s82, %s96
    %p98 = scmp.eq.s32.totalorder %s16, 0
    %p99 = por %p97, %p98
    %s101 = sadd.s32 %s100, 1
    %p104 = scmp.eq.s32.totalorder %s10, 1
    %p105 = scmp.ne.s32.totalorder %s100, %s102
    %p106 = scmp.eq.s32.totalorder %s10, 0
    %p107 = por %p105, %p106
    %p108 = scmp.ne.s32.totalorder %s100, %s102
    %p109 = scmp.eq.s32.totalorder %s15, 1
    %p110 = por %p108, %p109
    %p111 = scmp.ne.s32.totalorder %s102, %s103
    %p112 = scmp.eq.s32.totalorder %s15, 0
    %p113 = por %p111, %p112
    %p114 = scmp.ne.s32.totalorder %s102, %s103
    %p115 = scmp.eq.s32.totalorder %s16, 1
    %p116 = por %p114, %p115
    %p118 = scmp.ne.s32.totalorder %s103, %s117
    %p119 = scmp.eq.s32.totalorder %s16, 0
    %p120 = por %p118, %p119
    %s121 = ssub.s32 %s17, %s29
    %p122 = scmp.eq.s32.totalorder %s121, 0
    %s124 = sadd.s32 %s123, 1
    %s125 = scalar_select %p122, %s123, %s124
    %p128 = pneg %p122
    %p129 = scmp.eq.s32.totalorder %s10, 1
    %p130 = por %p128, %p129
    %p131 = scmp.ne.s32.totalorder %s123, %s126
    %p132 = scmp.eq.s32.totalorder %s10, 0
    %p133 = por %p131, %p132
    %p134 = scmp.ne.s32.totalorder %s123, %s126
    %p135 = scmp.eq.s32.totalorder %s15, 1
    %p136 = por %p134, %p135
    %p137 = scmp.ne.s32.totalorder %s126, %s127
    %p138 = scmp.eq.s32.totalorder %s15, 0
    %p139 = por %p137, %p138
    %p140 = scmp.ne.s32.totalorder %s126, %s127
    %p141 = scmp.eq.s32.totalorder %s16, 1
    %p142 = por %p140, %p141
    %p144 = scmp.ne.s32.totalorder %s127, %s143
    %p145 = scmp.eq.s32.totalorder %s16, 0
    %p146 = por %p144, %p145
    %p147 = scmp.le.s32.totalorder 1, %s10
    %p148 = scmp.lt.s32.totalorder %s10, 3
    %p149 = pnand %p147, %p148
    %p150 = pneg %p149
    // Predicated region
    $region9: #{self_attention_pallas.3} parent=5 // pred_check
      _
    $region10: #{self_attention_pallas.3} parent=5 // pred_check_branch
      %152 = sbr.rel (%p149) target = $region12
    $region11: #{self_attention_pallas.3} parent=5 // pred_region
      %s153 = ssub.s32 %s10, 1
      // Predicated region
      $region13: #{self_attention_pallas.3} parent=11 // pred_check
        %p154 = pneg %p71
      $region14: #{self_attention_pallas.3} parent=11 // pred_check_branch
        %156 = sbr.rel (%p154) target = $region16
      $region15: #{self_attention_pallas.3} parent=11 // pred_region
        _
      $region16: #{self_attention_pallas.3} parent=11 // pred_fallthru
        _
      // Predicated region
      $region17: #{self_attention_pallas.3} parent=11 // pred_check
        %p157 = pneg %p92
      $region18: #{self_attention_pallas.3} parent=11 // pred_check_branch
        %159 = sbr.rel (%p157) target = $region20
      $region19: #{self_attention_pallas.3} parent=11 // pred_region
        _
      $region20: #{self_attention_pallas.3} parent=11 // pred_fallthru
        _
      // Predicated region
      $region21: #{self_attention_pallas.3} parent=11 // pred_check
        %p160 = pneg %p113
      $region22: #{self_attention_pallas.3} parent=11 // pred_check_branch
        %162 = sbr.rel (%p160) target = $region24
      $region23: #{self_attention_pallas.3} parent=11 // pred_region
        _
      $region24: #{self_attention_pallas.3} parent=11 // pred_fallthru
        _
    $region12: #{self_attention_pallas.3} parent=5 // pred_fallthru
      _
    %p163 = scmp.lt.s32.totalorder %s10, 2
    // Predicated region
    $region25: #{self_attention_pallas.3} parent=5 // pred_check
      %p164 = pneg %p163
    $region26: #{self_attention_pallas.3} parent=5 // pred_check_branch
      %166 = sbr.rel (%p164) target = $region28
    $region27: #{self_attention_pallas.3} parent=5 // pred_region
      // Predicated region
      $region29: #{self_attention_pallas.3} parent=27 // pred_check
        %p167 = pneg %p44
      $region30: #{self_attention_pallas.3} parent=27 // pred_check_branch
        %169 = sbr.rel (%p167) target = $region32
      $region31: #{self_attention_pallas.3} parent=27 // pred_region
        %s170 = smul.u32 8, %s18
        %p171 = scmp.lt.s32.totalorder %s17, 1
        %s172 = scalar_select %p171, %s17, 1
        %p173 = scmp.lt.s32.totalorder %s170, 7
        %s174 = scalar_select %p173, %s170, 7
        %s175 = smul.addr %s172, 8
        %s176 = sadd.s32 %s174, %s175
        %s177 = smul.addr %s176, 8
        %s178 = scalar_lea.vmem %s0, %s177
        %s179 = smul.u32 8, %s18
      $region32: #{self_attention_pallas.3} parent=27 // pred_fallthru
        _
    $region28: #{self_attention_pallas.3} parent=5 // pred_fallthru
      _
    %p180 = scmp.le.s32.totalorder 1, %s10
    %p181 = scmp.lt.s32.totalorder %s10, 3
    %p182 = pnand %p180, %p181
    %p183 = pneg %p182
    // Predicated region
    $region33: #{self_attention_pallas.3} parent=5 // pred_check
      _
    $region34: #{self_attention_pallas.3} parent=5 // pred_check_branch
      %185 = sbr.rel (%p182) target = $region36
    $region35: #{self_attention_pallas.3} parent=5 // pred_region
      %s186 = ssub.s32 %s10, 1
      %s187 = smul.u32 8, %s20
      %p188 = scmp.lt.s32.totalorder %s19, 1
      %s189 = scalar_select %p188, %s19, 1
      %p190 = scmp.lt.s32.totalorder %s187, 7
      %s191 = scalar_select %p190, %s187, 7
      %s192 = smul.addr %s189, 8
      %s193 = sadd.s32 %s191, %s192
      %s194 = smul.addr %s193, 8
      %s195 = scalar_lea.vmem %s0, %s194
      %p196 = pneg %p50
      %p197 = pneg %p47
      %p198 = pneg %p71
      %p199 = pneg %p68
      %p200 = pneg %p92
      %p201 = pneg %p89
      %p202 = pneg %p113
      %p203 = pneg %p110
      %p204 = pneg %p139
      %p205 = pneg %p136
      %p206 = scmp.lt.s32.totalorder %s19, 1
      %s207 = scalar_select %p206, %s19, 1
      %s208 = smul.addr %s207, 2
      %s209 = scalar_lea.vmem %s4, %s208
      %s210 = smul.u32 8, %s20
      %p211 = scmp.lt.s32.totalorder %s19, 1
      %s212 = scalar_select %p211, %s19, 1
      %p213 = scmp.lt.s32.totalorder %s210, 7
      %s214 = scalar_select %p213, %s210, 7
      %s215 = smul.addr %s212, 8
      %s216 = sadd.s32 %s214, %s215
      %s217 = smul.addr %s216, 8
      %s218 = scalar_lea.vmem %s0, %s217
      %s219 = smul.u32 8, %s20
      %p220 = scmp.lt.s32.totalorder %s19, 1
      %s221 = scalar_select %p220, %s19, 1
      %s222 = smul.addr %s221, 2
      %s223 = scalar_lea.vmem %s4, %s222
      %p224 = scmp.eq.s32.totalorder %s20, 0
      // Predicated region
      $region37: #{self_attention_pallas.3} parent=35 // pred_check
        %p225 = pneg %p224
      $region38: #{self_attention_pallas.3} parent=35 // pred_check_branch
        %227 = sbr.rel (%p225) target = $region40
      $region39: #{self_attention_pallas.3} parent=35 // pred_region
        %228 = vst [vmem:[#allocation2] sm:$0x1] 0.0
        %229 = vst [vmem:[#allocation3] sm:$0x1] 0.0
      $region40: #{self_attention_pallas.3} parent=35 // pred_fallthru
        _
      %v230 = vld [vmem:[%s218] sm:$0xff]
      %v231 = vld [vmem:[%s218 + $0x8] sm:$0xff]
      %v232 = vld [vmem:[%s218 + $0x10] sm:$0xff]
      %v233 = vld [vmem:[%s218 + $0x18] sm:$0xff]
      %v234 = vld [vmem:[%s218 + $0x20] sm:$0xff]
      %v235 = vld [vmem:[%s218 + $0x28] sm:$0xff]
      %v236 = vld [vmem:[%s218 + $0x30] sm:$0xff]
      %v237 = vld [vmem:[%s218 + $0x38] sm:$0xff]
      %v238 = vld [vmem:[#allocation2] sm:$0x1]
      %v239 = vadd.f32 %v230, %v231
      %v240 = vadd.f32 %v239, %v232
      %v241 = vadd.f32 %v240, %v233
      %v242 = vadd.f32 %v241, %v234
      %v243 = vadd.f32 %v242, %v235
      %v244 = vadd.f32 %v243, %v236
      %v245 = vadd.f32 %v244, %v237
      %v246 = vrot.slane %v245, 4
      %v247 = vadd.f32 %v245, %v246
      %v248 = vrot.slane %v247, 2
      %v249 = vadd.f32 %v247, %v248
      %v250 = vrot.slane %v249, 1
      %v251 = vadd.f32 %v249, %v250
      %v252 = vadd.f32 %v238, %v251
      %253 = vst [vmem:[#allocation2] sm:$0x1] %v252
      %v254 = vld [vmem:[#allocation3] sm:$0x1]
      %v255 = vmul.f32 %v230, %v230
      %v256 = vmul.f32 %v231, %v231
      %v257 = vmul.f32 %v232, %v232
      %v258 = vmul.f32 %v233, %v233
      %v259 = vmul.f32 %v234, %v234
      %v260 = vmul.f32 %v235, %v235
      %v261 = vmul.f32 %v236, %v236
      %v262 = vmul.f32 %v237, %v237
      %v263 = vadd.f32 %v255, %v256
      %v264 = vadd.f32 %v263, %v257
      %v265 = vadd.f32 %v264, %v258
      %v266 = vadd.f32 %v265, %v259
      %v267 = vadd.f32 %v266, %v260
      %v268 = vadd.f32 %v267, %v261
      %v269 = vadd.f32 %v268, %v262
      %v270 = vrot.slane %v269, 4
      %v271 = vadd.f32 %v269, %v270
      %v272 = vrot.slane %v271, 2
      %v273 = vadd.f32 %v271, %v272
      %v274 = vrot.slane %v273, 1
      %v275 = vadd.f32 %v273, %v274
      %v276 = vadd.f32 %v254, %v275
      %277 = vst [vmem:[#allocation3] sm:$0x1] %v276
      // Predicated region
      $region41: #{self_attention_pallas.3} parent=35 // pred_check
        %p278 = pneg %p224
      $region42: #{self_attention_pallas.3} parent=35 // pred_check_branch
        %280 = sbr.rel (%p278) target = $region44
      $region43: #{self_attention_pallas.3} parent=35 // pred_region
        %v281 = vld [vmem:[%s3] sm:$0xff]
        %v282 = vld [vmem:[%s3 + $0x8] sm:$0xff]
        %v283 = vld [vmem:[%s3 + $0x10] sm:$0xff]
        %v284 = vld [vmem:[%s3 + $0x18] sm:$0xff]
        %v285 = vld [vmem:[%s3 + $0x20] sm:$0xff]
        %v286 = vld [vmem:[%s3 + $0x28] sm:$0xff]
        %v287 = vld [vmem:[%s3 + $0x30] sm:$0xff]
        %v288 = vld [vmem:[%s3 + $0x38] sm:$0xff]
        %v289 = vld [vmem:[%s3 + $0x40] sm:$0xff]
        %v290 = vld [vmem:[%s3 + $0x48] sm:$0xff]
        %v291 = vld [vmem:[%s3 + $0x50] sm:$0xff]
        %v292 = vld [vmem:[%s3 + $0x58] sm:$0xff]
        %v293 = vld [vmem:[%s3 + $0x60] sm:$0xff]
        %v294 = vld [vmem:[%s3 + $0x68] sm:$0xff]
        %v295 = vld [vmem:[%s3 + $0x70] sm:$0xff]
        %v296 = vld [vmem:[%s3 + $0x78] sm:$0xff]
        %v297 = vld [vmem:[#allocation2] sm:$0x1]
        %298 = vmatprep.subr.mxu0 0.0
        %299 = vmatpush1.msra.mxu0 %v281
        %300 = vmatprep.subr.mxu0 0.0
        %301 = vmatpush1.msra.mxu0 %v282
        %302 = vmatprep.subr.mxu0 0.0
        %303 = vmatpush1.msra.mxu0 %v283
        %304 = vmatprep.subr.mxu0 0.0
        %305 = vmatpush1.msra.mxu0 %v284
        %306 = vmatprep.subr.mxu0 0.0
        %307 = vmatpush1.msra.mxu0 %v285
        %308 = vmatprep.subr.mxu0 0.0
        %309 = vmatpush1.msra.mxu0 %v286
        %310 = vmatprep.subr.mxu0 0.0
        %311 = vmatpush1.msra.mxu0 %v287
        %312 = vmatprep.subr.mxu0 0.0
        %313 = vmatpush1.msra.mxu0 %v288
        %314 = vmatprep.subr.mxu0 0.0
        %315 = vmatpush1.msra.mxu0 %v289
        %316 = vmatprep.subr.mxu0 0.0
        %317 = vmatpush1.msra.mxu0 %v290
        %318 = vmatprep.subr.mxu0 0.0
        %319 = vmatpush1.msra.mxu0 %v291
        %320 = vmatprep.subr.mxu0 0.0
        %321 = vmatpush1.msra.mxu0 %v292
        %322 = vmatprep.subr.mxu0 0.0
        %323 = vmatpush1.msra.mxu0 %v293
        %324 = vmatprep.subr.mxu0 0.0
        %325 = vmatpush1.msra.mxu0 %v294
        %326 = vmatprep.subr.mxu0 0.0
        %327 = vmatpush1.msra.mxu0 %v295
        %328 = vmatprep.subr.mxu0 0.0
        %329 = vmatpush1.msra.mxu0 %v296
        %330 = vmatprep.subr.mxu0 0.0
        %331 = vmatpush1.msra.mxu0 0.0
        %332 = vmatprep.subr.mxu0 0.0
        %333 = vmatpush1.msra.mxu0 0.0
        %334 = vmatprep.subr.mxu0 0.0
        %335 = vmatpush1.msra.mxu0 0.0
        %336 = vmatprep.subr.mxu0 0.0
        %337 = vmatpush1.msra.mxu0 0.0
        %338 = vmatprep.subr.mxu0 0.0
        %339 = vmatpush1.msra.mxu0 0.0
        %340 = vmatprep.subr.mxu0 0.0
        %341 = vmatpush1.msra.mxu0 0.0
        %342 = vmatprep.subr.mxu0 0.0
        %343 = vmatpush1.msra.mxu0 0.0
        %344 = vmatprep.subr.mxu0 0.0
        %345 = vmatpush1.msra.mxu0 0.0
        %346 = vmatprep.subr.mxu0 0.0
        %347 = vmatpush1.msra.mxu0 0.0
        %348 = vmatprep.subr.mxu0 0.0
        %349 = vmatpush1.msra.mxu0 0.0
        %350 = vmatprep.subr.mxu0 0.0
        %351 = vmatpush1.msra.mxu0 0.0
        %352 = vmatprep.subr.mxu0 0.0
        %353 = vmatpush1.msra.mxu0 0.0
        %354 = vmatprep.subr.mxu0 0.0
        %355 = vmatpush1.msra.mxu0 0.0
        %356 = vmatprep.subr.mxu0 0.0
        %357 = vmatpush1.msra.mxu0 0.0
        %358 = vmatprep.subr.mxu0 0.0
        %359 = vmatpush1.msra.mxu0 0.0
        %360 = vmatprep.subr.mxu0 0.0
        %361 = vmatpush1.msra.mxu0 0.0
        %362 = vmatprep.mubr.f32.mxu0 0.0
        %363 = vmatmul.mubr.f32.gmra.mrb[0].mxu0 %v297
        %v364 = vpop.f32.mrb[0].mxu0
        %v365 = vadd.f32 0.0, %v364
        %v366 = vpop.f32.mrb[0].mxu0
        %367 = vdwg.mxu0
        %v368 = vld [vmem:[#allocation3] sm:$0x1]
        %369 = vmatprep.subr.mxu0 0.0
        %370 = vmatpush1.msra.mxu0 %v281
        %371 = vmatprep.subr.mxu0 0.0
        %372 = vmatpush1.msra.mxu0 %v282
        %373 = vmatprep.subr.mxu0 0.0
        %374 = vmatpush1.msra.mxu0 %v283
        %375 = vmatprep.subr.mxu0 0.0
        %376 = vmatpush1.msra.mxu0 %v284
        %377 = vmatprep.subr.mxu0 0.0
        %378 = vmatpush1.msra.mxu0 %v285
        %379 = vmatprep.subr.mxu0 0.0
        %380 = vmatpush1.msra.mxu0 %v286
        %381 = vmatprep.subr.mxu0 0.0
        %382 = vmatpush1.msra.mxu0 %v287
        %383 = vmatprep.subr.mxu0 0.0
        %384 = vmatpush1.msra.mxu0 %v288
        %385 = vmatprep.subr.mxu0 0.0
        %386 = vmatpush1.msra.mxu0 %v289
        %387 = vmatprep.subr.mxu0 0.0
        %388 = vmatpush1.msra.mxu0 %v290
        %389 = vmatprep.subr.mxu0 0.0
        %390 = vmatpush1.msra.mxu0 %v291
        %391 = vmatprep.subr.mxu0 0.0
        %392 = vmatpush1.msra.mxu0 %v292
        %393 = vmatprep.subr.mxu0 0.0
        %394 = vmatpush1.msra.mxu0 %v293
        %395 = vmatprep.subr.mxu0 0.0
        %396 = vmatpush1.msra.mxu0 %v294
        %397 = vmatprep.subr.mxu0 0.0
        %398 = vmatpush1.msra.mxu0 %v295
        %399 = vmatprep.subr.mxu0 0.0
        %400 = vmatpush1.msra.mxu0 %v296
        %401 = vmatprep.subr.mxu0 0.0
        %402 = vmatpush1.msra.mxu0 0.0
        %403 = vmatprep.subr.mxu0 0.0
        %404 = vmatpush1.msra.mxu0 0.0
        %405 = vmatprep.subr.mxu0 0.0
        %406 = vmatpush1.msra.mxu0 0.0
        %407 = vmatprep.subr.mxu0 0.0
        %408 = vmatpush1.msra.mxu0 0.0
        %409 = vmatprep.subr.mxu0 0.0
        %410 = vmatpush1.msra.mxu0 0.0
        %411 = vmatprep.subr.mxu0 0.0
        %412 = vmatpush1.msra.mxu0 0.0
        %413 = vmatprep.subr.mxu0 0.0
        %414 = vmatpush1.msra.mxu0 0.0
        %415 = vmatprep.subr.mxu0 0.0
        %416 = vmatpush1.msra.mxu0 0.0
        %417 = vmatprep.subr.mxu0 0.0
        %418 = vmatpush1.msra.mxu0 0.0
        %419 = vmatprep.subr.mxu0 0.0
        %420 = vmatpush1.msra.mxu0 0.0
        %421 = vmatprep.subr.mxu0 0.0
        %422 = vmatpush1.msra.mxu0 0.0
        %423 = vmatprep.subr.mxu0 0.0
        %424 = vmatpush1.msra.mxu0 0.0
        %425 = vmatprep.subr.mxu0 0.0
        %426 = vmatpush1.msra.mxu0 0.0
        %427 = vmatprep.subr.mxu0 0.0
        %428 = vmatpush1.msra.mxu0 0.0
        %429 = vmatprep.subr.mxu0 0.0
        %430 = vmatpush1.msra.mxu0 0.0
        %431 = vmatprep.subr.mxu0 0.0
        %432 = vmatpush1.msra.mxu0 0.0
        %433 = vmatprep.mubr.f32.mxu0 0.0
        %434 = vmatmul.mubr.f32.gmra.mrb[0].mxu0 %v368
        %v435 = vpop.f32.mrb[0].mxu0
        %v436 = vadd.f32 0.0, %v435
        %v437 = vpop.f32.mrb[0].mxu0
        %438 = vdwg.mxu0
        %v439 = vrcp.pop 64.0
        %v440 = vmul.f32 %v365, %v439
        %v441 = vmul.f32 %v436, %v439
        %v442 = vmul.f32 %v440, %v440
        %v443 = vsub.f32 %v441, %v442
        %v444 = vadd.f32 %v443, 1e-05
        %v445 = vrsqrt.pop %v444
        %vm446 = vcmask 261120
        %v448 = vsel %vm446, %v440, 0
        %v451 = vsel %vm446, %v281, 0
        %v454 = vsel %vm446, %v282, 0
        %v457 = vsel %vm446, %v283, 0
        %v460 = vsel %vm446, %v284, 0
        %v463 = vsel %vm446, %v285, 0
        %v466 = vsel %vm446, %v286, 0
        %v469 = vsel %vm446, %v287, 0
        %v472 = vsel %vm446, %v288, 0
        %v475 = vsel %vm446, %v289, 0
        %v478 = vsel %vm446, %v290, 0
        %v481 = vsel %vm446, %v291, 0
        %v484 = vsel %vm446, %v292, 0
        %v487 = vsel %vm446, %v293, 0
        %v490 = vsel %vm446, %v294, 0
        %v493 = vsel %vm446, %v295, 0
        %v496 = vsel %vm446, %v296, 0
        %498 = vmatprep.subr.mxu0 0.0
        %499 = vmatpush1.xpose.msra.mxu0 %v451
        %500 = vmatprep.subr.mxu0 0.0
        %501 = vmatpush1.xpose.msra.mxu0 %v454
        %502 = vmatprep.subr.mxu0 0.0
        %503 = vmatpush1.xpose.msra.mxu0 %v457
        %504 = vmatprep.subr.mxu0 0.0
        %505 = vmatpush1.xpose.msra.mxu0 %v460
        %506 = vmatprep.subr.mxu0 0.0
        %507 = vmatpush1.xpose.msra.mxu0 %v463
        %508 = vmatprep.subr.mxu0 0.0
        %509 = vmatpush1.xpose.msra.mxu0 %v466
        %510 = vmatprep.subr.mxu0 0.0
        %511 = vmatpush1.xpose.msra.mxu0 %v469
        %512 = vmatprep.subr.mxu0 0.0
        %513 = vmatpush1.xpose.msra.mxu0 %v472
        %514 = vmatprep.subr.mxu0 0.0
        %515 = vmatpush1.xpose.msra.mxu0 %v475
        %516 = vmatprep.subr.mxu0 0.0
        %517 = vmatpush1.xpose.msra.mxu0 %v478
        %518 = vmatprep.subr.mxu0 0.0
        %519 = vmatpush1.xpose.msra.mxu0 %v481
        %520 = vmatprep.subr.mxu0 0.0
        %521 = vmatpush1.xpose.msra.mxu0 %v484
        %522 = vmatprep.subr.mxu0 0.0
        %523 = vmatpush1.xpose.msra.mxu0 %v487
        %524 = vmatprep.subr.mxu0 0.0
        %525 = vmatpush1.xpose.msra.mxu0 %v490
        %526 = vmatprep.subr.mxu0 0.0
        %527 = vmatpush1.xpose.msra.mxu0 %v493
        %528 = vmatprep.subr.mxu0 0.0
        %529 = vmatpush1.xpose.msra.mxu0 %v496
        %530 = vmatprep.subr.mxu0 0.0
        %531 = vmatpush1.xpose.msra.mxu0 0.0
        %532 = vmatprep.subr.mxu0 0.0
        %533 = vmatpush1.xpose.msra.mxu0 0.0
        %534 = vmatprep.subr.mxu0 0.0
        %535 = vmatpush1.xpose.msra.mxu0 0.0
        %536 = vmatprep.subr.mxu0 0.0
        %537 = vmatpush1.xpose.msra.mxu0 0.0
        %538 = vmatprep.subr.mxu0 0.0
        %539 = vmatpush1.xpose.msra.mxu0 0.0
        %540 = vmatprep.subr.mxu0 0.0
        %541 = vmatpush1.xpose.msra.mxu0 0.0
        %542 = vmatprep.subr.mxu0 0.0
        %543 = vmatpush1.xpose.msra.mxu0 0.0
        %544 = vmatprep.subr.mxu0 0.0
        %545 = vmatpush1.xpose.msra.mxu0 0.0
        %546 = vmatprep.subr.mxu0 0.0
        %547 = vmatpush1.xpose.msra.mxu0 0.0
        %548 = vmatprep.subr.mxu0 0.0
        %549 = vmatpush1.xpose.msra.mxu0 0.0
        %550 = vmatprep.subr.mxu0 0.0
        %551 = vmatpush1.xpose.msra.mxu0 0.0
        %552 = vmatprep.subr.mxu0 0.0
        %553 = vmatpush1.xpose.msra.mxu0 0.0
        %554 = vmatprep.subr.mxu0 0.0
        %555 = vmatpush1.xpose.msra.mxu0 0.0
        %556 = vmatprep.subr.mxu0 0.0
        %557 = vmatpush1.xpose.msra.mxu0 0.0
        %558 = vmatprep.subr.mxu0 0.0
        %559 = vmatpush1.xpose.msra.mxu0 0.0
        %560 = vmatprep.subr.mxu0 0.0
        %561 = vmatpush1.xpose.msra.mxu0 0.0
        %562 = vmatprep.mubr.f32.mxu0 0.0
        %563 = vmatmul.mubr.f32.gmra.mrb[0].mxu0 %v448
        %v564 = vpop.f32.mrb[0].mxu0
        %v565 = vadd.f32 0.0, %v564
        %v566 = vpop.f32.mrb[0].mxu0
        %567 = vdwg.mxu0
        %v569 = vsel %vm446, %v445, 0
        %571 = vmatprep.subr.mxu0 0.0
        %572 = vmatpush1.xpose.msra.mxu0 %v451
        %573 = vmatprep.subr.mxu0 0.0
        %574 = vmatpush1.xpose.msra.mxu0 %v454
        %575 = vmatprep.subr.mxu0 0.0
        %576 = vmatpush1.xpose.msra.mxu0 %v457
        %577 = vmatprep.subr.mxu0 0.0
        %578 = vmatpush1.xpose.msra.mxu0 %v460
        %579 = vmatprep.subr.mxu0 0.0
        %580 = vmatpush1.xpose.msra.mxu0 %v463
        %581 = vmatprep.subr.mxu0 0.0
        %582 = vmatpush1.xpose.msra.mxu0 %v466
        %583 = vmatprep.subr.mxu0 0.0
        %584 = vmatpush1.xpose.msra.mxu0 %v469
        %585 = vmatprep.subr.mxu0 0.0
        %586 = vmatpush1.xpose.msra.mxu0 %v472
        %587 = vmatprep.subr.mxu0 0.0
        %588 = vmatpush1.xpose.msra.mxu0 %v475
        %589 = vmatprep.subr.mxu0 0.0
        %590 = vmatpush1.xpose.msra.mxu0 %v478
        %591 = vmatprep.subr.mxu0 0.0
        %592 = vmatpush1.xpose.msra.mxu0 %v481
        %593 = vmatprep.subr.mxu0 0.0
        %594 = vmatpush1.xpose.msra.mxu0 %v484
        %595 = vmatprep.subr.mxu0 0.0
        %596 = vmatpush1.xpose.msra.mxu0 %v487
        %597 = vmatprep.subr.mxu0 0.0
        %598 = vmatpush1.xpose.msra.mxu0 %v490
        %599 = vmatprep.subr.mxu0 0.0
        %600 = vmatpush1.xpose.msra.mxu0 %v493
        %601 = vmatprep.subr.mxu0 0.0
        %602 = vmatpush1.xpose.msra.mxu0 %v496
        %603 = vmatprep.subr.mxu0 0.0
        %604 = vmatpush1.xpose.msra.mxu0 0.0
        %605 = vmatprep.subr.mxu0 0.0
        %606 = vmatpush1.xpose.msra.mxu0 0.0
        %607 = vmatprep.subr.mxu0 0.0
        %608 = vmatpush1.xpose.msra.mxu0 0.0
        %609 = vmatprep.subr.mxu0 0.0
        %610 = vmatpush1.xpose.msra.mxu0 0.0
        %611 = vmatprep.subr.mxu0 0.0
        %612 = vmatpush1.xpose.msra.mxu0 0.0
        %613 = vmatprep.subr.mxu0 0.0
        %614 = vmatpush1.xpose.msra.mxu0 0.0
        %615 = vmatprep.subr.mxu0 0.0
        %616 = vmatpush1.xpose.msra.mxu0 0.0
        %617 = vmatprep.subr.mxu0 0.0
        %618 = vmatpush1.xpose.msra.mxu0 0.0
        %619 = vmatprep.subr.mxu0 0.0
        %620 = vmatpush1.xpose.msra.mxu0 0.0
        %621 = vmatprep.subr.mxu0 0.0
        %622 = vmatpush1.xpose.msra.mxu0 0.0
        %623 = vmatprep.subr.mxu0 0.0
        %624 = vmatpush1.xpose.msra.mxu0 0.0
        %625 = vmatprep.subr.mxu0 0.0
        %626 = vmatpush1.xpose.msra.mxu0 0.0
        %627 = vmatprep.subr.mxu0 0.0
        %628 = vmatpush1.xpose.msra.mxu0 0.0
        %629 = vmatprep.subr.mxu0 0.0
        %630 = vmatpush1.xpose.msra.mxu0 0.0
        %631 = vmatprep.subr.mxu0 0.0
        %632 = vmatpush1.xpose.msra.mxu0 0.0
        %633 = vmatprep.subr.mxu0 0.0
        %634 = vmatpush1.xpose.msra.mxu0 0.0
        %635 = vmatprep.mubr.f32.mxu0 0.0
        %636 = vmatmul.mubr.f32.gmra.mrb[0].mxu0 %v569
        %v637 = vpop.f32.mrb[0].mxu0
        %v638 = vadd.f32 0.0, %v637
        %v639 = vpop.f32.mrb[0].mxu0
        %640 = vdwg.mxu0
        %v641 = vld [vmem:[%s1] sm:$0x1]
        %v642 = vmul.f32 %v638, %v641
        %v643 = vld [vmem:[%s2] sm:$0x1]
        %v644 = vmul.f32 %v565, %v642
        %v645 = vsub.f32 %v643, %v644
        %646 = vst [vmem:[%s223] sm:$0x1] %v642
        %647 = vst [vmem:[%s223 + $0x1] sm:$0x1] %v645
      $region44: #{self_attention_pallas.3} parent=35 // pred_fallthru
        _
      %p648 = scmp.lt.s32.totalorder %s19, 1
      %s649 = scalar_select %p648, %s19, 1
      %s650 = smul.addr %s649, 2
      %s651 = scalar_lea.vmem %s4, %s650
      // Predicated region
      $region45: #{self_attention_pallas.3} parent=35 // pred_check
        %p652 = pneg %p136
      $region46: #{self_attention_pallas.3} parent=35 // pred_check_branch
        %654 = sbr.rel (%p652) target = $region48
      $region47: #{self_attention_pallas.3} parent=35 // pred_region
        _
      $region48: #{self_attention_pallas.3} parent=35 // pred_fallthru
        _
    $region36: #{self_attention_pallas.3} parent=5 // pred_fallthru
      _
    %p655 = scmp.le.s32.totalorder 2, %s10
    // Predicated region
    $region49: #{self_attention_pallas.3} parent=5 // pred_check
      %p656 = pneg %p655
    $region50: #{self_attention_pallas.3} parent=5 // pred_check_branch
      %658 = sbr.rel (%p656) target = $region52
    $region51: #{self_attention_pallas.3} parent=5 // pred_region
      %s659 = ssub.s32 %s10, 2
      // Predicated region
      $region53: #{self_attention_pallas.3} parent=51 // pred_check
        %p660 = pneg %p142
      $region54: #{self_attention_pallas.3} parent=51 // pred_check_branch
        %662 = sbr.rel (%p660) target = $region56
      $region55: #{self_attention_pallas.3} parent=51 // pred_region
        %p663 = scmp.lt.s32.totalorder %s21, 1
        %s664 = scalar_select %p663, %s21, 1
        %s665 = smul.addr %s664, 2
        %s666 = scalar_lea.vmem %s4, %s665
      $region56: #{self_attention_pallas.3} parent=51 // pred_fallthru
        _
    $region52: #{self_attention_pallas.3} parent=5 // pred_fallthru
      _
  $region6: #{self_attention_pallas.3} parent=0 // loop_footer
    %s14 = sadd.s32 1, %s10
  $region7: #{self_attention_pallas.3} parent=0 // loop_footer_branch
    %9 = sbr.rel target = $region3
  $region8: #{self_attention_pallas.3} parent=0 // loop_exit
    _

// kernel: self_attention_pallas.4
$region0: #{self_attention_pallas.4}
  #allocation0 [shape = 'u32[]', space=smem, size = 0x4, offset = 0x4, fixed_abs, tag = 'smem constant byte address 0x4 - core index']
  #allocation1 [shape = 'u32[144,128]{1,0:T(1,128)}', space=vmem, size = 0x12000, scoped, tag = 'internal scratch']
  %s0 = inlined_call_operand.vmem [shape: f32[2,64,128], index: 0, kind: input, shape index: {}]
  %s1 = inlined_call_operand.vmem [shape: f32[2,2,128], index: 1, kind: input, shape index: {}]
  %s2 = inlined_call_operand.vmem [shape: bf16[128,128], index: 2, kind: input, shape index: {}]
  %s3 = inlined_call_operand.vmem [shape: bf16[128,128], index: 3, kind: input, shape index: {}]
  %s4 = inlined_call_operand.vmem [shape: bf16[128,128], index: 4, kind: input, shape index: {}]
  %s5 = inlined_call_operand.vmem [shape: f32[1,128], index: 5, kind: input, shape index: {}]
  %s6 = inlined_call_operand.vmem [shape: f32[1,128], index: 6, kind: input, shape index: {}]
  %s7 = inlined_call_operand.vmem [shape: f32[1,128], index: 7, kind: input, shape index: {}]
  %s8 = inlined_call_operand.vmem [shape: bf16[2,64,128], index: 8, kind: output, shape index: {0}]
  %s9 = inlined_call_operand.vmem [shape: bf16[2,64,128], index: 9, kind: output, shape index: {1}]
  %s10 = inlined_call_operand.vmem [shape: bf16[2,64,128], index: 10, kind: output, shape index: {2}]
  %11 = xla_tuple %s8, %s9, %s10
  %s12 = sld [smem:[#allocation0]]
  $region81: #{self_attention_pallas.4} parent=0
    _
  %s14 = ssub.s32 1, %s12
  %s15 = scalar_select 0, %s14, %s12
  loop: start=0, step=1, limit=4
  $region2: #{self_attention_pallas.4} parent=0 // loop_pre_header
    _
  $region3: #{self_attention_pallas.4} parent=0 // loop_header
    %s17 = sphi 0, %s21
    %p18 = scmp.ge.s32.totalorder %s17, 4
    %s24 = sphi 0, %s36
    %s25 = sphi 0, %s32
    %s26 = sphi 0, %s24
    %s27 = sphi 0, %s25
    %s28 = sphi 0, %s26
    %s29 = sphi 0, %s27
    %s41 = sphi 0, %s43
    %s44 = sphi 0, %s41
    %s45 = sphi 0, %s44
    %s61 = sphi 0, %s45
    %s67 = sphi 0, %s69
    %s70 = sphi 0, %s67
    %s71 = sphi 0, %s70
    %s87 = sphi 0, %s71
    %s91 = sphi 0, %s91
    %s93 = sphi 0, %s91
    %s94 = sphi 0, %s93
    %s108 = sphi 0, %s94
    %s112 = sphi 0, %s112
    %s114 = sphi 0, %s112
    %s115 = sphi 0, %s114
    %s129 = sphi 0, %s115
    %s133 = sphi 0, %s133
    %s135 = sphi 0, %s133
    %s136 = sphi 0, %s135
    %s150 = sphi 0, %s136
    %s154 = sphi 0, %s154
    %s156 = sphi 0, %s154
    %s157 = sphi 0, %s156
    %s171 = sphi 0, %s157
    %s175 = sphi 0, %s175
    %s177 = sphi 0, %s175
    %s178 = sphi 0, %s177
    %s192 = sphi 0, %s178
    %s196 = sphi 0, %s196
    %s198 = sphi 0, %s196
    %s199 = sphi 0, %s198
    %s213 = sphi 0, %s199
    %s221 = sphi 0, %s223
    %s224 = sphi 0, %s221
    %s225 = sphi 0, %s224
    %s241 = sphi 0, %s225
    %s249 = sphi 0, %s251
    %s252 = sphi 0, %s249
    %s253 = sphi 0, %s252
    %s269 = sphi 0, %s253
    %s277 = sphi 0, %s279
    %s280 = sphi 0, %s277
    %s281 = sphi 0, %s280
    %s297 = sphi 0, %s281
  $region4: #{self_attention_pallas.4} parent=0 // loop_header_branch
    %20 = sbr.rel (%p18) target = $region8
  $region5: #{self_attention_pallas.4} parent=0 // loop_body
    %s22 = ssub.s32 %s17, 1
    %s23 = ssub.s32 %s17, 2
    %s30 = sadd.s32 1, %s25
    %p31 = scmp.ge.s32.totalorder %s30, 1
    %s32 = scalar_select %p31, 0, %s30
    %s33 = sadd.s32 1, %s24
    %s34 = scalar_select %p31, %s33, %s24
    %p35 = scmp.ge.s32.totalorder %s34, 2
    %s36 = scalar_select %p35, 0, %s34
    %s37 = ssub.s32 %s24, %s36
    %s38 = ssub.s32 %s25, %s32
    %s39 = sor.u32 %s37, %s38
    %p40 = scmp.eq.s32.totalorder %s39, 0
    %s42 = sadd.s32 %s41, 1
    %s43 = scalar_select %p40, %s41, %s42
    %p46 = pneg %p40
    %p47 = scmp.eq.s32.totalorder %s17, 1
    %p48 = por %p46, %p47
    %p49 = scmp.ne.s32.totalorder %s41, %s44
    %p50 = scmp.eq.s32.totalorder %s17, 0
    %p51 = por %p49, %p50
    %p52 = scmp.ne.s32.totalorder %s41, %s44
    %p53 = scmp.eq.s32.totalorder %s22, 1
    %p54 = por %p52, %p53
    %p55 = scmp.ne.s32.totalorder %s44, %s45
    %p56 = scmp.eq.s32.totalorder %s22, 0
    %p57 = por %p55, %p56
    %p58 = scmp.ne.s32.totalorder %s44, %s45
    %p59 = scmp.eq.s32.totalorder %s23, 1
    %p60 = por %p58, %p59
    %p62 = scmp.ne.s32.totalorder %s45, %s61
    %p63 = scmp.eq.s32.totalorder %s23, 0
    %p64 = por %p62, %p63
    %s65 = ssub.s32 %s24, %s36
    %p66 = scmp.eq.s32.totalorder %s65, 0
    %s68 = sadd.s32 %s67, 1
    %s69 = scalar_select %p66, %s67, %s68
    %p72 = pneg %p66
    %p73 = scmp.eq.s32.totalorder %s17, 1
    %p74 = por %p72, %p73
    %p75 = scmp.ne.s32.totalorder %s67, %s70
    %p76 = scmp.eq.s32.totalorder %s17, 0
    %p77 = por %p75, %p76
    %p78 = scmp.ne.s32.totalorder %s67, %s70
    %p79 = scmp.eq.s32.totalorder %s22, 1
    %p80 = por %p78, %p79
    %p81 = scmp.ne.s32.totalorder %s70, %s71
    %p82 = scmp.eq.s32.totalorder %s22, 0
    %p83 = por %p81, %p82
    %p84 = scmp.ne.s32.totalorder %s70, %s71
    %p85 = scmp.eq.s32.totalorder %s23, 1
    %p86 = por %p84, %p85
    %p88 = scmp.ne.s32.totalorder %s71, %s87
    %p89 = scmp.eq.s32.totalorder %s23, 0
    %p90 = por %p88, %p89
    %s92 = sadd.s32 %s91, 1
    %p95 = scmp.eq.s32.totalorder %s17, 1
    %p96 = scmp.ne.s32.totalorder %s91, %s93
    %p97 = scmp.eq.s32.totalorder %s17, 0
    %p98 = por %p96, %p97
    %p99 = scmp.ne.s32.totalorder %s91, %s93
    %p100 = scmp.eq.s32.totalorder %s22, 1
    %p101 = por %p99, %p100
    %p102 = scmp.ne.s32.totalorder %s93, %s94
    %p103 = scmp.eq.s32.totalorder %s22, 0
    %p104 = por %p102, %p103
    %p105 = scmp.ne.s32.totalorder %s93, %s94
    %p106 = scmp.eq.s32.totalorder %s23, 1
    %p107 = por %p105, %p106
    %p109 = scmp.ne.s32.totalorder %s94, %s108
    %p110 = scmp.eq.s32.totalorder %s23, 0
    %p111 = por %p109, %p110
    %s113 = sadd.s32 %s112, 1
    %p116 = scmp.eq.s32.totalorder %s17, 1
    %p117 = scmp.ne.s32.totalorder %s112, %s114
    %p118 = scmp.eq.s32.totalorder %s17, 0
    %p119 = por %p117, %p118
    %p120 = scmp.ne.s32.totalorder %s112, %s114
    %p121 = scmp.eq.s32.totalorder %s22, 1
    %p122 = por %p120, %p121
    %p123 = scmp.ne.s32.totalorder %s114, %s115
    %p124 = scmp.eq.s32.totalorder %s22, 0
    %p125 = por %p123, %p124
    %p126 = scmp.ne.s32.totalorder %s114, %s115
    %p127 = scmp.eq.s32.totalorder %s23, 1
    %p128 = por %p126, %p127
    %p130 = scmp.ne.s32.totalorder %s115, %s129
    %p131 = scmp.eq.s32.totalorder %s23, 0
    %p132 = por %p130, %p131
    %s134 = sadd.s32 %s133, 1
    %p137 = scmp.eq.s32.totalorder %s17, 1
    %p138 = scmp.ne.s32.totalorder %s133, %s135
    %p139 = scmp.eq.s32.totalorder %s17, 0
    %p140 = por %p138, %p139
    %p141 = scmp.ne.s32.totalorder %s133, %s135
    %p142 = scmp.eq.s32.totalorder %s22, 1
    %p143 = por %p141, %p142
    %p144 = scmp.ne.s32.totalorder %s135, %s136
    %p145 = scmp.eq.s32.totalorder %s22, 0
    %p146 = por %p144, %p145
    %p147 = scmp.ne.s32.totalorder %s135, %s136
    %p148 = scmp.eq.s32.totalorder %s23, 1
    %p149 = por %p147, %p148
    %p151 = scmp.ne.s32.totalorder %s136, %s150
    %p152 = scmp.eq.s32.totalorder %s23, 0
    %p153 = por %p151, %p152
    %s155 = sadd.s32 %s154, 1
    %p158 = scmp.eq.s32.totalorder %s17, 1
    %p159 = scmp.ne.s32.totalorder %s154, %s156
    %p160 = scmp.eq.s32.totalorder %s17, 0
    %p161 = por %p159, %p160
    %p162 = scmp.ne.s32.totalorder %s154, %s156
    %p163 = scmp.eq.s32.totalorder %s22, 1
    %p164 = por %p162, %p163
    %p165 = scmp.ne.s32.totalorder %s156, %s157
    %p166 = scmp.eq.s32.totalorder %s22, 0
    %p167 = por %p165, %p166
    %p168 = scmp.ne.s32.totalorder %s156, %s157
    %p169 = scmp.eq.s32.totalorder %s23, 1
    %p170 = por %p168, %p169
    %p172 = scmp.ne.s32.totalorder %s157, %s171
    %p173 = scmp.eq.s32.totalorder %s23, 0
    %p174 = por %p172, %p173
    %s176 = sadd.s32 %s175, 1
    %p179 = scmp.eq.s32.totalorder %s17, 1
    %p180 = scmp.ne.s32.totalorder %s175, %s177
    %p181 = scmp.eq.s32.totalorder %s17, 0
    %p182 = por %p180, %p181
    %p183 = scmp.ne.s32.totalorder %s175, %s177
    %p184 = scmp.eq.s32.totalorder %s22, 1
    %p185 = por %p183, %p184
    %p186 = scmp.ne.s32.totalorder %s177, %s178
    %p187 = scmp.eq.s32.totalorder %s22, 0
    %p188 = por %p186, %p187
    %p189 = scmp.ne.s32.totalorder %s177, %s178
    %p190 = scmp.eq.s32.totalorder %s23, 1
    %p191 = por %p189, %p190
    %p193 = scmp.ne.s32.totalorder %s178, %s192
    %p194 = scmp.eq.s32.totalorder %s23, 0
    %p195 = por %p193, %p194
    %s197 = sadd.s32 %s196, 1
    %p200 = scmp.eq.s32.totalorder %s17, 1
    %p201 = scmp.ne.s32.totalorder %s196, %s198
    %p202 = scmp.eq.s32.totalorder %s17, 0
    %p203 = por %p201, %p202
    %p204 = scmp.ne.s32.totalorder %s196, %s198
    %p205 = scmp.eq.s32.totalorder %s22, 1
    %p206 = por %p204, %p205
    %p207 = scmp.ne.s32.totalorder %s198, %s199
    %p208 = scmp.eq.s32.totalorder %s22, 0
    %p209 = por %p207, %p208
    %p210 = scmp.ne.s32.totalorder %s198, %s199
    %p211 = scmp.eq.s32.totalorder %s23, 1
    %p212 = por %p210, %p211
    %p214 = scmp.ne.s32.totalorder %s199, %s213
    %p215 = scmp.eq.s32.totalorder %s23, 0
    %p216 = por %p214, %p215
    %s217 = ssub.s32 %s24, %s36
    %s218 = ssub.s32 %s25, %s32
    %s219 = sor.u32 %s217, %s218
    %p220 = scmp.eq.s32.totalorder %s219, 0
    %s222 = sadd.s32 %s221, 1
    %s223 = scalar_select %p220, %s221, %s222
    %p226 = pneg %p220
    %p227 = scmp.eq.s32.totalorder %s17, 1
    %p228 = por %p226, %p227
    %p229 = scmp.ne.s32.totalorder %s221, %s224
    %p230 = scmp.eq.s32.totalorder %s17, 0
    %p231 = por %p229, %p230
    %p232 = scmp.ne.s32.totalorder %s221, %s224
    %p233 = scmp.eq.s32.totalorder %s22, 1
    %p234 = por %p232, %p233
    %p235 = scmp.ne.s32.totalorder %s224, %s225
    %p236 = scmp.eq.s32.totalorder %s22, 0
    %p237 = por %p235, %p236
    %p238 = scmp.ne.s32.totalorder %s224, %s225
    %p239 = scmp.eq.s32.totalorder %s23, 1
    %p240 = por %p238, %p239
    %p242 = scmp.ne.s32.totalorder %s225, %s241
    %p243 = scmp.eq.s32.totalorder %s23, 0
    %p244 = por %p242, %p243
    %s245 = ssub.s32 %s24, %s36
    %s246 = ssub.s32 %s25, %s32
    %s247 = sor.u32 %s245, %s246
    %p248 = scmp.eq.s32.totalorder %s247, 0
    %s250 = sadd.s32 %s249, 1
    %s251 = scalar_select %p248, %s249, %s250
    %p254 = pneg %p248
    %p255 = scmp.eq.s32.totalorder %s17, 1
    %p256 = por %p254, %p255
    %p257 = scmp.ne.s32.totalorder %s249, %s252
    %p258 = scmp.eq.s32.totalorder %s17, 0
    %p259 = por %p257, %p258
    %p260 = scmp.ne.s32.totalorder %s249, %s252
    %p261 = scmp.eq.s32.totalorder %s22, 1
    %p262 = por %p260, %p261
    %p263 = scmp.ne.s32.totalorder %s252, %s253
    %p264 = scmp.eq.s32.totalorder %s22, 0
    %p265 = por %p263, %p264
    %p266 = scmp.ne.s32.totalorder %s252, %s253
    %p267 = scmp.eq.s32.totalorder %s23, 1
    %p268 = por %p266, %p267
    %p270 = scmp.ne.s32.totalorder %s253, %s269
    %p271 = scmp.eq.s32.totalorder %s23, 0
    %p272 = por %p270, %p271
    %s273 = ssub.s32 %s24, %s36
    %s274 = ssub.s32 %s25, %s32
    %s275 = sor.u32 %s273, %s274
    %p276 = scmp.eq.s32.totalorder %s275, 0
    %s278 = sadd.s32 %s277, 1
    %s279 = scalar_select %p276, %s277, %s278
    %p282 = pneg %p276
    %p283 = scmp.eq.s32.totalorder %s17, 1
    %p284 = por %p282, %p283
    %p285 = scmp.ne.s32.totalorder %s277, %s280
    %p286 = scmp.eq.s32.totalorder %s17, 0
    %p287 = por %p285, %p286
    %p288 = scmp.ne.s32.totalorder %s277, %s280
    %p289 = scmp.eq.s32.totalorder %s22, 1
    %p290 = por %p288, %p289
    %p291 = scmp.ne.s32.totalorder %s280, %s281
    %p292 = scmp.eq.s32.totalorder %s22, 0
    %p293 = por %p291, %p292
    %p294 = scmp.ne.s32.totalorder %s280, %s281
    %p295 = scmp.eq.s32.totalorder %s23, 1
    %p296 = por %p294, %p295
    %p298 = scmp.ne.s32.totalorder %s281, %s297
    %p299 = scmp.eq.s32.totalorder %s23, 0
    %p300 = por %p298, %p299
    %p301 = scmp.le.s32.totalorder 1, %s17
    %p302 = scmp.lt.s32.totalorder %s17, 3
    %p303 = pnand %p301, %p302
    %p304 = pneg %p303
    // Predicated region
    $region9: #{self_attention_pallas.4} parent=5 // pred_check
      _
    $region10: #{self_attention_pallas.4} parent=5 // pred_check_branch
      %306 = sbr.rel (%p303) target = $region12
    $region11: #{self_attention_pallas.4} parent=5 // pred_region
      %s307 = ssub.s32 %s17, 1
      // Predicated region
      $region13: #{self_attention_pallas.4} parent=11 // pred_check
        %p308 = pneg %p104
      $region14: #{self_attention_pallas.4} parent=11 // pred_check_branch
        %310 = sbr.rel (%p308) target = $region16
      $region15: #{self_attention_pallas.4} parent=11 // pred_region
        _
      $region16: #{self_attention_pallas.4} parent=11 // pred_fallthru
        _
      // Predicated region
      $region17: #{self_attention_pallas.4} parent=11 // pred_check
        %p311 = pneg %p125
      $region18: #{self_attention_pallas.4} parent=11 // pred_check_branch
        %313 = sbr.rel (%p311) target = $region20
      $region19: #{self_attention_pallas.4} parent=11 // pred_region
        _
      $region20: #{self_attention_pallas.4} parent=11 // pred_fallthru
        _
      // Predicated region
      $region21: #{self_attention_pallas.4} parent=11 // pred_check
        %p314 = pneg %p146
      $region22: #{self_attention_pallas.4} parent=11 // pred_check_branch
        %316 = sbr.rel (%p314) target = $region24
      $region23: #{self_attention_pallas.4} parent=11 // pred_region
        _
      $region24: #{self_attention_pallas.4} parent=11 // pred_fallthru
        _
      // Predicated region
      $region25: #{self_attention_pallas.4} parent=11 // pred_check
        %p317 = pneg %p167
      $region26: #{self_attention_pallas.4} parent=11 // pred_check_branch
        %319 = sbr.rel (%p317) target = $region28
      $region27: #{self_attention_pallas.4} parent=11 // pred_region
        _
      $region28: #{self_attention_pallas.4} parent=11 // pred_fallthru
        _
      // Predicated region
      $region29: #{self_attention_pallas.4} parent=11 // pred_check
        %p320 = pneg %p188
      $region30: #{self_attention_pallas.4} parent=11 // pred_check_branch
        %322 = sbr.rel (%p320) target = $region32
      $region31: #{self_attention_pallas.4} parent=11 // pred_region
        _
      $region32: #{self_attention_pallas.4} parent=11 // pred_fallthru
        _
      // Predicated region
      $region33: #{self_attention_pallas.4} parent=11 // pred_check
        %p323 = pneg %p209
      $region34: #{self_attention_pallas.4} parent=11 // pred_check_branch
        %325 = sbr.rel (%p323) target = $region36
      $region35: #{self_attention_pallas.4} parent=11 // pred_region
        _
      $region36: #{self_attention_pallas.4} parent=11 // pred_fallthru
        _
    $region12: #{self_attention_pallas.4} parent=5 // pred_fallthru
      _
    %p326 = scmp.lt.s32.totalorder %s17, 2
    // Predicated region
    $region37: #{self_attention_pallas.4} parent=5 // pred_check
      %p327 = pneg %p326
    $region38: #{self_attention_pallas.4} parent=5 // pred_check_branch
      %329 = sbr.rel (%p327) target = $region40
    $region39: #{self_attention_pallas.4} parent=5 // pred_region
      // Predicated region
      $region41: #{self_attention_pallas.4} parent=39 // pred_check
        %p330 = pneg %p51
      $region42: #{self_attention_pallas.4} parent=39 // pred_check_branch
        %332 = sbr.rel (%p330) target = $region44
      $region43: #{self_attention_pallas.4} parent=39 // pred_region
        %s333 = smul.u32 8, %s25
        %p334 = scmp.lt.s32.totalorder %s24, 1
        %s335 = scalar_select %p334, %s24, 1
        %p336 = scmp.lt.s32.totalorder %s333, 7
        %s337 = scalar_select %p336, %s333, 7
        %s338 = smul.addr %s335, 8
        %s339 = sadd.s32 %s337, %s338
        %s340 = smul.addr %s339, 8
        %s341 = scalar_lea.vmem %s0, %s340
        %s342 = smul.u32 8, %s25
      $region44: #{self_attention_pallas.4} parent=39 // pred_fallthru
        _
      // Predicated region
      $region45: #{self_attention_pallas.4} parent=39 // pred_check
        %p343 = pneg %p77
      $region46: #{self_attention_pallas.4} parent=39 // pred_check_branch
        %345 = sbr.rel (%p343) target = $region48
      $region47: #{self_attention_pallas.4} parent=39 // pred_region
        %p346 = scmp.lt.s32.totalorder %s24, 1
        %s347 = scalar_select %p346, %s24, 1
        %s348 = smul.addr %s347, 2
        %s349 = scalar_lea.vmem %s1, %s348
      $region48: #{self_attention_pallas.4} parent=39 // pred_fallthru
        _
    $region40: #{self_attention_pallas.4} parent=5 // pred_fallthru
      _
    %p350 = scmp.le.s32.totalorder 1, %s17
    %p351 = scmp.lt.s32.totalorder %s17, 3
    %p352 = pnand %p350, %p351
    %p353 = pneg %p352
    // Predicated region
    $region49: #{self_attention_pallas.4} parent=5 // pred_check
      _
    $region50: #{self_attention_pallas.4} parent=5 // pred_check_branch
      %355 = sbr.rel (%p352) target = $region52
    $region51: #{self_attention_pallas.4} parent=5 // pred_region
      %s356 = ssub.s32 %s17, 1
      %s357 = smul.u32 8, %s27
      %p358 = scmp.lt.s32.totalorder %s26, 1
      %s359 = scalar_select %p358, %s26, 1
      %p360 = scmp.lt.s32.totalorder %s357, 7
      %s361 = scalar_select %p360, %s357, 7
      %s362 = smul.addr %s359, 8
      %s363 = sadd.s32 %s361, %s362
      %s364 = smul.addr %s363, 8
      %s365 = scalar_lea.vmem %s0, %s364
      %p366 = pneg %p57
      %p367 = pneg %p54
      %p368 = scmp.lt.s32.totalorder %s26, 1
      %s369 = scalar_select %p368, %s26, 1
      %s370 = smul.addr %s369, 2
      %s371 = scalar_lea.vmem %s1, %s370
      %p372 = pneg %p83
      %p373 = pneg %p80
      %p374 = pneg %p104
      %p375 = pneg %p101
      %p376 = pneg %p125
      %p377 = pneg %p122
      %p378 = pneg %p146
      %p379 = pneg %p143
      %p380 = pneg %p167
      %p381 = pneg %p164
      %p382 = pneg %p188
      %p383 = pneg %p185
      %p384 = pneg %p209
      %p385 = pneg %p206
      %p386 = pneg %p237
      %p387 = pneg %p234
      %s388 = smul.u32 8, %s27
      %p389 = scmp.lt.s32.totalorder %s26, 1
      %s390 = scalar_select %p389, %s26, 1
      %p391 = scmp.lt.s32.totalorder %s388, 7
      %s392 = scalar_select %p391, %s388, 7
      %s393 = smul.addr %s390, 8
      %s394 = sadd.s32 %s392, %s393
      %s395 = smul.addr %s394, 4
      %s396 = scalar_lea.vmem %s8, %s395
      %p397 = pneg %p265
      %p398 = pneg %p262
      %s399 = smul.u32 8, %s27
      %p400 = scmp.lt.s32.totalorder %s26, 1
      %s401 = scalar_select %p400, %s26, 1
      %p402 = scmp.lt.s32.totalorder %s399, 7
      %s403 = scalar_select %p402, %s399, 7
      %s404 = smul.addr %s401, 8
      %s405 = sadd.s32 %s403, %s404
      %s406 = smul.addr %s405, 4
      %s407 = scalar_lea.vmem %s9, %s406
      %p408 = pneg %p293
      %p409 = pneg %p290
      %s410 = smul.u32 8, %s27
      %p411 = scmp.lt.s32.totalorder %s26, 1
      %s412 = scalar_select %p411, %s26, 1
      %p413 = scmp.lt.s32.totalorder %s410, 7
      %s414 = scalar_select %p413, %s410, 7
      %s415 = smul.addr %s412, 8
      %s416 = sadd.s32 %s414, %s415
      %s417 = smul.addr %s416, 4
      %s418 = scalar_lea.vmem %s10, %s417
      %s419 = smul.u32 8, %s27
      %p420 = scmp.lt.s32.totalorder %s26, 1
      %s421 = scalar_select %p420, %s26, 1
      %p422 = scmp.lt.s32.totalorder %s419, 7
      %s423 = scalar_select %p422, %s419, 7
      %s424 = smul.addr %s421, 8
      %s425 = sadd.s32 %s423, %s424
      %s426 = smul.addr %s425, 8
      %s427 = scalar_lea.vmem %s0, %s426
      %s428 = smul.u32 8, %s27
      %p429 = scmp.lt.s32.totalorder %s26, 1
      %s430 = scalar_select %p429, %s26, 1
      %s431 = smul.addr %s430, 2
      %s432 = scalar_lea.vmem %s1, %s431
      %s433 = smul.u32 8, %s27
      %p434 = scmp.lt.s32.totalorder %s26, 1
      %s435 = scalar_select %p434, %s26, 1
      %p436 = scmp.lt.s32.totalorder %s433, 7
      %s437 = scalar_select %p436, %s433, 7
      %s438 = smul.addr %s435, 8
      %s439 = sadd.s32 %s437, %s438
      %s440 = smul.addr %s439, 4
      %s441 = scalar_lea.vmem %s8, %s440
      %s442 = smul.u32 8, %s27
      %s443 = smul.u32 8, %s27
      %p444 = scmp.lt.s32.totalorder %s26, 1
      %s445 = scalar_select %p444, %s26, 1
      %p446 = scmp.lt.s32.totalorder %s443, 7
      %s447 = scalar_select %p446, %s443, 7
      %s448 = smul.addr %s445, 8
      %s449 = sadd.s32 %s447, %s448
      %s450 = smul.addr %s449, 4
      %s451 = scalar_lea.vmem %s9, %s450
      %s452 = smul.u32 8, %s27
      %s453 = smul.u32 8, %s27
      %p454 = scmp.lt.s32.totalorder %s26, 1
      %s455 = scalar_select %p454, %s26, 1
      %p456 = scmp.lt.s32.totalorder %s453, 7
      %s457 = scalar_select %p456, %s453, 7
      %s458 = smul.addr %s455, 8
      %s459 = sadd.s32 %s457, %s458
      %s460 = smul.addr %s459, 4
      %s461 = scalar_lea.vmem %s10, %s460
      %s462 = smul.u32 8, %s27
      %v464 = vld [vmem:[%s427] sm:$0xff]
      %v465 = vld [vmem:[%s427 + $0x8] sm:$0xff]
      %v466 = vld [vmem:[%s427 + $0x10] sm:$0xff]
      %v467 = vld [vmem:[%s427 + $0x18] sm:$0xff]
      %v468 = vld [vmem:[%s427 + $0x20] sm:$0xff]
      %v469 = vld [vmem:[%s427 + $0x28] sm:$0xff]
      %v470 = vld [vmem:[%s427 + $0x30] sm:$0xff]
      %v471 = vld [vmem:[%s427 + $0x38] sm:$0xff]
      %v472 = vld [vmem:[%s432] sm:$0x1]
      %v473 = vld [vmem:[%s432 + $0x1] sm:$0x1]
      %v474 = vlaneseq
      %v475 = vshrl.u32 %v474, 7
      %v476 = vsub.s32 0, %v475
      %v477 = vrot.slane %v472, %v476
      %v478 = vmul.f32 %v464, %v477
      %v479 = vmul.f32 %v465, %v477
      %v480 = vmul.f32 %v466, %v477
      %v481 = vmul.f32 %v467, %v477
      %v482 = vmul.f32 %v468, %v477
      %v483 = vmul.f32 %v469, %v477
      %v484 = vmul.f32 %v470, %v477
      %v485 = vmul.f32 %v471, %v477
      %v486 = vlaneseq
      %v487 = vshrl.u32 %v486, 7
      %v488 = vsub.s32 0, %v487
      %v489 = vrot.slane %v473, %v488
      %v490 = vadd.f32 %v478, %v489
      %v491 = vadd.f32 %v479, %v489
      %v492 = vadd.f32 %v480, %v489
      %v493 = vadd.f32 %v481, %v489
      %v494 = vadd.f32 %v482, %v489
      %v495 = vadd.f32 %v483, %v489
      %v496 = vadd.f32 %v484, %v489
      %v497 = vadd.f32 %v485, %v489
      %v498 = vpack.c.bf16 %v491, %v490
      %v499 = vpack.c.bf16 %v493, %v492
      %v500 = vpack.c.bf16 %v495, %v494
      %v501 = vpack.c.bf16 %v497, %v496
      %v502 = vld [vmem:[%s2] sm:$0xf]
      %v503 = vld [vmem:[%s2 + $0x4] sm:$0xf]
      %v504 = vld [vmem:[%s2 + $0x8] sm:$0xf]
      %v505 = vld [vmem:[%s2 + $0xc] sm:$0xf]
      %v506 = vld [vmem:[%s2 + $0x10] sm:$0xf]
      %v507 = vld [vmem:[%s2 + $0x14] sm:$0xf]
      %v508 = vld [vmem:[%s2 + $0x18] sm:$0xf]
      %v509 = vld [vmem:[%s2 + $0x1c] sm:$0xf]
      %v510 = vld [vmem:[%s2 + $0x20] sm:$0xf]
      %v511 = vld [vmem:[%s2 + $0x24] sm:$0xf]
      %v512 = vld [vmem:[%s2 + $0x28] sm:$0xf]
      %v513 = vld [vmem:[%s2 + $0x2c] sm:$0xf]
      %v514 = vld [vmem:[%s2 + $0x30] sm:$0xf]
      %v515 = vld [vmem:[%s2 + $0x34] sm:$0xf]
      %v516 = vld [vmem:[%s2 + $0x38] sm:$0xf]
      %v517 = vld [vmem:[%s2 + $0x3c] sm:$0xf]
      %v518 = vld [vmem:[%s5] sm:$0x1]
      %v520 = vlaneseq
      %v521 = vshrl.u32 %v520, 7
      %v522 = vsub.s32 0, %v521
      %v523 = vrot.slane %v518, %v522
      %v541 = vunpack.c.l.b16 %v502
      %v542 = vunpack.c.l.b16 %v503
      %v543 = vunpack.c.l.b16 %v504
      %v544 = vunpack.c.l.b16 %v505
      %v545 = vunpack.c.l.b16 %v506
      %v546 = vunpack.c.l.b16 %v507
      %v547 = vunpack.c.l.b16 %v508
      %v548 = vunpack.c.l.b16 %v509
      %v549 = vunpack.c.l.b16 %v510
      %v550 = vunpack.c.l.b16 %v511
      %v551 = vunpack.c.l.b16 %v512
      %v552 = vunpack.c.l.b16 %v513
      %v553 = vunpack.c.l.b16 %v514
      %v554 = vunpack.c.l.b16 %v515
      %v555 = vunpack.c.l.b16 %v516
      %v556 = vunpack.c.l.b16 %v517
      %v557 = vpack.c.b16 %v542, %v541
      %v558 = vpack.c.b16 %v544, %v543
      %v559 = vpack.c.b16 %v546, %v545
      %v560 = vpack.c.b16 %v548, %v547
      %v561 = vpack.c.b16 %v550, %v549
      %v562 = vpack.c.b16 %v552, %v551
      %v563 = vpack.c.b16 %v554, %v553
      %v564 = vpack.c.b16 %v556, %v555
      %573 = vmatprep.subr.bf16.mxu0 0
      %574 = vmatpush1.bf16.msra.mxu0 %v557
      %575 = vmatprep.subr.bf16.mxu0 0
      %576 = vmatpush1.bf16.msra.mxu0 %v558
      %577 = vmatprep.subr.bf16.mxu0 0
      %578 = vmatpush1.bf16.msra.mxu0 %v559
      %579 = vmatprep.subr.bf16.mxu0 0
      %580 = vmatpush1.bf16.msra.mxu0 %v560
      %581 = vmatprep.subr.bf16.mxu0 0
      %582 = vmatpush1.bf16.msra.mxu0 %v561
      %583 = vmatprep.subr.bf16.mxu0 0
      %584 = vmatpush1.bf16.msra.mxu0 %v562
      %585 = vmatprep.subr.bf16.mxu0 0
      %586 = vmatpush1.bf16.msra.mxu0 %v563
      %587 = vmatprep.subr.bf16.mxu0 0
      %588 = vmatpush1.bf16.msra.mxu0 %v564
      %589 = vmatprep.subr.bf16.mxu0 0
      %590 = vmatpush1.bf16.msra.mxu0 0
      %591 = vmatprep.subr.bf16.mxu0 0
      %592 = vmatpush1.bf16.msra.mxu0 0
      %593 = vmatprep.subr.bf16.mxu0 0
      %594 = vmatpush1.bf16.msra.mxu0 0
      %595 = vmatprep.subr.bf16.mxu0 0
      %596 = vmatpush1.bf16.msra.mxu0 0
      %597 = vmatprep.subr.bf16.mxu0 0
      %598 = vmatpush1.bf16.msra.mxu0 0
      %599 = vmatprep.subr.bf16.mxu0 0
      %600 = vmatpush1.bf16.msra.mxu0 0
      %601 = vmatprep.subr.bf16.mxu0 0
      %602 = vmatpush1.bf16.msra.mxu0 0
      %603 = vmatprep.subr.bf16.mxu0 0
      %604 = vmatpush1.bf16.msra.mxu0 0
      %605 = vmatprep.mubr.bf16.mxu0 0
      %606 = vmatmul.mubr.bf16.gmra.mrb[0].mxu0 %v498
      %v607 = vpop.f32.mrb[0].mxu0
      %v608 = vadd.f32 %v523, %v607
      %v609 = vpop.f32.mrb[0].mxu0
      %v610 = vpop.f32.mrb[0].mxu0
      %v611 = vadd.f32 %v523, %v610
      %v612 = vpop.f32.mrb[0].mxu0
      %613 = vmatprep.mubr.bf16.mxu0 0
      %614 = vmatmul.mubr.bf16.gmra.mrb[0].mxu0 %v499
      %v615 = vpop.f32.mrb[0].mxu0
      %v616 = vadd.f32 %v523, %v615
      %v617 = vpop.f32.mrb[0].mxu0
      %v618 = vpop.f32.mrb[0].mxu0
      %v619 = vadd.f32 %v523, %v618
      %v620 = vpop.f32.mrb[0].mxu0
      %621 = vmatprep.mubr.bf16.mxu0 0
      %622 = vmatmul.mubr.bf16.gmra.mrb[0].mxu0 %v500
      %v623 = vpop.f32.mrb[0].mxu0
      %v624 = vadd.f32 %v523, %v623
      %v625 = vpop.f32.mrb[0].mxu0
      %v626 = vpop.f32.mrb[0].mxu0
      %v627 = vadd.f32 %v523, %v626
      %v628 = vpop.f32.mrb[0].mxu0
      %629 = vmatprep.mubr.bf16.mxu0 0
      %630 = vmatmul.mubr.bf16.gmra.mrb[0].mxu0 %v501
      %v631 = vpop.f32.mrb[0].mxu0
      %v632 = vadd.f32 %v523, %v631
      %v633 = vpop.f32.mrb[0].mxu0
      %v634 = vpop.f32.mrb[0].mxu0
      %v635 = vadd.f32 %v523, %v634
      %v636 = vpop.f32.mrb[0].mxu0
      %637 = vdwg.mxu0
      %v638 = vld [vmem:[%s3] sm:$0xf]
      %v639 = vld [vmem:[%s3 + $0x4] sm:$0xf]
      %v640 = vld [vmem:[%s3 + $0x8] sm:$0xf]
      %v641 = vld [vmem:[%s3 + $0xc] sm:$0xf]
      %v642 = vld [vmem:[%s3 + $0x10] sm:$0xf]
      %v643 = vld [vmem:[%s3 + $0x14] sm:$0xf]
      %v644 = vld [vmem:[%s3 + $0x18] sm:$0xf]
      %v645 = vld [vmem:[%s3 + $0x1c] sm:$0xf]
      %v646 = vld [vmem:[%s3 + $0x20] sm:$0xf]
      %v647 = vld [vmem:[%s3 + $0x24] sm:$0xf]
      %v648 = vld [vmem:[%s3 + $0x28] sm:$0xf]
      %v649 = vld [vmem:[%s3 + $0x2c] sm:$0xf]
      %v650 = vld [vmem:[%s3 + $0x30] sm:$0xf]
      %v651 = vld [vmem:[%s3 + $0x34] sm:$0xf]
      %v652 = vld [vmem:[%s3 + $0x38] sm:$0xf]
      %v653 = vld [vmem:[%s3 + $0x3c] sm:$0xf]
      %v654 = vld [vmem:[%s6] sm:$0x1]
      %v656 = vlaneseq
      %v657 = vshrl.u32 %v656, 7
      %v658 = vsub.s32 0, %v657
      %v659 = vrot.slane %v654, %v658
      %v677 = vunpack.c.l.b16 %v638
      %v678 = vunpack.c.l.b16 %v639
      %v679 = vunpack.c.l.b16 %v640
      %v680 = vunpack.c.l.b16 %v641
      %v681 = vunpack.c.l.b16 %v642
      %v682 = vunpack.c.l.b16 %v643
      %v683 = vunpack.c.l.b16 %v644
      %v684 = vunpack.c.l.b16 %v645
      %v685 = vunpack.c.l.b16 %v646
      %v686 = vunpack.c.l.b16 %v647
      %v687 = vunpack.c.l.b16 %v648
      %v688 = vunpack.c.l.b16 %v649
      %v689 = vunpack.c.l.b16 %v650
      %v690 = vunpack.c.l.b16 %v651
      %v691 = vunpack.c.l.b16 %v652
      %v692 = vunpack.c.l.b16 %v653
      %v693 = vpack.c.b16 %v678, %v677
      %v694 = vpack.c.b16 %v680, %v679
      %v695 = vpack.c.b16 %v682, %v681
      %v696 = vpack.c.b16 %v684, %v683
      %v697 = vpack.c.b16 %v686, %v685
      %v698 = vpack.c.b16 %v688, %v687
      %v699 = vpack.c.b16 %v690, %v689
      %v700 = vpack.c.b16 %v692, %v691
      %709 = vmatprep.subr.bf16.mxu0 0
      %710 = vmatpush1.bf16.msra.mxu0 %v693
      %711 = vmatprep.subr.bf16.mxu0 0
      %712 = vmatpush1.bf16.msra.mxu0 %v694
      %713 = vmatprep.subr.bf16.mxu0 0
      %714 = vmatpush1.bf16.msra.mxu0 %v695
      %715 = vmatprep.subr.bf16.mxu0 0
      %716 = vmatpush1.bf16.msra.mxu0 %v696
      %717 = vmatprep.subr.bf16.mxu0 0
      %718 = vmatpush1.bf16.msra.mxu0 %v697
      %719 = vmatprep.subr.bf16.mxu0 0
      %720 = vmatpush1.bf16.msra.mxu0 %v698
      %721 = vmatprep.subr.bf16.mxu0 0
      %722 = vmatpush1.bf16.msra.mxu0 %v699
      %723 = vmatprep.subr.bf16.mxu0 0
      %724 = vmatpush1.bf16.msra.mxu0 %v700
      %725 = vmatprep.subr.bf16.mxu0 0
      %726 = vmatpush1.bf16.msra.mxu0 0
      %727 = vmatprep.subr.bf16.mxu0 0
      %728 = vmatpush1.bf16.msra.mxu0 0
      %729 = vmatprep.subr.bf16.mxu0 0
      %730 = vmatpush1.bf16.msra.mxu0 0
      %731 = vmatprep.subr.bf16.mxu0 0
      %732 = vmatpush1.bf16.msra.mxu0 0
      %733 = vmatprep.subr.bf16.mxu0 0
      %734 = vmatpush1.bf16.msra.mxu0 0
      %735 = vmatprep.subr.bf16.mxu0 0
      %736 = vmatpush1.bf16.msra.mxu0 0
      %737 = vmatprep.subr.bf16.mxu0 0
      %738 = vmatpush1.bf16.msra.mxu0 0
      %739 = vmatprep.subr.bf16.mxu0 0
      %740 = vmatpush1.bf16.msra.mxu0 0
      %741 = vmatprep.mubr.bf16.mxu0 0
      %742 = vmatmul.mubr.bf16.gmra.mrb[0].mxu0 %v498
      %v743 = vpop.f32.mrb[0].mxu0
      %v744 = vadd.f32 %v659, %v743
      %v745 = vpop.f32.mrb[0].mxu0
      %v746 = vpop.f32.mrb[0].mxu0
      %v747 = vadd.f32 %v659, %v746
      %v748 = vpop.f32.mrb[0].mxu0
      %749 = vmatprep.mubr.bf16.mxu0 0
      %750 = vmatmul.mubr.bf16.gmra.mrb[0].mxu0 %v499
      %v751 = vpop.f32.mrb[0].mxu0
      %v752 = vadd.f32 %v659, %v751
      %v753 = vpop.f32.mrb[0].mxu0
      %v754 = vpop.f32.mrb[0].mxu0
      %v755 = vadd.f32 %v659, %v754
      %v756 = vpop.f32.mrb[0].mxu0
      %757 = vmatprep.mubr.bf16.mxu0 0
      %758 = vmatmul.mubr.bf16.gmra.mrb[0].mxu0 %v500
      %v759 = vpop.f32.mrb[0].mxu0
      %v760 = vadd.f32 %v659, %v759
      %v761 = vpop.f32.mrb[0].mxu0
      %v762 = vpop.f32.mrb[0].mxu0
      %v763 = vadd.f32 %v659, %v762
      %v764 = vpop.f32.mrb[0].mxu0
      %765 = vmatprep.mubr.bf16.mxu0 0
      %766 = vmatmul.mubr.bf16.gmra.mrb[0].mxu0 %v501
      %v767 = vpop.f32.mrb[0].mxu0
      %v768 = vadd.f32 %v659, %v767
      %v769 = vpop.f32.mrb[0].mxu0
      %v770 = vpop.f32.mrb[0].mxu0
      %v771 = vadd.f32 %v659, %v770
      %v772 = vpop.f32.mrb[0].mxu0
      %773 = vdwg.mxu0
      %v774 = vld [vmem:[%s4] sm:$0xf]
      %v775 = vld [vmem:[%s4 + $0x4] sm:$0xf]
      %v776 = vld [vmem:[%s4 + $0x8] sm:$0xf]
      %v777 = vld [vmem:[%s4 + $0xc] sm:$0xf]
      %v778 = vld [vmem:[%s4 + $0x10] sm:$0xf]
      %v779 = vld [vmem:[%s4 + $0x14] sm:$0xf]
      %v780 = vld [vmem:[%s4 + $0x18] sm:$0xf]
      %v781 = vld [vmem:[%s4 + $0x1c] sm:$0xf]
      %v782 = vld [vmem:[%s4 + $0x20] sm:$0xf]
      %v783 = vld [vmem:[%s4 + $0x24] sm:$0xf]
      %v784 = vld [vmem:[%s4 + $0x28] sm:$0xf]
      %v785 = vld [vmem:[%s4 + $0x2c] sm:$0xf]
      %v786 = vld [vmem:[%s4 + $0x30] sm:$0xf]
      %v787 = vld [vmem:[%s4 + $0x34] sm:$0xf]
      %v788 = vld [vmem:[%s4 + $0x38] sm:$0xf]
      %v789 = vld [vmem:[%s4 + $0x3c] sm:$0xf]
      %v790 = vld [vmem:[%s7] sm:$0x1]
      %v792 = vlaneseq
      %v793 = vshrl.u32 %v792, 7
      %v794 = vsub.s32 0, %v793
      %v795 = vrot.slane %v790, %v794
      %v813 = vunpack.c.l.b16 %v774
      %v814 = vunpack.c.l.b16 %v775
      %v815 = vunpack.c.l.b16 %v776
      %v816 = vunpack.c.l.b16 %v777
      %v817 = vunpack.c.l.b16 %v778
      %v818 = vunpack.c.l.b16 %v779
      %v819 = vunpack.c.l.b16 %v780
      %v820 = vunpack.c.l.b16 %v781
      %v821 = vunpack.c.l.b16 %v782
      %v822 = vunpack.c.l.b16 %v783
      %v823 = vunpack.c.l.b16 %v784
      %v824 = vunpack.c.l.b16 %v785
      %v825 = vunpack.c.l.b16 %v786
      %v826 = vunpack.c.l.b16 %v787
      %v827 = vunpack.c.l.b16 %v788
      %v828 = vunpack.c.l.b16 %v789
      %v829 = vpack.c.b16 %v814, %v813
      %v830 = vpack.c.b16 %v816, %v815
      %v831 = vpack.c.b16 %v818, %v817
      %v832 = vpack.c.b16 %v820, %v819
      %v833 = vpack.c.b16 %v822, %v821
      %v834 = vpack.c.b16 %v824, %v823
      %v835 = vpack.c.b16 %v826, %v825
      %v836 = vpack.c.b16 %v828, %v827
      %845 = vmatprep.subr.bf16.mxu0 0
      %846 = vmatpush1.bf16.msra.mxu0 %v829
      %847 = vmatprep.subr.bf16.mxu0 0
      %848 = vmatpush1.bf16.msra.mxu0 %v830
      %849 = vmatprep.subr.bf16.mxu0 0
      %850 = vmatpush1.bf16.msra.mxu0 %v831
      %851 = vmatprep.subr.bf16.mxu0 0
      %852 = vmatpush1.bf16.msra.mxu0 %v832
      %853 = vmatprep.subr.bf16.mxu0 0
      %854 = vmatpush1.bf16.msra.mxu0 %v833
      %855 = vmatprep.subr.bf16.mxu0 0
      %856 = vmatpush1.bf16.msra.mxu0 %v834
      %857 = vmatprep.subr.bf16.mxu0 0
      %858 = vmatpush1.bf16.msra.mxu0 %v835
      %859 = vmatprep.subr.bf16.mxu0 0
      %860 = vmatpush1.bf16.msra.mxu0 %v836
      %861 = vmatprep.subr.bf16.mxu0 0
      %862 = vmatpush1.bf16.msra.mxu0 0
      %863 = vmatprep.subr.bf16.mxu0 0
      %864 = vmatpush1.bf16.msra.mxu0 0
      %865 = vmatprep.subr.bf16.mxu0 0
      %866 = vmatpush1.bf16.msra.mxu0 0
      %867 = vmatprep.subr.bf16.mxu0 0
      %868 = vmatpush1.bf16.msra.mxu0 0
      %869 = vmatprep.subr.bf16.mxu0 0
      %870 = vmatpush1.bf16.msra.mxu0 0
      %871 = vmatprep.subr.bf16.mxu0 0
      %872 = vmatpush1.bf16.msra.mxu0 0
      %873 = vmatprep.subr.bf16.mxu0 0
      %874 = vmatpush1.bf16.msra.mxu0 0
      %875 = vmatprep.subr.bf16.mxu0 0
      %876 = vmatpush1.bf16.msra.mxu0 0
      %877 = vmatprep.mubr.bf16.mxu0 0
      %878 = vmatmul.mubr.bf16.gmra.mrb[0].mxu0 %v498
      %v879 = vpop.f32.mrb[0].mxu0
      %v880 = vadd.f32 %v795, %v879
      %v881 = vpop.f32.mrb[0].mxu0
      %v882 = vpop.f32.mrb[0].mxu0
      %v883 = vadd.f32 %v795, %v882
      %v884 = vpop.f32.mrb[0].mxu0
      %885 = vmatprep.mubr.bf16.mxu0 0
      %886 = vmatmul.mubr.bf16.gmra.mrb[0].mxu0 %v499
      %v887 = vpop.f32.mrb[0].mxu0
      %v888 = vadd.f32 %v795, %v887
      %v889 = vpop.f32.mrb[0].mxu0
      %v890 = vpop.f32.mrb[0].mxu0
      %v891 = vadd.f32 %v795, %v890
      %v892 = vpop.f32.mrb[0].mxu0
      %893 = vmatprep.mubr.bf16.mxu0 0
      %894 = vmatmul.mubr.bf16.gmra.mrb[0].mxu0 %v500
      %v895 = vpop.f32.mrb[0].mxu0
      %v896 = vadd.f32 %v795, %v895
      %v897 = vpop.f32.mrb[0].mxu0
      %v898 = vpop.f32.mrb[0].mxu0
      %v899 = vadd.f32 %v795, %v898
      %v900 = vpop.f32.mrb[0].mxu0
      %901 = vmatprep.mubr.bf16.mxu0 0
      %902 = vmatmul.mubr.bf16.gmra.mrb[0].mxu0 %v501
      %v903 = vpop.f32.mrb[0].mxu0
      %v904 = vadd.f32 %v795, %v903
      %v905 = vpop.f32.mrb[0].mxu0
      %v906 = vpop.f32.mrb[0].mxu0
      %v907 = vadd.f32 %v795, %v906
      %v908 = vpop.f32.mrb[0].mxu0
      %909 = vdwg.mxu0
      %v910 = vpack.c.bf16 %v611, %v608
      %v911 = vpack.c.bf16 %v619, %v616
      %v912 = vpack.c.bf16 %v627, %v624
      %v913 = vpack.c.bf16 %v635, %v632
      %v918 = vunpack.c.l.b16 %v910
      %v919 = vunpack.c.h.b16 %v910
      %v920 = vunpack.c.l.b16 %v911
      %v921 = vunpack.c.h.b16 %v911
      %v922 = vunpack.c.l.b16 %v912
      %v923 = vunpack.c.h.b16 %v912
      %v924 = vunpack.c.l.b16 %v913
      %v925 = vunpack.c.h.b16 %v913
      %v926 = vpack.c.b16 %v918, %v918
      %v927 = vpack.c.b16 %v919, %v919
      %v928 = vpack.c.b16 %v920, %v920
      %v929 = vpack.c.b16 %v921, %v921
      %v930 = vpack.c.b16 %v922, %v922
      %v931 = vpack.c.b16 %v923, %v923
      %v932 = vpack.c.b16 %v924, %v924
      %v933 = vpack.c.b16 %v925, %v925
      %942 = vst [vmem:[%s441] sm:$0xf] %v926
      %943 = vst [vmem:[%s441 + $0x4] sm:$0xf] %v927
      %944 = vst [vmem:[%s441 + $0x8] sm:$0xf] %v928
      %945 = vst [vmem:[%s441 + $0xc] sm:$0xf] %v929
      %946 = vst [vmem:[%s441 + $0x10] sm:$0xf] %v930
      %947 = vst [vmem:[%s441 + $0x14] sm:$0xf] %v931
      %948 = vst [vmem:[%s441 + $0x18] sm:$0xf] %v932
      %949 = vst [vmem:[%s441 + $0x1c] sm:$0xf] %v933
      %v950 = vpack.c.bf16 %v747, %v744
      %v951 = vpack.c.bf16 %v755, %v752
      %v952 = vpack.c.bf16 %v763, %v760
      %v953 = vpack.c.bf16 %v771, %v768
      %v958 = vunpack.c.l.b16 %v950
      %v959 = vunpack.c.h.b16 %v950
      %v960 = vunpack.c.l.b16 %v951
      %v961 = vunpack.c.h.b16 %v951
      %v962 = vunpack.c.l.b16 %v952
      %v963 = vunpack.c.h.b16 %v952
      %v964 = vunpack.c.l.b16 %v953
      %v965 = vunpack.c.h.b16 %v953
      %v966 = vpack.c.b16 %v958, %v958
      %v967 = vpack.c.b16 %v959, %v959
      %v968 = vpack.c.b16 %v960, %v960
      %v969 = vpack.c.b16 %v961, %v961
      %v970 = vpack.c.b16 %v962, %v962
      %v971 = vpack.c.b16 %v963, %v963
      %v972 = vpack.c.b16 %v964, %v964
      %v973 = vpack.c.b16 %v965, %v965
      %982 = vst [vmem:[%s451] sm:$0xf] %v966
      %983 = vst [vmem:[%s451 + $0x4] sm:$0xf] %v967
      %984 = vst [vmem:[%s451 + $0x8] sm:$0xf] %v968
      %985 = vst [vmem:[%s451 + $0xc] sm:$0xf] %v969
      %986 = vst [vmem:[%s451 + $0x10] sm:$0xf] %v970
      %987 = vst [vmem:[%s451 + $0x14] sm:$0xf] %v971
      %988 = vst [vmem:[%s451 + $0x18] sm:$0xf] %v972
      %989 = vst [vmem:[%s451 + $0x1c] sm:$0xf] %v973
      %v990 = vpack.c.bf16 %v883, %v880
      %v991 = vpack.c.bf16 %v891, %v888
      %v992 = vpack.c.bf16 %v899, %v896
      %v993 = vpack.c.bf16 %v907, %v904
      %v998 = vunpack.c.l.b16 %v990
      %v999 = vunpack.c.h.b16 %v990
      %v1000 = vunpack.c.l.b16 %v991
      %v1001 = vunpack.c.h.b16 %v991
      %v1002 = vunpack.c.l.b16 %v992
      %v1003 = vunpack.c.h.b16 %v992
      %v1004 = vunpack.c.l.b16 %v993
      %v1005 = vunpack.c.h.b16 %v993
      %v1006 = vpack.c.b16 %v998, %v998
      %v1007 = vpack.c.b16 %v999, %v999
      %v1008 = vpack.c.b16 %v1000, %v1000
      %v1009 = vpack.c.b16 %v1001, %v1001
      %v1010 = vpack.c.b16 %v1002, %v1002
      %v1011 = vpack.c.b16 %v1003, %v1003
      %v1012 = vpack.c.b16 %v1004, %v1004
      %v1013 = vpack.c.b16 %v1005, %v1005
      %1022 = vst [vmem:[%s461] sm:$0xf] %v1006
      %1023 = vst [vmem:[%s461 + $0x4] sm:$0xf] %v1007
      %1024 = vst [vmem:[%s461 + $0x8] sm:$0xf] %v1008
      %1025 = vst [vmem:[%s461 + $0xc] sm:$0xf] %v1009
      %1026 = vst [vmem:[%s461 + $0x10] sm:$0xf] %v1010
      %1027 = vst [vmem:[%s461 + $0x14] sm:$0xf] %v1011
      %1028 = vst [vmem:[%s461 + $0x18] sm:$0xf] %v1012
      %1029 = vst [vmem:[%s461 + $0x1c] sm:$0xf] %v1013
      %s1030 = smul.u32 8, %s27
      %p1031 = scmp.lt.s32.totalorder %s26, 1
      %s1032 = scalar_select %p1031, %s26, 1
      %p1033 = scmp.lt.s32.totalorder %s1030, 7
      %s1034 = scalar_select %p1033, %s1030, 7
      %s1035 = smul.addr %s1032, 8
      %s1036 = sadd.s32 %s1034, %s1035
      %s1037 = smul.addr %s1036, 4
      %s1038 = scalar_lea.vmem %s8, %s1037
      %s1039 = smul.u32 8, %s27
      %p1040 = scmp.lt.s32.totalorder %s26, 1
      %s1041 = scalar_select %p1040, %s26, 1
      %p1042 = scmp.lt.s32.totalorder %s1039, 7
      %s1043 = scalar_select %p1042, %s1039, 7
      %s1044 = smul.addr %s1041, 8
      %s1045 = sadd.s32 %s1043, %s1044
      %s1046 = smul.addr %s1045, 4
      %s1047 = scalar_lea.vmem %s9, %s1046
      %s1048 = smul.u32 8, %s27
      %p1049 = scmp.lt.s32.totalorder %s26, 1
      %s1050 = scalar_select %p1049, %s26, 1
      %p1051 = scmp.lt.s32.totalorder %s1048, 7
      %s1052 = scalar_select %p1051, %s1048, 7
      %s1053 = smul.addr %s1050, 8
      %s1054 = sadd.s32 %s1052, %s1053
      %s1055 = smul.addr %s1054, 4
      %s1056 = scalar_lea.vmem %s10, %s1055
      // Predicated region
      $region53: #{self_attention_pallas.4} parent=51 // pred_check
        %p1057 = pneg %p234
      $region54: #{self_attention_pallas.4} parent=51 // pred_check_branch
        %1059 = sbr.rel (%p1057) target = $region56
      $region55: #{self_attention_pallas.4} parent=51 // pred_region
        %s1060 = smul.u32 8, %s27
      $region56: #{self_attention_pallas.4} parent=51 // pred_fallthru
        _
      // Predicated region
      $region57: #{self_attention_pallas.4} parent=51 // pred_check
        %p1061 = pneg %p262
      $region58: #{self_attention_pallas.4} parent=51 // pred_check_branch
        %1063 = sbr.rel (%p1061) target = $region60
      $region59: #{self_attention_pallas.4} parent=51 // pred_region
        %s1064 = smul.u32 8, %s27
      $region60: #{self_attention_pallas.4} parent=51 // pred_fallthru
        _
      // Predicated region
      $region61: #{self_attention_pallas.4} parent=51 // pred_check
        %p1065 = pneg %p290
      $region62: #{self_attention_pallas.4} parent=51 // pred_check_branch
        %1067 = sbr.rel (%p1065) target = $region64
      $region63: #{self_attention_pallas.4} parent=51 // pred_region
        %s1068 = smul.u32 8, %s27
      $region64: #{self_attention_pallas.4} parent=51 // pred_fallthru
        _
    $region52: #{self_attention_pallas.4} parent=5 // pred_fallthru
      _
    %p1069 = scmp.le.s32.totalorder 2, %s17
    // Predicated region
    $region65: #{self_attention_pallas.4} parent=5 // pred_check
      %p1070 = pneg %p1069
    $region66: #{self_attention_pallas.4} parent=5 // pred_check_branch
      %1072 = sbr.rel (%p1070) target = $region68
    $region67: #{self_attention_pallas.4} parent=5 // pred_region
      %s1073 = ssub.s32 %s17, 2
      // Predicated region
      $region69: #{self_attention_pallas.4} parent=67 // pred_check
        %p1074 = pneg %p240
      $region70: #{self_attention_pallas.4} parent=67 // pred_check_branch
        %1076 = sbr.rel (%p1074) target = $region72
      $region71: #{self_attention_pallas.4} parent=67 // pred_region
        %s1077 = smul.u32 8, %s29
        %p1078 = scmp.lt.s32.totalorder %s28, 1
        %s1079 = scalar_select %p1078, %s28, 1
        %p1080 = scmp.lt.s32.totalorder %s1077, 7
        %s1081 = scalar_select %p1080, %s1077, 7
        %s1082 = smul.addr %s1079, 8
        %s1083 = sadd.s32 %s1081, %s1082
        %s1084 = smul.addr %s1083, 4
        %s1085 = scalar_lea.vmem %s8, %s1084
      $region72: #{self_attention_pallas.4} parent=67 // pred_fallthru
        _
      // Predicated region
      $region73: #{self_attention_pallas.4} parent=67 // pred_check
        %p1086 = pneg %p268
      $region74: #{self_attention_pallas.4} parent=67 // pred_check_branch
        %1088 = sbr.rel (%p1086) target = $region76
      $region75: #{self_attention_pallas.4} parent=67 // pred_region
        %s1089 = smul.u32 8, %s29
        %p1090 = scmp.lt.s32.totalorder %s28, 1
        %s1091 = scalar_select %p1090, %s28, 1
        %p1092 = scmp.lt.s32.totalorder %s1089, 7
        %s1093 = scalar_select %p1092, %s1089, 7
        %s1094 = smul.addr %s1091, 8
        %s1095 = sadd.s32 %s1093, %s1094
        %s1096 = smul.addr %s1095, 4
        %s1097 = scalar_lea.vmem %s9, %s1096
      $region76: #{self_attention_pallas.4} parent=67 // pred_fallthru
        _
      // Predicated region
      $region77: #{self_attention_pallas.4} parent=67 // pred_check
        %p1098 = pneg %p296
      $region78: #{self_attention_pallas.4} parent=67 // pred_check_branch
        %1100 = sbr.rel (%p1098) target = $region80
      $region79: #{self_attention_pallas.4} parent=67 // pred_region
        %s1101 = smul.u32 8, %s29
        %p1102 = scmp.lt.s32.totalorder %s28, 1
        %s1103 = scalar_select %p1102, %s28, 1
        %p1104 = scmp.lt.s32.totalorder %s1101, 7
        %s1105 = scalar_select %p1104, %s1101, 7
        %s1106 = smul.addr %s1103, 8
        %s1107 = sadd.s32 %s1105, %s1106
        %s1108 = smul.addr %s1107, 4
        %s1109 = scalar_lea.vmem %s10, %s1108
      $region80: #{self_attention_pallas.4} parent=67 // pred_fallthru
        _
    $region68: #{self_attention_pallas.4} parent=5 // pred_fallthru
      _
  $region6: #{self_attention_pallas.4} parent=0 // loop_footer
    %s21 = sadd.s32 1, %s17
  $region7: #{self_attention_pallas.4} parent=0 // loop_footer_branch
    %16 = sbr.rel target = $region3
  $region8: #{self_attention_pallas.4} parent=0 // loop_exit
    _

// kernel: self_attention_pallas.5
$region0: #{self_attention_pallas.5}
  #allocation0 [shape = 'u32[]', space=smem, size = 0x4, offset = 0x4, fixed_abs, tag = 'smem constant byte address 0x4 - core index']
  #allocation1 [shape = 'u32[144,128]{1,0:T(1,128)}', space=vmem, size = 0x12000, scoped, tag = 'internal scratch']
  #allocation2 [shape = 'f32[1,64,1]{2,1,0:T(8,128)}', space=vmem, size = 0x8000, scoped, tag = 'scratch operand']
  #allocation3 [shape = 'f32[1,64,1]{2,1,0:T(8,128)}', space=vmem, size = 0x8000, scoped, tag = 'scratch operand']
  #allocation4 [shape = 'f32[1,64,128]{2,1,0:T(8,128)}', space=vmem, size = 0x8000, scoped, tag = 'scratch operand']
  %s0 = inlined_call_operand.vmem [shape: bf16[2,64,128], index: 0, kind: input, shape index: {}]
  %s1 = inlined_call_operand.vmem [shape: bf16[2,64,128], index: 1, kind: input, shape index: {}]
  %s2 = inlined_call_operand.vmem [shape: bf16[2,64,128], index: 2, kind: input, shape index: {}]
  %s3 = inlined_call_operand.vmem [shape: f32[2,64,128], index: 3, kind: input, shape index: {}]
  %s4 = inlined_call_operand.vmem [shape: bf16[128,128], index: 4, kind: input, shape index: {}]
  %s5 = inlined_call_operand.vmem [shape: f32[1,128], index: 5, kind: input, shape index: {}]
  %s6 = inlined_call_operand.vmem [shape: f32[2,64,128], index: 6, kind: output, shape index: {}]
  %s7 = sld [smem:[#allocation0]]
  $region65: #{self_attention_pallas.5} parent=0
    _
  %s9 = ssub.s32 1, %s7
  %s10 = scalar_select 0, %s9, %s7
  loop: start=0, step=1, limit=4
  $region2: #{self_attention_pallas.5} parent=0 // loop_pre_header
    _
  $region3: #{self_attention_pallas.5} parent=0 // loop_header
    %s12 = sphi 0, %s16
    %p13 = scmp.ge.s32.totalorder %s12, 4
    %s19 = sphi 0, %s38
    %s20 = sphi 0, %s34
    %s21 = sphi 0, %s30
    %s22 = sphi 0, %s19
    %s23 = sphi 0, %s20
    %s24 = sphi 0, %s21
    %s25 = sphi 0, %s22
    %s26 = sphi 0, %s23
    %s27 = sphi 0, %s24
    %s43 = sphi 0, %s45
    %s46 = sphi 0, %s43
    %s47 = sphi 0, %s46
    %s63 = sphi 0, %s47
    %s71 = sphi 0, %s73
    %s74 = sphi 0, %s71
    %s75 = sphi 0, %s74
    %s91 = sphi 0, %s75
    %s99 = sphi 0, %s101
    %s102 = sphi 0, %s99
    %s103 = sphi 0, %s102
    %s119 = sphi 0, %s103
    %s127 = sphi 0, %s129
    %s130 = sphi 0, %s127
    %s131 = sphi 0, %s130
    %s147 = sphi 0, %s131
    %s151 = sphi 0, %s151
    %s153 = sphi 0, %s151
    %s154 = sphi 0, %s153
    %s168 = sphi 0, %s154
    %s172 = sphi 0, %s172
    %s174 = sphi 0, %s172
    %s175 = sphi 0, %s174
    %s189 = sphi 0, %s175
    %s197 = sphi 0, %s199
    %s200 = sphi 0, %s197
    %s201 = sphi 0, %s200
    %s217 = sphi 0, %s201
  $region4: #{self_attention_pallas.5} parent=0 // loop_header_branch
    %15 = sbr.rel (%p13) target = $region8
  $region5: #{self_attention_pallas.5} parent=0 // loop_body
    %s17 = ssub.s32 %s12, 1
    %s18 = ssub.s32 %s12, 2
    %s28 = sadd.s32 1, %s21
    %p29 = scmp.ge.s32.totalorder %s28, 1
    %s30 = scalar_select %p29, 0, %s28
    %s31 = sadd.s32 1, %s20
    %s32 = scalar_select %p29, %s31, %s20
    %p33 = scmp.ge.s32.totalorder %s32, 1
    %s34 = scalar_select %p33, 0, %s32
    %s35 = sadd.s32 1, %s19
    %s36 = scalar_select %p33, %s35, %s19
    %p37 = scmp.ge.s32.totalorder %s36, 2
    %s38 = scalar_select %p37, 0, %s36
    %s39 = ssub.s32 %s19, %s38
    %s40 = ssub.s32 %s20, %s34
    %s41 = sor.u32 %s39, %s40
    %p42 = scmp.eq.s32.totalorder %s41, 0
    %s44 = sadd.s32 %s43, 1
    %s45 = scalar_select %p42, %s43, %s44
    %p48 = pneg %p42
    %p49 = scmp.eq.s32.totalorder %s12, 1
    %p50 = por %p48, %p49
    %p51 = scmp.ne.s32.totalorder %s43, %s46
    %p52 = scmp.eq.s32.totalorder %s12, 0
    %p53 = por %p51, %p52
    %p54 = scmp.ne.s32.totalorder %s43, %s46
    %p55 = scmp.eq.s32.totalorder %s17, 1
    %p56 = por %p54, %p55
    %p57 = scmp.ne.s32.totalorder %s46, %s47
    %p58 = scmp.eq.s32.totalorder %s17, 0
    %p59 = por %p57, %p58
    %p60 = scmp.ne.s32.totalorder %s46, %s47
    %p61 = scmp.eq.s32.totalorder %s18, 1
    %p62 = por %p60, %p61
    %p64 = scmp.ne.s32.totalorder %s47, %s63
    %p65 = scmp.eq.s32.totalorder %s18, 0
    %p66 = por %p64, %p65
    %s67 = ssub.s32 %s19, %s38
    %s68 = ssub.s32 %s21, %s30
    %s69 = sor.u32 %s67, %s68
    %p70 = scmp.eq.s32.totalorder %s69, 0
    %s72 = sadd.s32 %s71, 1
    %s73 = scalar_select %p70, %s71, %s72
    %p76 = pneg %p70
    %p77 = scmp.eq.s32.totalorder %s12, 1
    %p78 = por %p76, %p77
    %p79 = scmp.ne.s32.totalorder %s71, %s74
    %p80 = scmp.eq.s32.totalorder %s12, 0
    %p81 = por %p79, %p80
    %p82 = scmp.ne.s32.totalorder %s71, %s74
    %p83 = scmp.eq.s32.totalorder %s17, 1
    %p84 = por %p82, %p83
    %p85 = scmp.ne.s32.totalorder %s74, %s75
    %p86 = scmp.eq.s32.totalorder %s17, 0
    %p87 = por %p85, %p86
    %p88 = scmp.ne.s32.totalorder %s74, %s75
    %p89 = scmp.eq.s32.totalorder %s18, 1
    %p90 = por %p88, %p89
    %p92 = scmp.ne.s32.totalorder %s75, %s91
    %p93 = scmp.eq.s32.totalorder %s18, 0
    %p94 = por %p92, %p93
    %s95 = ssub.s32 %s19, %s38
    %s96 = ssub.s32 %s21, %s30
    %s97 = sor.u32 %s95, %s96
    %p98 = scmp.eq.s32.totalorder %s97, 0
    %s100 = sadd.s32 %s99, 1
    %s101 = scalar_select %p98, %s99, %s100
    %p104 = pneg %p98
    %p105 = scmp.eq.s32.totalorder %s12, 1
    %p106 = por %p104, %p105
    %p107 = scmp.ne.s32.totalorder %s99, %s102
    %p108 = scmp.eq.s32.totalorder %s12, 0
    %p109 = por %p107, %p108
    %p110 = scmp.ne.s32.totalorder %s99, %s102
    %p111 = scmp.eq.s32.totalorder %s17, 1
    %p112 = por %p110, %p111
    %p113 = scmp.ne.s32.totalorder %s102, %s103
    %p114 = scmp.eq.s32.totalorder %s17, 0
    %p115 = por %p113, %p114
    %p116 = scmp.ne.s32.totalorder %s102, %s103
    %p117 = scmp.eq.s32.totalorder %s18, 1
    %p118 = por %p116, %p117
    %p120 = scmp.ne.s32.totalorder %s103, %s119
    %p121 = scmp.eq.s32.totalorder %s18, 0
    %p122 = por %p120, %p121
    %s123 = ssub.s32 %s19, %s38
    %s124 = ssub.s32 %s20, %s34
    %s125 = sor.u32 %s123, %s124
    %p126 = scmp.eq.s32.totalorder %s125, 0
    %s128 = sadd.s32 %s127, 1
    %s129 = scalar_select %p126, %s127, %s128
    %p132 = pneg %p126
    %p133 = scmp.eq.s32.totalorder %s12, 1
    %p134 = por %p132, %p133
    %p135 = scmp.ne.s32.totalorder %s127, %s130
    %p136 = scmp.eq.s32.totalorder %s12, 0
    %p137 = por %p135, %p136
    %p138 = scmp.ne.s32.totalorder %s127, %s130
    %p139 = scmp.eq.s32.totalorder %s17, 1
    %p140 = por %p138, %p139
    %p141 = scmp.ne.s32.totalorder %s130, %s131
    %p142 = scmp.eq.s32.totalorder %s17, 0
    %p143 = por %p141, %p142
    %p144 = scmp.ne.s32.totalorder %s130, %s131
    %p145 = scmp.eq.s32.totalorder %s18, 1
    %p146 = por %p144, %p145
    %p148 = scmp.ne.s32.totalorder %s131, %s147
    %p149 = scmp.eq.s32.totalorder %s18, 0
    %p150 = por %p148, %p149
    %s152 = sadd.s32 %s151, 1
    %p155 = scmp.eq.s32.totalorder %s12, 1
    %p156 = scmp.ne.s32.totalorder %s151, %s153
    %p157 = scmp.eq.s32.totalorder %s12, 0
    %p158 = por %p156, %p157
    %p159 = scmp.ne.s32.totalorder %s151, %s153
    %p160 = scmp.eq.s32.totalorder %s17, 1
    %p161 = por %p159, %p160
    %p162 = scmp.ne.s32.totalorder %s153, %s154
    %p163 = scmp.eq.s32.totalorder %s17, 0
    %p164 = por %p162, %p163
    %p165 = scmp.ne.s32.totalorder %s153, %s154
    %p166 = scmp.eq.s32.totalorder %s18, 1
    %p167 = por %p165, %p166
    %p169 = scmp.ne.s32.totalorder %s154, %s168
    %p170 = scmp.eq.s32.totalorder %s18, 0
    %p171 = por %p169, %p170
    %s173 = sadd.s32 %s172, 1
    %p176 = scmp.eq.s32.totalorder %s12, 1
    %p177 = scmp.ne.s32.totalorder %s172, %s174
    %p178 = scmp.eq.s32.totalorder %s12, 0
    %p179 = por %p177, %p178
    %p180 = scmp.ne.s32.totalorder %s172, %s174
    %p181 = scmp.eq.s32.totalorder %s17, 1
    %p182 = por %p180, %p181
    %p183 = scmp.ne.s32.totalorder %s174, %s175
    %p184 = scmp.eq.s32.totalorder %s17, 0
    %p185 = por %p183, %p184
    %p186 = scmp.ne.s32.totalorder %s174, %s175
    %p187 = scmp.eq.s32.totalorder %s18, 1
    %p188 = por %p186, %p187
    %p190 = scmp.ne.s32.totalorder %s175, %s189
    %p191 = scmp.eq.s32.totalorder %s18, 0
    %p192 = por %p190, %p191
    %s193 = ssub.s32 %s19, %s38
    %s194 = ssub.s32 %s20, %s34
    %s195 = sor.u32 %s193, %s194
    %p196 = scmp.eq.s32.totalorder %s195, 0
    %s198 = sadd.s32 %s197, 1
    %s199 = scalar_select %p196, %s197, %s198
    %p202 = pneg %p196
    %p203 = scmp.eq.s32.totalorder %s12, 1
    %p204 = por %p202, %p203
    %p205 = scmp.ne.s32.totalorder %s197, %s200
    %p206 = scmp.eq.s32.totalorder %s12, 0
    %p207 = por %p205, %p206
    %p208 = scmp.ne.s32.totalorder %s197, %s200
    %p209 = scmp.eq.s32.totalorder %s17, 1
    %p210 = por %p208, %p209
    %p211 = scmp.ne.s32.totalorder %s200, %s201
    %p212 = scmp.eq.s32.totalorder %s17, 0
    %p213 = por %p211, %p212
    %p214 = scmp.ne.s32.totalorder %s200, %s201
    %p215 = scmp.eq.s32.totalorder %s18, 1
    %p216 = por %p214, %p215
    %p218 = scmp.ne.s32.totalorder %s201, %s217
    %p219 = scmp.eq.s32.totalorder %s18, 0
    %p220 = por %p218, %p219
    %p221 = scmp.le.s32.totalorder 1, %s12
    %p222 = scmp.lt.s32.totalorder %s12, 3
    %p223 = pnand %p221, %p222
    %p224 = pneg %p223
    // Predicated region
    $region9: #{self_attention_pallas.5} parent=5 // pred_check
      _
    $region10: #{self_attention_pallas.5} parent=5 // pred_check_branch
      %226 = sbr.rel (%p223) target = $region12
    $region11: #{self_attention_pallas.5} parent=5 // pred_region
      %s227 = ssub.s32 %s12, 1
      // Predicated region
      $region13: #{self_attention_pallas.5} parent=11 // pred_check
        %p228 = pneg %p164
      $region14: #{self_attention_pallas.5} parent=11 // pred_check_branch
        %230 = sbr.rel (%p228) target = $region16
      $region15: #{self_attention_pallas.5} parent=11 // pred_region
        _
      $region16: #{self_attention_pallas.5} parent=11 // pred_fallthru
        _
      // Predicated region
      $region17: #{self_attention_pallas.5} parent=11 // pred_check
        %p231 = pneg %p185
      $region18: #{self_attention_pallas.5} parent=11 // pred_check_branch
        %233 = sbr.rel (%p231) target = $region20
      $region19: #{self_attention_pallas.5} parent=11 // pred_region
        _
      $region20: #{self_attention_pallas.5} parent=11 // pred_fallthru
        _
    $region12: #{self_attention_pallas.5} parent=5 // pred_fallthru
      _
    %p234 = scmp.lt.s32.totalorder %s12, 2
    // Predicated region
    $region21: #{self_attention_pallas.5} parent=5 // pred_check
      %p235 = pneg %p234
    $region22: #{self_attention_pallas.5} parent=5 // pred_check_branch
      %237 = sbr.rel (%p235) target = $region24
    $region23: #{self_attention_pallas.5} parent=5 // pred_region
      // Predicated region
      $region25: #{self_attention_pallas.5} parent=23 // pred_check
        %p238 = pneg %p53
      $region26: #{self_attention_pallas.5} parent=23 // pred_check_branch
        %240 = sbr.rel (%p238) target = $region28
      $region27: #{self_attention_pallas.5} parent=23 // pred_region
        %s241 = smul.u32 8, %s20
        %p242 = scmp.lt.s32.totalorder %s19, 1
        %s243 = scalar_select %p242, %s19, 1
        %p244 = scmp.lt.s32.totalorder %s241, 7
        %s245 = scalar_select %p244, %s241, 7
        %s246 = smul.addr %s243, 8
        %s247 = sadd.s32 %s245, %s246
        %s248 = smul.addr %s247, 4
        %s249 = scalar_lea.vmem %s0, %s248
        %s250 = smul.u32 8, %s20
      $region28: #{self_attention_pallas.5} parent=23 // pred_fallthru
        _
      // Predicated region
      $region29: #{self_attention_pallas.5} parent=23 // pred_check
        %p251 = pneg %p81
      $region30: #{self_attention_pallas.5} parent=23 // pred_check_branch
        %253 = sbr.rel (%p251) target = $region32
      $region31: #{self_attention_pallas.5} parent=23 // pred_region
        %s254 = smul.u32 8, %s21
        %p255 = scmp.lt.s32.totalorder %s19, 1
        %s256 = scalar_select %p255, %s19, 1
        %p257 = scmp.lt.s32.totalorder %s254, 7
        %s258 = scalar_select %p257, %s254, 7
        %s259 = smul.addr %s256, 8
        %s260 = sadd.s32 %s258, %s259
        %s261 = smul.addr %s260, 4
        %s262 = scalar_lea.vmem %s1, %s261
        %s263 = smul.u32 8, %s21
      $region32: #{self_attention_pallas.5} parent=23 // pred_fallthru
        _
      // Predicated region
      $region33: #{self_attention_pallas.5} parent=23 // pred_check
        %p264 = pneg %p109
      $region34: #{self_attention_pallas.5} parent=23 // pred_check_branch
        %266 = sbr.rel (%p264) target = $region36
      $region35: #{self_attention_pallas.5} parent=23 // pred_region
        %s267 = smul.u32 8, %s21
        %p268 = scmp.lt.s32.totalorder %s19, 1
        %s269 = scalar_select %p268, %s19, 1
        %p270 = scmp.lt.s32.totalorder %s267, 7
        %s271 = scalar_select %p270, %s267, 7
        %s272 = smul.addr %s269, 8
        %s273 = sadd.s32 %s271, %s272
        %s274 = smul.addr %s273, 4
        %s275 = scalar_lea.vmem %s2, %s274
        %s276 = smul.u32 8, %s21
      $region36: #{self_attention_pallas.5} parent=23 // pred_fallthru
        _
      // Predicated region
      $region37: #{self_attention_pallas.5} parent=23 // pred_check
        %p277 = pneg %p137
      $region38: #{self_attention_pallas.5} parent=23 // pred_check_branch
        %279 = sbr.rel (%p277) target = $region40
      $region39: #{self_attention_pallas.5} parent=23 // pred_region
        %s280 = smul.u32 8, %s20
        %p281 = scmp.lt.s32.totalorder %s19, 1
        %s282 = scalar_select %p281, %s19, 1
        %p283 = scmp.lt.s32.totalorder %s280, 7
        %s284 = scalar_select %p283, %s280, 7
        %s285 = smul.addr %s282, 8
        %s286 = sadd.s32 %s284, %s285
        %s287 = smul.addr %s286, 8
        %s288 = scalar_lea.vmem %s3, %s287
        %s289 = smul.u32 8, %s20
      $region40: #{self_attention_pallas.5} parent=23 // pred_fallthru
        _
    $region24: #{self_attention_pallas.5} parent=5 // pred_fallthru
      _
    %p290 = scmp.le.s32.totalorder 1, %s12
    %p291 = scmp.lt.s32.totalorder %s12, 3
    %p292 = pnand %p290, %p291
    %p293 = pneg %p292
    // Predicated region
    $region41: #{self_attention_pallas.5} parent=5 // pred_check
      _
    $region42: #{self_attention_pallas.5} parent=5 // pred_check_branch
      %295 = sbr.rel (%p292) target = $region44
    $region43: #{self_attention_pallas.5} parent=5 // pred_region
      %s296 = ssub.s32 %s12, 1
      %s297 = smul.u32 8, %s23
      %p298 = scmp.lt.s32.totalorder %s22, 1
      %s299 = scalar_select %p298, %s22, 1
      %p300 = scmp.lt.s32.totalorder %s297, 7
      %s301 = scalar_select %p300, %s297, 7
      %s302 = smul.addr %s299, 8
      %s303 = sadd.s32 %s301, %s302
      %s304 = smul.addr %s303, 4
      %s305 = scalar_lea.vmem %s0, %s304
      %p306 = pneg %p59
      %p307 = pneg %p56
      %s308 = smul.u32 8, %s24
      %p309 = scmp.lt.s32.totalorder %s22, 1
      %s310 = scalar_select %p309, %s22, 1
      %p311 = scmp.lt.s32.totalorder %s308, 7
      %s312 = scalar_select %p311, %s308, 7
      %s313 = smul.addr %s310, 8
      %s314 = sadd.s32 %s312, %s313
      %s315 = smul.addr %s314, 4
      %s316 = scalar_lea.vmem %s1, %s315
      %p317 = pneg %p87
      %p318 = pneg %p84
      %s319 = smul.u32 8, %s24
      %p320 = scmp.lt.s32.totalorder %s22, 1
      %s321 = scalar_select %p320, %s22, 1
      %p322 = scmp.lt.s32.totalorder %s319, 7
      %s323 = scalar_select %p322, %s319, 7
      %s324 = smul.addr %s321, 8
      %s325 = sadd.s32 %s323, %s324
      %s326 = smul.addr %s325, 4
      %s327 = scalar_lea.vmem %s2, %s326
      %p328 = pneg %p115
      %p329 = pneg %p112
      %s330 = smul.u32 8, %s23
      %p331 = scmp.lt.s32.totalorder %s22, 1
      %s332 = scalar_select %p331, %s22, 1
      %p333 = scmp.lt.s32.totalorder %s330, 7
      %s334 = scalar_select %p333, %s330, 7
      %s335 = smul.addr %s332, 8
      %s336 = sadd.s32 %s334, %s335
      %s337 = smul.addr %s336, 8
      %s338 = scalar_lea.vmem %s3, %s337
      %p339 = pneg %p143
      %p340 = pneg %p140
      %p341 = pneg %p164
      %p342 = pneg %p161
      %p343 = pneg %p185
      %p344 = pneg %p182
      %p345 = pneg %p213
      %p346 = pneg %p210
      %s347 = smul.u32 8, %s23
      %p348 = scmp.lt.s32.totalorder %s22, 1
      %s349 = scalar_select %p348, %s22, 1
      %p350 = scmp.lt.s32.totalorder %s347, 7
      %s351 = scalar_select %p350, %s347, 7
      %s352 = smul.addr %s349, 8
      %s353 = sadd.s32 %s351, %s352
      %s354 = smul.addr %s353, 8
      %s355 = scalar_lea.vmem %s6, %s354
      %s356 = smul.u32 8, %s23
      %p357 = scmp.lt.s32.totalorder %s22, 1
      %s358 = scalar_select %p357, %s22, 1
      %p359 = scmp.lt.s32.totalorder %s356, 7
      %s360 = scalar_select %p359, %s356, 7
      %s361 = smul.addr %s358, 8
      %s362 = sadd.s32 %s360, %s361
      %s363 = smul.addr %s362, 4
      %s364 = scalar_lea.vmem %s0, %s363
      %s365 = smul.u32 8, %s23
      %s366 = smul.u32 8, %s24
      %p367 = scmp.lt.s32.totalorder %s22, 1
      %s368 = scalar_select %p367, %s22, 1
      %p369 = scmp.lt.s32.totalorder %s366, 7
      %s370 = scalar_select %p369, %s366, 7
      %s371 = smul.addr %s368, 8
      %s372 = sadd.s32 %s370, %s371
      %s373 = smul.addr %s372, 4
      %s374 = scalar_lea.vmem %s1, %s373
      %s375 = smul.u32 8, %s24
      %s376 = smul.u32 8, %s24
      %p377 = scmp.lt.s32.totalorder %s22, 1
      %s378 = scalar_select %p377, %s22, 1
      %p379 = scmp.lt.s32.totalorder %s376, 7
      %s380 = scalar_select %p379, %s376, 7
      %s381 = smul.addr %s378, 8
      %s382 = sadd.s32 %s380, %s381
      %s383 = smul.addr %s382, 4
      %s384 = scalar_lea.vmem %s2, %s383
      %s385 = smul.u32 8, %s24
      %s386 = smul.u32 8, %s23
      %p387 = scmp.lt.s32.totalorder %s22, 1
      %s388 = scalar_select %p387, %s22, 1
      %p389 = scmp.lt.s32.totalorder %s386, 7
      %s390 = scalar_select %p389, %s386, 7
      %s391 = smul.addr %s388, 8
      %s392 = sadd.s32 %s390, %s391
      %s393 = smul.addr %s392, 8
      %s394 = scalar_lea.vmem %s3, %s393
      %s395 = smul.u32 8, %s23
      %s396 = smul.u32 8, %s23
      %p397 = scmp.lt.s32.totalorder %s22, 1
      %s398 = scalar_select %p397, %s22, 1
      %p399 = scmp.lt.s32.totalorder %s396, 7
      %s400 = scalar_select %p399, %s396, 7
      %s401 = smul.addr %s398, 8
      %s402 = sadd.s32 %s400, %s401
      %s403 = smul.addr %s402, 8
      %s404 = scalar_lea.vmem %s6, %s403
      %s405 = smul.u32 8, %s23
      %p407 = scmp.eq.s32.totalorder %s24, 0
      // Predicated region
      $region45: #{self_attention_pallas.5} parent=43 // pred_check
        %p408 = pneg %p407
      $region46: #{self_attention_pallas.5} parent=43 // pred_check_branch
        %410 = sbr.rel (%p408) target = $region48
      $region47: #{self_attention_pallas.5} parent=43 // pred_region
        %vm411 = vcmask 7168
        %412 = vst.msk [vmem:[#allocation2] sm:$0xff] %vm411, -inf
        %413 = vst.msk [vmem:[#allocation2 + $0x8] sm:$0xff] %vm411, -inf
        %414 = vst.msk [vmem:[#allocation2 + $0x10] sm:$0xff] %vm411, -inf
        %415 = vst.msk [vmem:[#allocation2 + $0x18] sm:$0xff] %vm411, -inf
        %416 = vst.msk [vmem:[#allocation2 + $0x20] sm:$0xff] %vm411, -inf
        %417 = vst.msk [vmem:[#allocation2 + $0x28] sm:$0xff] %vm411, -inf
        %418 = vst.msk [vmem:[#allocation2 + $0x30] sm:$0xff] %vm411, -inf
        %419 = vst.msk [vmem:[#allocation2 + $0x38] sm:$0xff] %vm411, -inf
        %420 = vst.msk [vmem:[#allocation3] sm:$0xff] %vm411, 0.0
        %421 = vst.msk [vmem:[#allocation3 + $0x8] sm:$0xff] %vm411, 0.0
        %422 = vst.msk [vmem:[#allocation3 + $0x10] sm:$0xff] %vm411, 0.0
        %423 = vst.msk [vmem:[#allocation3 + $0x18] sm:$0xff] %vm411, 0.0
        %424 = vst.msk [vmem:[#allocation3 + $0x20] sm:$0xff] %vm411, 0.0
        %425 = vst.msk [vmem:[#allocation3 + $0x28] sm:$0xff] %vm411, 0.0
        %426 = vst.msk [vmem:[#allocation3 + $0x30] sm:$0xff] %vm411, 0.0
        %427 = vst.msk [vmem:[#allocation3 + $0x38] sm:$0xff] %vm411, 0.0
        %428 = vst [vmem:[#allocation4] sm:$0xff] 0.0
        %429 = vst [vmem:[#allocation4 + $0x8] sm:$0xff] 0.0
        %430 = vst [vmem:[#allocation4 + $0x10] sm:$0xff] 0.0
        %431 = vst [vmem:[#allocation4 + $0x18] sm:$0xff] 0.0
        %432 = vst [vmem:[#allocation4 + $0x20] sm:$0xff] 0.0
        %433 = vst [vmem:[#allocation4 + $0x28] sm:$0xff] 0.0
        %434 = vst [vmem:[#allocation4 + $0x30] sm:$0xff] 0.0
        %435 = vst [vmem:[#allocation4 + $0x38] sm:$0xff] 0.0
      $region48: #{self_attention_pallas.5} parent=43 // pred_fallthru
        _
      %v436 = vld [vmem:[%s364] sm:$0xf]
      %v437 = vld [vmem:[%s364 + $0x4] sm:$0xf]
      %v438 = vld [vmem:[%s364 + $0x8] sm:$0xf]
      %v439 = vld [vmem:[%s364 + $0xc] sm:$0xf]
      %v440 = vld [vmem:[%s364 + $0x10] sm:$0xf]
      %v441 = vld [vmem:[%s364 + $0x14] sm:$0xf]
      %v442 = vld [vmem:[%s364 + $0x18] sm:$0xf]
      %v443 = vld [vmem:[%s364 + $0x1c] sm:$0xf]
      %v444 = vld [vmem:[%s374] sm:$0xf]
      %v445 = vld [vmem:[%s374 + $0x4] sm:$0xf]
      %v446 = vld [vmem:[%s374 + $0x8] sm:$0xf]
      %v447 = vld [vmem:[%s374 + $0xc] sm:$0xf]
      %v448 = vld [vmem:[%s374 + $0x10] sm:$0xf]
      %v449 = vld [vmem:[%s374 + $0x14] sm:$0xf]
      %v450 = vld [vmem:[%s374 + $0x18] sm:$0xf]
      %v451 = vld [vmem:[%s374 + $0x1c] sm:$0xf]
      %v452 = vld [vmem:[%s384] sm:$0xf]
      %v453 = vld [vmem:[%s384 + $0x4] sm:$0xf]
      %v454 = vld [vmem:[%s384 + $0x8] sm:$0xf]
      %v455 = vld [vmem:[%s384 + $0xc] sm:$0xf]
      %v456 = vld [vmem:[%s384 + $0x10] sm:$0xf]
      %v457 = vld [vmem:[%s384 + $0x14] sm:$0xf]
      %v458 = vld [vmem:[%s384 + $0x18] sm:$0xf]
      %v459 = vld [vmem:[%s384 + $0x1c] sm:$0xf]
      %v468 = vunpack.c.l.b16 %v436
      %v469 = vunpack.c.l.b16 %v437
      %v470 = vunpack.c.l.b16 %v438
      %v471 = vunpack.c.l.b16 %v439
      %v472 = vunpack.c.l.b16 %v440
      %v473 = vunpack.c.l.b16 %v441
      %v474 = vunpack.c.l.b16 %v442
      %v475 = vunpack.c.l.b16 %v443
      %v476 = vpack.c.b16 %v469, %v468
      %v477 = vpack.c.b16 %v471, %v470
      %v478 = vpack.c.b16 %v473, %v472
      %v479 = vpack.c.b16 %v475, %v474
      %v492 = vunpack.c.l.b16 %v444
      %v493 = vunpack.c.l.b16 %v445
      %v494 = vunpack.c.l.b16 %v446
      %v495 = vunpack.c.l.b16 %v447
      %v496 = vunpack.c.l.b16 %v448
      %v497 = vunpack.c.l.b16 %v449
      %v498 = vunpack.c.l.b16 %v450
      %v499 = vunpack.c.l.b16 %v451
      %v500 = vpack.c.b16 %v493, %v492
      %v501 = vpack.c.b16 %v495, %v494
      %v502 = vpack.c.b16 %v497, %v496
      %v503 = vpack.c.b16 %v499, %v498
      %508 = vmatprep.subr.bf16.mxu0 0
      %509 = vmatpush1.bf16.xpose.msra.mxu0 %v500
      %510 = vmatprep.subr.bf16.mxu0 0
      %511 = vmatpush1.bf16.xpose.msra.mxu0 %v501
      %512 = vmatprep.subr.bf16.mxu0 0
      %513 = vmatpush1.bf16.xpose.msra.mxu0 %v502
      %514 = vmatprep.subr.bf16.mxu0 0
      %515 = vmatpush1.bf16.xpose.msra.mxu0 %v503
      %516 = vmatprep.subr.bf16.mxu0 0
      %517 = vmatpush1.bf16.xpose.msra.mxu0 0
      %518 = vmatprep.subr.bf16.mxu0 0
      %519 = vmatpush1.bf16.xpose.msra.mxu0 0
      %520 = vmatprep.subr.bf16.mxu0 0
      %521 = vmatpush1.bf16.xpose.msra.mxu0 0
      %522 = vmatprep.subr.bf16.mxu0 0
      %523 = vmatpush1.bf16.xpose.msra.mxu0 0
      %524 = vmatprep.subr.bf16.mxu0 0
      %525 = vmatpush1.bf16.xpose.msra.mxu0 0
      %526 = vmatprep.subr.bf16.mxu0 0
      %527 = vmatpush1.bf16.xpose.msra.mxu0 0
      %528 = vmatprep.subr.bf16.mxu0 0
      %529 = vmatpush1.bf16.xpose.msra.mxu0 0
      %530 = vmatprep.subr.bf16.mxu0 0
      %531 = vmatpush1.bf16.xpose.msra.mxu0 0
      %532 = vmatprep.subr.bf16.mxu0 0
      %533 = vmatpush1.bf16.xpose.msra.mxu0 0
      %534 = vmatprep.subr.bf16.mxu0 0
      %535 = vmatpush1.bf16.xpose.msra.mxu0 0
      %536 = vmatprep.subr.bf16.mxu0 0
      %537 = vmatpush1.bf16.xpose.msra.mxu0 0
      %538 = vmatprep.subr.bf16.mxu0 0
      %539 = vmatpush1.bf16.xpose.msra.mxu0 0
      %540 = vmatprep.mubr.bf16.mxu0 0
      %541 = vmatmul.mubr.bf16.gmra.mrb[0].mxu0 %v476
      %v542 = vpop.f32.mrb[0].mxu0
      %v543 = vadd.f32 0.0, %v542
      %v544 = vpop.f32.mrb[0].mxu0
      %v545 = vpop.f32.mrb[0].mxu0
      %v546 = vadd.f32 0.0, %v545
      %v547 = vpop.f32.mrb[0].mxu0
      %548 = vmatprep.mubr.bf16.mxu0 0
      %549 = vmatmul.mubr.bf16.gmra.mrb[0].mxu0 %v477
      %v550 = vpop.f32.mrb[0].mxu0
      %v551 = vadd.f32 0.0, %v550
      %v552 = vpop.f32.mrb[0].mxu0
      %v553 = vpop.f32.mrb[0].mxu0
      %v554 = vadd.f32 0.0, %v553
      %v555 = vpop.f32.mrb[0].mxu0
      %556 = vmatprep.mubr.bf16.mxu0 0
      %557 = vmatmul.mubr.bf16.gmra.mrb[0].mxu0 %v478
      %v558 = vpop.f32.mrb[0].mxu0
      %v559 = vadd.f32 0.0, %v558
      %v560 = vpop.f32.mrb[0].mxu0
      %v561 = vpop.f32.mrb[0].mxu0
      %v562 = vadd.f32 0.0, %v561
      %v563 = vpop.f32.mrb[0].mxu0
      %564 = vmatprep.mubr.bf16.mxu0 0
      %565 = vmatmul.mubr.bf16.gmra.mrb[0].mxu0 %v479
      %v566 = vpop.f32.mrb[0].mxu0
      %v567 = vadd.f32 0.0, %v566
      %v568 = vpop.f32.mrb[0].mxu0
      %v569 = vpop.f32.mrb[0].mxu0
      %v570 = vadd.f32 0.0, %v569
      %v571 = vpop.f32.mrb[0].mxu0
      %572 = vdwg.mxu0
      %v573 = vld [vmem:[#allocation2] sm:$0xff]
      %v574 = vld [vmem:[#allocation2 + $0x8] sm:$0xff]
      %v575 = vld [vmem:[#allocation2 + $0x10] sm:$0xff]
      %v576 = vld [vmem:[#allocation2 + $0x18] sm:$0xff]
      %v577 = vld [vmem:[#allocation2 + $0x20] sm:$0xff]
      %v578 = vld [vmem:[#allocation2 + $0x28] sm:$0xff]
      %v579 = vld [vmem:[#allocation2 + $0x30] sm:$0xff]
      %v580 = vld [vmem:[#allocation2 + $0x38] sm:$0xff]
      %vm581 = vcmask 523264
      %v582 = vsel %vm581, %v543, -inf
      %583 = vmax.xlane.f32.xlu0 %v582
      %v584 = vpop.xlane.xlu0 %583
      %v585 = vsel %vm581, %v546, -inf
      %586 = vmax.xlane.f32.xlu0 %v585
      %v587 = vpop.xlane.xlu0 %586
      %v588 = vsel %vm581, %v551, -inf
      %589 = vmax.xlane.f32.xlu0 %v588
      %v590 = vpop.xlane.xlu0 %589
      %v591 = vsel %vm581, %v554, -inf
      %592 = vmax.xlane.f32.xlu0 %v591
      %v593 = vpop.xlane.xlu0 %592
      %v594 = vsel %vm581, %v559, -inf
      %595 = vmax.xlane.f32.xlu0 %v594
      %v596 = vpop.xlane.xlu0 %595
      %v597 = vsel %vm581, %v562, -inf
      %598 = vmax.xlane.f32.xlu0 %v597
      %v599 = vpop.xlane.xlu0 %598
      %v600 = vsel %vm581, %v567, -inf
      %601 = vmax.xlane.f32.xlu0 %v600
      %v602 = vpop.xlane.xlu0 %601
      %v603 = vsel %vm581, %v570, -inf
      %604 = vmax.xlane.f32.xlu0 %v603
      %v605 = vpop.xlane.xlu0 %604
      %v606 = vmax.f32 %v573, %v584
      %v607 = vmax.f32 %v574, %v587
      %v608 = vmax.f32 %v575, %v590
      %v609 = vmax.f32 %v576, %v593
      %v610 = vmax.f32 %v577, %v596
      %v611 = vmax.f32 %v578, %v599
      %v612 = vmax.f32 %v579, %v602
      %v613 = vmax.f32 %v580, %v605
      %v614 = vsub.f32 %v573, %v606
      %v615 = vsub.f32 %v574, %v607
      %v616 = vsub.f32 %v575, %v608
      %v617 = vsub.f32 %v576, %v609
      %v618 = vsub.f32 %v577, %v610
      %v619 = vsub.f32 %v578, %v611
      %v620 = vsub.f32 %v579, %v612
      %v621 = vsub.f32 %v580, %v613
      %v622 = vmul.f32 %v614, 1.442695
      %v623 = vpow.pop %v622
      %v624 = vmul.f32 %v615, 1.442695
      %v625 = vpow.pop %v624
      %v626 = vmul.f32 %v616, 1.442695
      %v627 = vpow.pop %v626
      %v628 = vmul.f32 %v617, 1.442695
      %v629 = vpow.pop %v628
      %v630 = vmul.f32 %v618, 1.442695
      %v631 = vpow.pop %v630
      %v632 = vmul.f32 %v619, 1.442695
      %v633 = vpow.pop %v632
      %v634 = vmul.f32 %v620, 1.442695
      %v635 = vpow.pop %v634
      %v636 = vmul.f32 %v621, 1.442695
      %v637 = vpow.pop %v636
      %639 = vset.pattern.permute.xlu0 0
      %640 = vperm.xlu0 %639, %v606
      %v641 = vpop.permute.xlu0 %640
      %644 = vset.pattern.permute.xlu0 0
      %645 = vperm.xlu0 %644, %v607
      %v646 = vpop.permute.xlu0 %645
      %649 = vset.pattern.permute.xlu0 0
      %650 = vperm.xlu0 %649, %v608
      %v651 = vpop.permute.xlu0 %650
      %654 = vset.pattern.permute.xlu0 0
      %655 = vperm.xlu0 %654, %v609
      %v656 = vpop.permute.xlu0 %655
      %659 = vset.pattern.permute.xlu0 0
      %660 = vperm.xlu0 %659, %v610
      %v661 = vpop.permute.xlu0 %660
      %664 = vset.pattern.permute.xlu0 0
      %665 = vperm.xlu0 %664, %v611
      %v666 = vpop.permute.xlu0 %665
      %669 = vset.pattern.permute.xlu0 0
      %670 = vperm.xlu0 %669, %v612
      %v671 = vpop.permute.xlu0 %670
      %674 = vset.pattern.permute.xlu0 0
      %675 = vperm.xlu0 %674, %v613
      %v676 = vpop.permute.xlu0 %675
      %v678 = vsub.f32 %v543, %v641
      %v679 = vsub.f32 %v546, %v646
      %v680 = vsub.f32 %v551, %v651
      %v681 = vsub.f32 %v554, %v656
      %v682 = vsub.f32 %v559, %v661
      %v683 = vsub.f32 %v562, %v666
      %v684 = vsub.f32 %v567, %v671
      %v685 = vsub.f32 %v570, %v676
      %v686 = vmul.f32 %v678, 1.442695
      %v687 = vpow.pop %v686
      %v688 = vmul.f32 %v679, 1.442695
      %v689 = vpow.pop %v688
      %v690 = vmul.f32 %v680, 1.442695
      %v691 = vpow.pop %v690
      %v692 = vmul.f32 %v681, 1.442695
      %v693 = vpow.pop %v692
      %v694 = vmul.f32 %v682, 1.442695
      %v695 = vpow.pop %v694
      %v696 = vmul.f32 %v683, 1.442695
      %v697 = vpow.pop %v696
      %v698 = vmul.f32 %v684, 1.442695
      %v699 = vpow.pop %v698
      %v700 = vmul.f32 %v685, 1.442695
      %v701 = vpow.pop %v700
      %v702 = vld [vmem:[#allocation3] sm:$0xff]
      %v703 = vld [vmem:[#allocation3 + $0x8] sm:$0xff]
      %v704 = vld [vmem:[#allocation3 + $0x10] sm:$0xff]
      %v705 = vld [vmem:[#allocation3 + $0x18] sm:$0xff]
      %v706 = vld [vmem:[#allocation3 + $0x20] sm:$0xff]
      %v707 = vld [vmem:[#allocation3 + $0x28] sm:$0xff]
      %v708 = vld [vmem:[#allocation3 + $0x30] sm:$0xff]
      %v709 = vld [vmem:[#allocation3 + $0x38] sm:$0xff]
      %v710 = vmul.f32 %v623, %v702
      %v711 = vmul.f32 %v625, %v703
      %v712 = vmul.f32 %v627, %v704
      %v713 = vmul.f32 %v629, %v705
      %v714 = vmul.f32 %v631, %v706
      %v715 = vmul.f32 %v633, %v707
      %v716 = vmul.f32 %v635, %v708
      %v717 = vmul.f32 %v637, %v709
      %v718 = vsel %vm581, %v687, 0.0
      %719 = vadd.xlane.f32.xlu0 %v718
      %v720 = vpop.xlane.xlu0 %719
      %v721 = vsel %vm581, %v689, 0.0
      %722 = vadd.xlane.f32.xlu0 %v721
      %v723 = vpop.xlane.xlu0 %722
      %v724 = vsel %vm581, %v691, 0.0
      %725 = vadd.xlane.f32.xlu0 %v724
      %v726 = vpop.xlane.xlu0 %725
      %v727 = vsel %vm581, %v693, 0.0
      %728 = vadd.xlane.f32.xlu0 %v727
      %v729 = vpop.xlane.xlu0 %728
      %v730 = vsel %vm581, %v695, 0.0
      %731 = vadd.xlane.f32.xlu0 %v730
      %v732 = vpop.xlane.xlu0 %731
      %v733 = vsel %vm581, %v697, 0.0
      %734 = vadd.xlane.f32.xlu0 %v733
      %v735 = vpop.xlane.xlu0 %734
      %v736 = vsel %vm581, %v699, 0.0
      %737 = vadd.xlane.f32.xlu0 %v736
      %v738 = vpop.xlane.xlu0 %737
      %v739 = vsel %vm581, %v701, 0.0
      %740 = vadd.xlane.f32.xlu0 %v739
      %v741 = vpop.xlane.xlu0 %740
      %v742 = vadd.f32 %v710, %v720
      %v743 = vadd.f32 %v711, %v723
      %v744 = vadd.f32 %v712, %v726
      %v745 = vadd.f32 %v713, %v729
      %v746 = vadd.f32 %v714, %v732
      %v747 = vadd.f32 %v715, %v735
      %v748 = vadd.f32 %v716, %v738
      %v749 = vadd.f32 %v717, %v741
      %vm750 = vcmask 7168
      %751 = vst.msk [vmem:[#allocation3] sm:$0xff] %vm750, %v742
      %752 = vst.msk [vmem:[#allocation3 + $0x8] sm:$0xff] %vm750, %v743
      %753 = vst.msk [vmem:[#allocation3 + $0x10] sm:$0xff] %vm750, %v744
      %754 = vst.msk [vmem:[#allocation3 + $0x18] sm:$0xff] %vm750, %v745
      %755 = vst.msk [vmem:[#allocation3 + $0x20] sm:$0xff] %vm750, %v746
      %756 = vst.msk [vmem:[#allocation3 + $0x28] sm:$0xff] %vm750, %v747
      %757 = vst.msk [vmem:[#allocation3 + $0x30] sm:$0xff] %vm750, %v748
      %758 = vst.msk [vmem:[#allocation3 + $0x38] sm:$0xff] %vm750, %v749
      %v759 = vld [vmem:[#allocation4] sm:$0xff]
      %v760 = vld [vmem:[#allocation4 + $0x8] sm:$0xff]
      %v761 = vld [vmem:[#allocation4 + $0x10] sm:$0xff]
      %v762 = vld [vmem:[#allocation4 + $0x18] sm:$0xff]
      %v763 = vld [vmem:[#allocation4 + $0x20] sm:$0xff]
      %v764 = vld [vmem:[#allocation4 + $0x28] sm:$0xff]
      %v765 = vld [vmem:[#allocation4 + $0x30] sm:$0xff]
      %v766 = vld [vmem:[#allocation4 + $0x38] sm:$0xff]
      %768 = vset.pattern.permute.xlu0 0
      %769 = vperm.xlu0 %768, %v623
      %v770 = vpop.permute.xlu0 %769
      %773 = vset.pattern.permute.xlu0 0
      %774 = vperm.xlu0 %773, %v625
      %v775 = vpop.permute.xlu0 %774
      %778 = vset.pattern.permute.xlu0 0
      %779 = vperm.xlu0 %778, %v627
      %v780 = vpop.permute.xlu0 %779
      %783 = vset.pattern.permute.xlu0 0
      %784 = vperm.xlu0 %783, %v629
      %v785 = vpop.permute.xlu0 %784
      %788 = vset.pattern.permute.xlu0 0
      %789 = vperm.xlu0 %788, %v631
      %v790 = vpop.permute.xlu0 %789
      %793 = vset.pattern.permute.xlu0 0
      %794 = vperm.xlu0 %793, %v633
      %v795 = vpop.permute.xlu0 %794
      %798 = vset.pattern.permute.xlu0 0
      %799 = vperm.xlu0 %798, %v635
      %v800 = vpop.permute.xlu0 %799
      %803 = vset.pattern.permute.xlu0 0
      %804 = vperm.xlu0 %803, %v637
      %v805 = vpop.permute.xlu0 %804
      %v807 = vmul.f32 %v770, %v759
      %v808 = vmul.f32 %v775, %v760
      %v809 = vmul.f32 %v780, %v761
      %v810 = vmul.f32 %v785, %v762
      %v811 = vmul.f32 %v790, %v763
      %v812 = vmul.f32 %v795, %v764
      %v813 = vmul.f32 %v800, %v765
      %v814 = vmul.f32 %v805, %v766
      %v815 = vpack.c.bf16 %v689, %v687
      %v816 = vpack.c.bf16 %v693, %v691
      %v817 = vpack.c.bf16 %v697, %v695
      %v818 = vpack.c.bf16 %v701, %v699
      %v827 = vunpack.c.l.b16 %v452
      %v828 = vunpack.c.l.b16 %v453
      %v829 = vunpack.c.l.b16 %v454
      %v830 = vunpack.c.l.b16 %v455
      %v831 = vunpack.c.l.b16 %v456
      %v832 = vunpack.c.l.b16 %v457
      %v833 = vunpack.c.l.b16 %v458
      %v834 = vunpack.c.l.b16 %v459
      %v835 = vpack.c.b16 %v828, %v827
      %v836 = vpack.c.b16 %v830, %v829
      %v837 = vpack.c.b16 %v832, %v831
      %v838 = vpack.c.b16 %v834, %v833
      %v844 = vsel %vm581, %v815, 0
      %v847 = vsel %vm581, %v816, 0
      %v850 = vsel %vm581, %v817, 0
      %v853 = vsel %vm581, %v818, 0
      %855 = vmatprep.subr.bf16.mxu0 0
      %856 = vmatpush1.bf16.msra.mxu0 %v835
      %857 = vmatprep.subr.bf16.mxu0 0
      %858 = vmatpush1.bf16.msra.mxu0 %v836
      %859 = vmatprep.subr.bf16.mxu0 0
      %860 = vmatpush1.bf16.msra.mxu0 %v837
      %861 = vmatprep.subr.bf16.mxu0 0
      %862 = vmatpush1.bf16.msra.mxu0 %v838
      %863 = vmatprep.subr.bf16.mxu0 0
      %864 = vmatpush1.bf16.msra.mxu0 0
      %865 = vmatprep.subr.bf16.mxu0 0
      %866 = vmatpush1.bf16.msra.mxu0 0
      %867 = vmatprep.subr.bf16.mxu0 0
      %868 = vmatpush1.bf16.msra.mxu0 0
      %869 = vmatprep.subr.bf16.mxu0 0
      %870 = vmatpush1.bf16.msra.mxu0 0
      %871 = vmatprep.subr.bf16.mxu0 0
      %872 = vmatpush1.bf16.msra.mxu0 0
      %873 = vmatprep.subr.bf16.mxu0 0
      %874 = vmatpush1.bf16.msra.mxu0 0
      %875 = vmatprep.subr.bf16.mxu0 0
      %876 = vmatpush1.bf16.msra.mxu0 0
      %877 = vmatprep.subr.bf16.mxu0 0
      %878 = vmatpush1.bf16.msra.mxu0 0
      %879 = vmatprep.subr.bf16.mxu0 0
      %880 = vmatpush1.bf16.msra.mxu0 0
      %881 = vmatprep.subr.bf16.mxu0 0
      %882 = vmatpush1.bf16.msra.mxu0 0
      %883 = vmatprep.subr.bf16.mxu0 0
      %884 = vmatpush1.bf16.msra.mxu0 0
      %885 = vmatprep.subr.bf16.mxu0 0
      %886 = vmatpush1.bf16.msra.mxu0 0
      %887 = vmatprep.mubr.bf16.mxu0 0
      %888 = vmatmul.mubr.bf16.gmra.mrb[0].mxu0 %v844
      %v889 = vpop.f32.mrb[0].mxu0
      %v890 = vadd.f32 0.0, %v889
      %v891 = vpop.f32.mrb[0].mxu0
      %v892 = vpop.f32.mrb[0].mxu0
      %v893 = vadd.f32 0.0, %v892
      %v894 = vpop.f32.mrb[0].mxu0
      %895 = vmatprep.mubr.bf16.mxu0 0
      %896 = vmatmul.mubr.bf16.gmra.mrb[0].mxu0 %v847
      %v897 = vpop.f32.mrb[0].mxu0
      %v898 = vadd.f32 0.0, %v897
      %v899 = vpop.f32.mrb[0].mxu0
      %v900 = vpop.f32.mrb[0].mxu0
      %v901 = vadd.f32 0.0, %v900
      %v902 = vpop.f32.mrb[0].mxu0
      %903 = vmatprep.mubr.bf16.mxu0 0
      %904 = vmatmul.mubr.bf16.gmra.mrb[0].mxu0 %v850
      %v905 = vpop.f32.mrb[0].mxu0
      %v906 = vadd.f32 0.0, %v905
      %v907 = vpop.f32.mrb[0].mxu0
      %v908 = vpop.f32.mrb[0].mxu0
      %v909 = vadd.f32 0.0, %v908
      %v910 = vpop.f32.mrb[0].mxu0
      %911 = vmatprep.mubr.bf16.mxu0 0
      %912 = vmatmul.mubr.bf16.gmra.mrb[0].mxu0 %v853
      %v913 = vpop.f32.mrb[0].mxu0
      %v914 = vadd.f32 0.0, %v913
      %v915 = vpop.f32.mrb[0].mxu0
      %v916 = vpop.f32.mrb[0].mxu0
      %v917 = vadd.f32 0.0, %v916
      %v918 = vpop.f32.mrb[0].mxu0
      %919 = vdwg.mxu0
      %v920 = vadd.f32 %v807, %v890
      %v921 = vadd.f32 %v808, %v893
      %v922 = vadd.f32 %v809, %v898
      %v923 = vadd.f32 %v810, %v901
      %v924 = vadd.f32 %v811, %v906
      %v925 = vadd.f32 %v812, %v909
      %v926 = vadd.f32 %v813, %v914
      %v927 = vadd.f32 %v814, %v917
      %928 = vst [vmem:[#allocation4] sm:$0xff] %v920
      %929 = vst [vmem:[#allocation4 + $0x8] sm:$0xff] %v921
      %930 = vst [vmem:[#allocation4 + $0x10] sm:$0xff] %v922
      %931 = vst [vmem:[#allocation4 + $0x18] sm:$0xff] %v923
      %932 = vst [vmem:[#allocation4 + $0x20] sm:$0xff] %v924
      %933 = vst [vmem:[#allocation4 + $0x28] sm:$0xff] %v925
      %934 = vst [vmem:[#allocation4 + $0x30] sm:$0xff] %v926
      %935 = vst [vmem:[#allocation4 + $0x38] sm:$0xff] %v927
      %936 = vst.msk [vmem:[#allocation2] sm:$0xff] %vm750, %v606
      %937 = vst.msk [vmem:[#allocation2 + $0x8] sm:$0xff] %vm750, %v607
      %938 = vst.msk [vmem:[#allocation2 + $0x10] sm:$0xff] %vm750, %v608
      %939 = vst.msk [vmem:[#allocation2 + $0x18] sm:$0xff] %vm750, %v609
      %940 = vst.msk [vmem:[#allocation2 + $0x20] sm:$0xff] %vm750, %v610
      %941 = vst.msk [vmem:[#allocation2 + $0x28] sm:$0xff] %vm750, %v611
      %942 = vst.msk [vmem:[#allocation2 + $0x30] sm:$0xff] %vm750, %v612
      %943 = vst.msk [vmem:[#allocation2 + $0x38] sm:$0xff] %vm750, %v613
      // Predicated region
      $region49: #{self_attention_pallas.5} parent=43 // pred_check
        %p944 = pneg %p407
      $region50: #{self_attention_pallas.5} parent=43 // pred_check_branch
        %946 = sbr.rel (%p944) target = $region52
      $region51: #{self_attention_pallas.5} parent=43 // pred_region
        %v947 = vld [vmem:[#allocation3] sm:$0xff]
        %v948 = vld [vmem:[#allocation3 + $0x8] sm:$0xff]
        %v949 = vld [vmem:[#allocation3 + $0x10] sm:$0xff]
        %v950 = vld [vmem:[#allocation3 + $0x18] sm:$0xff]
        %v951 = vld [vmem:[#allocation3 + $0x20] sm:$0xff]
        %v952 = vld [vmem:[#allocation3 + $0x28] sm:$0xff]
        %v953 = vld [vmem:[#allocation3 + $0x30] sm:$0xff]
        %v954 = vld [vmem:[#allocation3 + $0x38] sm:$0xff]
        %v955 = vrcp.pop %v947
        %v956 = vrcp.pop %v948
        %v957 = vrcp.pop %v949
        %v958 = vrcp.pop %v950
        %v959 = vrcp.pop %v951
        %v960 = vrcp.pop %v952
        %v961 = vrcp.pop %v953
        %v962 = vrcp.pop %v954
        %v963 = vld [vmem:[#allocation4] sm:$0xff]
        %v964 = vld [vmem:[#allocation4 + $0x8] sm:$0xff]
        %v965 = vld [vmem:[#allocation4 + $0x10] sm:$0xff]
        %v966 = vld [vmem:[#allocation4 + $0x18] sm:$0xff]
        %v967 = vld [vmem:[#allocation4 + $0x20] sm:$0xff]
        %v968 = vld [vmem:[#allocation4 + $0x28] sm:$0xff]
        %v969 = vld [vmem:[#allocation4 + $0x30] sm:$0xff]
        %v970 = vld [vmem:[#allocation4 + $0x38] sm:$0xff]
        %972 = vset.pattern.permute.xlu0 0
        %973 = vperm.xlu0 %972, %v955
        %v974 = vpop.permute.xlu0 %973
        %977 = vset.pattern.permute.xlu0 0
        %978 = vperm.xlu0 %977, %v956
        %v979 = vpop.permute.xlu0 %978
        %982 = vset.pattern.permute.xlu0 0
        %983 = vperm.xlu0 %982, %v957
        %v984 = vpop.permute.xlu0 %983
        %987 = vset.pattern.permute.xlu0 0
        %988 = vperm.xlu0 %987, %v958
        %v989 = vpop.permute.xlu0 %988
        %992 = vset.pattern.permute.xlu0 0
        %993 = vperm.xlu0 %992, %v959
        %v994 = vpop.permute.xlu0 %993
        %997 = vset.pattern.permute.xlu0 0
        %998 = vperm.xlu0 %997, %v960
        %v999 = vpop.permute.xlu0 %998
        %1002 = vset.pattern.permute.xlu0 0
        %1003 = vperm.xlu0 %1002, %v961
        %v1004 = vpop.permute.xlu0 %1003
        %1007 = vset.pattern.permute.xlu0 0
        %1008 = vperm.xlu0 %1007, %v962
        %v1009 = vpop.permute.xlu0 %1008
        %v1011 = vmul.f32 %v963, %v974
        %v1012 = vmul.f32 %v964, %v979
        %v1013 = vmul.f32 %v965, %v984
        %v1014 = vmul.f32 %v966, %v989
        %v1015 = vmul.f32 %v967, %v994
        %v1016 = vmul.f32 %v968, %v999
        %v1017 = vmul.f32 %v969, %v1004
        %v1018 = vmul.f32 %v970, %v1009
        %v1019 = vpack.c.bf16 %v1012, %v1011
        %v1020 = vpack.c.bf16 %v1014, %v1013
        %v1021 = vpack.c.bf16 %v1016, %v1015
        %v1022 = vpack.c.bf16 %v1018, %v1017
        %v1023 = vld [vmem:[%s4] sm:$0xf]
        %v1024 = vld [vmem:[%s4 + $0x4] sm:$0xf]
        %v1025 = vld [vmem:[%s4 + $0x8] sm:$0xf]
        %v1026 = vld [vmem:[%s4 + $0xc] sm:$0xf]
        %v1027 = vld [vmem:[%s4 + $0x10] sm:$0xf]
        %v1028 = vld [vmem:[%s4 + $0x14] sm:$0xf]
        %v1029 = vld [vmem:[%s4 + $0x18] sm:$0xf]
        %v1030 = vld [vmem:[%s4 + $0x1c] sm:$0xf]
        %v1031 = vld [vmem:[%s4 + $0x20] sm:$0xf]
        %v1032 = vld [vmem:[%s4 + $0x24] sm:$0xf]
        %v1033 = vld [vmem:[%s4 + $0x28] sm:$0xf]
        %v1034 = vld [vmem:[%s4 + $0x2c] sm:$0xf]
        %v1035 = vld [vmem:[%s4 + $0x30] sm:$0xf]
        %v1036 = vld [vmem:[%s4 + $0x34] sm:$0xf]
        %v1037 = vld [vmem:[%s4 + $0x38] sm:$0xf]
        %v1038 = vld [vmem:[%s4 + $0x3c] sm:$0xf]
        %v1039 = vld [vmem:[%s5] sm:$0x1]
        %v1041 = vlaneseq
        %v1042 = vshrl.u32 %v1041, 7
        %v1043 = vsub.s32 0, %v1042
        %v1044 = vrot.slane %v1039, %v1043
        %v1062 = vunpack.c.l.b16 %v1023
        %v1063 = vunpack.c.l.b16 %v1024
        %v1064 = vunpack.c.l.b16 %v1025
        %v1065 = vunpack.c.l.b16 %v1026
        %v1066 = vunpack.c.l.b16 %v1027
        %v1067 = vunpack.c.l.b16 %v1028
        %v1068 = vunpack.c.l.b16 %v1029
        %v1069 = vunpack.c.l.b16 %v1030
        %v1070 = vunpack.c.l.b16 %v1031
        %v1071 = vunpack.c.l.b16 %v1032
        %v1072 = vunpack.c.l.b16 %v1033
        %v1073 = vunpack.c.l.b16 %v1034
        %v1074 = vunpack.c.l.b16 %v1035
        %v1075 = vunpack.c.l.b16 %v1036
        %v1076 = vunpack.c.l.b16 %v1037
        %v1077 = vunpack.c.l.b16 %v1038
        %v1078 = vpack.c.b16 %v1063, %v1062
        %v1079 = vpack.c.b16 %v1065, %v1064
        %v1080 = vpack.c.b16 %v1067, %v1066
        %v1081 = vpack.c.b16 %v1069, %v1068
        %v1082 = vpack.c.b16 %v1071, %v1070
        %v1083 = vpack.c.b16 %v1073, %v1072
        %v1084 = vpack.c.b16 %v1075, %v1074
        %v1085 = vpack.c.b16 %v1077, %v1076
        %1094 = vmatprep.subr.bf16.mxu0 0
        %1095 = vmatpush1.bf16.msra.mxu0 %v1078
        %1096 = vmatprep.subr.bf16.mxu0 0
        %1097 = vmatpush1.bf16.msra.mxu0 %v1079
        %1098 = vmatprep.subr.bf16.mxu0 0
        %1099 = vmatpush1.bf16.msra.mxu0 %v1080
        %1100 = vmatprep.subr.bf16.mxu0 0
        %1101 = vmatpush1.bf16.msra.mxu0 %v1081
        %1102 = vmatprep.subr.bf16.mxu0 0
        %1103 = vmatpush1.bf16.msra.mxu0 %v1082
        %1104 = vmatprep.subr.bf16.mxu0 0
        %1105 = vmatpush1.bf16.msra.mxu0 %v1083
        %1106 = vmatprep.subr.bf16.mxu0 0
        %1107 = vmatpush1.bf16.msra.mxu0 %v1084
        %1108 = vmatprep.subr.bf16.mxu0 0
        %1109 = vmatpush1.bf16.msra.mxu0 %v1085
        %1110 = vmatprep.subr.bf16.mxu0 0
        %1111 = vmatpush1.bf16.msra.mxu0 0
        %1112 = vmatprep.subr.bf16.mxu0 0
        %1113 = vmatpush1.bf16.msra.mxu0 0
        %1114 = vmatprep.subr.bf16.mxu0 0
        %1115 = vmatpush1.bf16.msra.mxu0 0
        %1116 = vmatprep.subr.bf16.mxu0 0
        %1117 = vmatpush1.bf16.msra.mxu0 0
        %1118 = vmatprep.subr.bf16.mxu0 0
        %1119 = vmatpush1.bf16.msra.mxu0 0
        %1120 = vmatprep.subr.bf16.mxu0 0
        %1121 = vmatpush1.bf16.msra.mxu0 0
        %1122 = vmatprep.subr.bf16.mxu0 0
        %1123 = vmatpush1.bf16.msra.mxu0 0
        %1124 = vmatprep.subr.bf16.mxu0 0
        %1125 = vmatpush1.bf16.msra.mxu0 0
        %1126 = vmatprep.mubr.bf16.mxu0 0
        %1127 = vmatmul.mubr.bf16.gmra.mrb[0].mxu0 %v1019
        %v1128 = vpop.f32.mrb[0].mxu0
        %v1129 = vadd.f32 %v1044, %v1128
        %v1130 = vpop.f32.mrb[0].mxu0
        %v1131 = vpop.f32.mrb[0].mxu0
        %v1132 = vadd.f32 %v1044, %v1131
        %v1133 = vpop.f32.mrb[0].mxu0
        %1134 = vmatprep.mubr.bf16.mxu0 0
        %1135 = vmatmul.mubr.bf16.gmra.mrb[0].mxu0 %v1020
        %v1136 = vpop.f32.mrb[0].mxu0
        %v1137 = vadd.f32 %v1044, %v1136
        %v1138 = vpop.f32.mrb[0].mxu0
        %v1139 = vpop.f32.mrb[0].mxu0
        %v1140 = vadd.f32 %v1044, %v1139
        %v1141 = vpop.f32.mrb[0].mxu0
        %1142 = vmatprep.mubr.bf16.mxu0 0
        %1143 = vmatmul.mubr.bf16.gmra.mrb[0].mxu0 %v1021
        %v1144 = vpop.f32.mrb[0].mxu0
        %v1145 = vadd.f32 %v1044, %v1144
        %v1146 = vpop.f32.mrb[0].mxu0
        %v1147 = vpop.f32.mrb[0].mxu0
        %v1148 = vadd.f32 %v1044, %v1147
        %v1149 = vpop.f32.mrb[0].mxu0
        %1150 = vmatprep.mubr.bf16.mxu0 0
        %1151 = vmatmul.mubr.bf16.gmra.mrb[0].mxu0 %v1022
        %v1152 = vpop.f32.mrb[0].mxu0
        %v1153 = vadd.f32 %v1044, %v1152
        %v1154 = vpop.f32.mrb[0].mxu0
        %v1155 = vpop.f32.mrb[0].mxu0
        %v1156 = vadd.f32 %v1044, %v1155
        %v1157 = vpop.f32.mrb[0].mxu0
        %1158 = vdwg.mxu0
        %v1159 = vld [vmem:[%s394] sm:$0xff]
        %v1160 = vld [vmem:[%s394 + $0x8] sm:$0xff]
        %v1161 = vld [vmem:[%s394 + $0x10] sm:$0xff]
        %v1162 = vld [vmem:[%s394 + $0x18] sm:$0xff]
        %v1163 = vld [vmem:[%s394 + $0x20] sm:$0xff]
        %v1164 = vld [vmem:[%s394 + $0x28] sm:$0xff]
        %v1165 = vld [vmem:[%s394 + $0x30] sm:$0xff]
        %v1166 = vld [vmem:[%s394 + $0x38] sm:$0xff]
        %v1167 = vadd.f32 %v1129, %v1159
        %v1168 = vadd.f32 %v1132, %v1160
        %v1169 = vadd.f32 %v1137, %v1161
        %v1170 = vadd.f32 %v1140, %v1162
        %v1171 = vadd.f32 %v1145, %v1163
        %v1172 = vadd.f32 %v1148, %v1164
        %v1173 = vadd.f32 %v1153, %v1165
        %v1174 = vadd.f32 %v1156, %v1166
        %1175 = vst [vmem:[%s404] sm:$0xff] %v1167
        %1176 = vst [vmem:[%s404 + $0x8] sm:$0xff] %v1168
        %1177 = vst [vmem:[%s404 + $0x10] sm:$0xff] %v1169
        %1178 = vst [vmem:[%s404 + $0x18] sm:$0xff] %v1170
        %1179 = vst [vmem:[%s404 + $0x20] sm:$0xff] %v1171
        %1180 = vst [vmem:[%s404 + $0x28] sm:$0xff] %v1172
        %1181 = vst [vmem:[%s404 + $0x30] sm:$0xff] %v1173
        %1182 = vst [vmem:[%s404 + $0x38] sm:$0xff] %v1174
      $region52: #{self_attention_pallas.5} parent=43 // pred_fallthru
        _
      %s1183 = smul.u32 8, %s23
      %p1184 = scmp.lt.s32.totalorder %s22, 1
      %s1185 = scalar_select %p1184, %s22, 1
      %p1186 = scmp.lt.s32.totalorder %s1183, 7
      %s1187 = scalar_select %p1186, %s1183, 7
      %s1188 = smul.addr %s1185, 8
      %s1189 = sadd.s32 %s1187, %s1188
      %s1190 = smul.addr %s1189, 8
      %s1191 = scalar_lea.vmem %s6, %s1190
      // Predicated region
      $region53: #{self_attention_pallas.5} parent=43 // pred_check
        %p1192 = pneg %p210
      $region54: #{self_attention_pallas.5} parent=43 // pred_check_branch
        %1194 = sbr.rel (%p1192) target = $region56
      $region55: #{self_attention_pallas.5} parent=43 // pred_region
        %s1195 = smul.u32 8, %s23
      $region56: #{self_attention_pallas.5} parent=43 // pred_fallthru
        _
    $region44: #{self_attention_pallas.5} parent=5 // pred_fallthru
      _
    %p1196 = scmp.le.s32.totalorder 2, %s12
    // Predicated region
    $region57: #{self_attention_pallas.5} parent=5 // pred_check
      %p1197 = pneg %p1196
    $region58: #{self_attention_pallas.5} parent=5 // pred_check_branch
      %1199 = sbr.rel (%p1197) target = $region60
    $region59: #{self_attention_pallas.5} parent=5 // pred_region
      %s1200 = ssub.s32 %s12, 2
      // Predicated region
      $region61: #{self_attention_pallas.5} parent=59 // pred_check
        %p1201 = pneg %p216
      $region62: #{self_attention_pallas.5} parent=59 // pred_check_branch
        %1203 = sbr.rel (%p1201) target = $region64
      $region63: #{self_attention_pallas.5} parent=59 // pred_region
        %s1204 = smul.u32 8, %s26
        %p1205 = scmp.lt.s32.totalorder %s25, 1
        %s1206 = scalar_select %p1205, %s25, 1
        %p1207 = scmp.lt.s32.totalorder %s1204, 7
        %s1208 = scalar_select %p1207, %s1204, 7
        %s1209 = smul.addr %s1206, 8
        %s1210 = sadd.s32 %s1208, %s1209
        %s1211 = smul.addr %s1210, 8
        %s1212 = scalar_lea.vmem %s6, %s1211
      $region64: #{self_attention_pallas.5} parent=59 // pred_fallthru
        _
    $region60: #{self_attention_pallas.5} parent=5 // pred_fallthru
      _
  $region6: #{self_attention_pallas.5} parent=0 // loop_footer
    %s16 = sadd.s32 1, %s12
  $region7: #{self_attention_pallas.5} parent=0 // loop_footer_branch
    %11 = sbr.rel target = $region3
  $region8: #{self_attention_pallas.5} parent=0 // loop_exit
    _

</llo_original>
